<compile_context>
chip_gen: v7x
topology: tpu7x:2x2x1
jax: 0.10.0
libtpu: 0.0.40
codegen_flags: <defaults>
</compile_context>

<pallas_src>
import functools

import jax
import jax.numpy as jnp
from jax.experimental import pallas as pl
from jax.experimental.pallas import tpu as pltpu


# ------------------------------ small helpers ------------------------------ #
def _round_up(v, m):
    return ((v + m - 1) // m) * m


def _resolve_rates(output_stride=16, rates=(6, 12, 18)):
    if output_stride == 8:
        return tuple(2 * r for r in rates)
    if output_stride == 16:
        return tuple(rates)
    raise ValueError("output stride of {} not supported".format(output_stride))


def _resize_bilinear_align_corners(img, out_h, out_w):
    """NCHW bilinear resize matching F.interpolate(..., align_corners=True)."""
    n, c, h, w = img.shape
    if (h, w) == (out_h, out_w):
        return img

    def coords(out_n, in_n):
        if out_n <= 1 or in_n <= 1:
            return jnp.zeros((out_n,), jnp.float32)
        return jnp.arange(out_n, dtype=jnp.float32) * ((in_n - 1) / (out_n - 1))

    ys, xs = coords(out_h, h), coords(out_w, w)
    y0 = jnp.clip(jnp.floor(ys).astype(jnp.int32), 0, h - 1)
    x0 = jnp.clip(jnp.floor(xs).astype(jnp.int32), 0, w - 1)
    y1 = jnp.minimum(y0 + 1, h - 1)
    x1 = jnp.minimum(x0 + 1, w - 1)
    wy = (ys - y0.astype(jnp.float32))[None, None, :, None]
    wx = (xs - x0.astype(jnp.float32))[None, None, None, :]
    g00 = img[:, :, y0][:, :, :, x0]
    g01 = img[:, :, y0][:, :, :, x1]
    g10 = img[:, :, y1][:, :, :, x0]
    g11 = img[:, :, y1][:, :, :, x1]
    top = g00 * (1.0 - wx) + g01 * wx
    bot = g10 * (1.0 - wx) + g11 * wx
    return top * (1.0 - wy) + bot * wy


# ------------------------------ Pallas kernel ------------------------------ #
def _build_kernel(*, W, hw, rates, c_in, c_out, pad_x, pad_e, dx_index):
    f32 = jnp.float32

    def kernel(x_ref,      # (1, c_in, hw)   image pixels (flat, lane-dense)
               e_ref,      # (1, 1, hw)      resized edge pixels
               mask_ref,   # (n_dx, 1, hw)   0/1 column-validity masks per dx
               wimg_ref,   # (c_out, c_in)   folded pool-branch 1x1 conv
               bimg_ref,   # (c_out, 1)
               wedge_ref,  # (9, c_out, 1)   folded edge 3x3 conv (per tap)
               bedge_ref,  # (c_out, 1)
               wtap_ref,   # (1+9*len(rates), c_out, c_in)  folded x-branch taps
               bx_ref,     # (1+len(rates), c_out, 1)
               wp_ref,     # (6, c_out, c_out) folded post conv, split per branch
               bp_ref,     # (c_out, 1)
               out_ref,    # (1, c_out, hw)
               xs_ref,     # VMEM scratch (c_in, 2*pad_x + hw)
               es_ref):    # VMEM scratch (1,   2*pad_e + hw)
        # --- stage zero-padded flat pixel rows in VMEM scratch -----------------
        xs_ref[...] = jnp.zeros(xs_ref.shape, f32)
        es_ref[...] = jnp.zeros(es_ref.shape, f32)
        xs_ref[:, pad_x:pad_x + hw] = x_ref[0]
        es_ref[:, pad_e:pad_e + hw] = e_ref[0]

        def tap(src_ref, pad, dy, dx):
            """Shifted view of the flat pixel axis == conv tap at offset (dy, dx)."""
            s = pad + dy * W + dx
            t = src_ref[:, s:s + hw]
            if dx != 0:  # zero pixels whose column wrapped onto a neighbouring row
                t = t * mask_ref[dx_index[dx]]
            return t

        # --- branch 0: global avg pool -> 1x1 conv(+BN) -> ReLU (constant/pixel)
        x_center = xs_ref[:, pad_x:pad_x + hw]                        # (c_in, hw)
        pooled = jnp.sum(x_center, axis=1, keepdims=True) * (1.0 / hw)
        pool_feat = jnp.maximum(
            jnp.dot(wimg_ref[...], jnp.broadcast_to(pooled, (c_in, hw)),
                    preferred_element_type=f32) + bimg_ref[...], 0.0)  # (c_out, hw)
        acc = jnp.dot(wp_ref[0], pool_feat, preferred_element_type=f32)

        # --- branch 1: edge 3x3 conv(+BN) -> ReLU (1 in-channel -> 9 rank-1 taps)
        e_pre = jnp.zeros((c_out, hw), f32) + bedge_ref[...]
        t_e = 0
        for dy in (-1, 0, 1):
            for dx in (-1, 0, 1):
                e_pre = e_pre + wedge_ref[t_e] * tap(es_ref, pad_e, dy, dx)
                t_e += 1
        acc = acc + jnp.dot(wp_ref[1], jnp.maximum(e_pre, 0.0),
                            preferred_element_type=f32)

        # --- branches 2..: 1x1 conv and the dilated 3x3 convs on x --------------
        tap_sets = [[(0, 0)]] + [
            [(dy, dx) for dy in (-r, 0, r) for dx in (-r, 0, r)] for r in rates]
        t_x = 0
        for b, taps in enumerate(tap_sets):
            pre = jnp.zeros((c_out, hw), f32) + bx_ref[b]
            for dy, dx in taps:
                pre = pre + jnp.dot(wtap_ref[t_x], tap(xs_ref, pad_x, dy, dx),
                                    preferred_element_type=f32)
                t_x += 1
            acc = acc + jnp.dot(wp_ref[2 + b], jnp.maximum(pre, 0.0),
                                preferred_element_type=f32)

        # --- fused post-process bias (BN shift) and final ReLU ------------------
        out_ref[0] = jnp.maximum(acc + bp_ref[...], 0.0).astype(out_ref.dtype)

    return kernel


# --------------------------------- wrapper --------------------------------- #
def gscnn_aspp_forward(x, edge, params, *, rates=(6, 12, 18)):
    """x: (N, C_in, H, W) f32; edge: (N, 1, He, We) f32 -> (N, C_out, H, W)."""
    N, C, H, W = x.shape
    c_out = params["w_img"].shape[0]
    HW = H * W
    r_max = max(rates)
    pad_x = _round_up(r_max * (W + 1), 128)   # room for every (dy, dx) tap offset
    pad_e = _round_up(W + 1, 128)

    # bilinear(align_corners=True) resize of the edge map to the feature size.
    edge_r = _resize_bilinear_align_corners(edge, H, W)

    # NCHW -> (N, C, H*W): pure reshape (no transpose); pixels land on lanes.
    x_flat = x.reshape(N, C, HW)
    e_flat = edge_r.reshape(N, 1, HW)

    # 0/1 column-validity masks for every horizontal tap offset used by the convs.
    dx_list = sorted({s * d for d in [1] + list(rates) for s in (-1, 1)})
    dx_index = {dx: i for i, dx in enumerate(dx_list)}
    col = jnp.arange(HW, dtype=jnp.int32) % W
    masks = jnp.stack(
        [((col + dx >= 0) & (col + dx < W)).astype(jnp.float32) for dx in dx_list],
        axis=0).reshape(len(dx_list), 1, HW)

    kernel = _build_kernel(W=W, hw=HW, rates=tuple(rates), c_in=C, c_out=c_out,
                           pad_x=pad_x, pad_e=pad_e, dx_index=dx_index)

    weights = (masks, params["w_img"], params["b_img"], params["w_edge"],
               params["b_edge"], params["w_x_taps"], params["b_x"],
               params["w_post"], params["b_post"])

    def full_spec(a):
        return pl.BlockSpec(a.shape, lambda n, _nd=a.ndim: (0,) * _nd)

    n_taps = 1 + 9 * len(rates)
    n_branches = 3 + len(rates)
    flops = 2 * N * HW * (C * c_out * (n_taps + 1)
                          + c_out * c_out * n_branches + 9 * c_out)
    bytes_accessed = 4 * (x_flat.size + e_flat.size + N * c_out * HW
                          + sum(int(a.size) for a in weights))
    cost = pl.CostEstimate(flops=int(flops), transcendentals=0,
                           bytes_accessed=int(bytes_accessed))

    out_flat = pl.pallas_call(
        kernel,
        out_shape=jax.ShapeDtypeStruct((N, c_out, HW), jnp.float32),
        grid=(N,),
        in_specs=[pl.BlockSpec((1, C, HW), lambda n: (n, 0, 0)),
                  pl.BlockSpec((1, 1, HW), lambda n: (n, 0, 0))]
                 + [full_spec(a) for a in weights],
        out_specs=pl.BlockSpec((1, c_out, HW), lambda n: (n, 0, 0)),
        scratch_shapes=[pltpu.VMEM((C, 2 * pad_x + HW), jnp.float32),
                        pltpu.VMEM((1, 2 * pad_e + HW), jnp.float32)],
        compiler_params=pltpu.CompilerParams(dimension_semantics=("parallel",)),
        cost_estimate=cost,
    )(x_flat, e_flat, *weights)

    return out_flat.reshape(N, c_out, H, W)


# -------------------------- parameter construction -------------------------- #
def make_params(key, in_channs, out_channs, rates=(6, 12, 18)):
    """Synthetic parameters matching the PyTorch module; returns (folded, raw)."""
    C, O = in_channs, out_channs
    eps = 1e-5
    keys = iter(jax.random.split(key, 64))

    def conv_w(shape):
        return 0.3 * jax.random.normal(next(keys), shape, jnp.float32)

    def bn_params(n):
        g = 1.0 + 0.1 * jax.random.normal(next(keys), (n,), jnp.float32)
        b = 0.1 * jax.random.normal(next(keys), (n,), jnp.float32)
        m = 0.1 * jax.random.normal(next(keys), (n,), jnp.float32)
        v = 1.0 + 0.1 * jnp.abs(jax.random.normal(next(keys), (n,), jnp.float32))
        return (g, b, m, v)

    n_branches = 3 + len(rates)
    raw = {"eps": eps, "rates": tuple(rates)}
    raw["w_img"] = conv_w((O, C, 1, 1));          raw["bn_img"] = bn_params(O)
    raw["w_edge"] = conv_w((O, 1, 3, 3));         raw["bn_edge"] = bn_params(O)
    raw["w_f0"] = conv_w((O, C, 1, 1));           raw["bn_f0"] = bn_params(O)
    raw["w_fr"] = [conv_w((O, C, 3, 3)) for _ in rates]
    raw["bn_fr"] = [bn_params(O) for _ in rates]
    raw["w_post"] = conv_w((O, n_branches * O, 1, 1))
    raw["bn_post"] = bn_params(O)

    # ---- fold BatchNorm (eval mode) into the bias-free conv weights ----------
    def scale_shift(bn):
        g, b, m, v = bn
        s = g / jnp.sqrt(v + eps)
        return s, b - m * s

    def fold2d(w2d, bn):
        s, sh = scale_shift(bn)
        return w2d * s[:, None], sh[:, None]

    w_img, b_img = fold2d(raw["w_img"].reshape(O, C), raw["bn_img"])
    w_edge2d, b_edge = fold2d(raw["w_edge"].reshape(O, 9), raw["bn_edge"])
    w_edge = w_edge2d.T[:, :, None]                     # (9, O, 1) per-tap columns
    w_f0, b_f0 = fold2d(raw["w_f0"].reshape(O, C), raw["bn_f0"])

    taps, b_x = [w_f0], [b_f0]
    for w4, bn in zip(raw["w_fr"], raw["bn_fr"]):
        s, sh = scale_shift(bn)
        w4f = w4 * s[:, None, None, None]
        for ky in range(3):
            for kx in range(3):
                taps.append(w4f[:, :, ky, kx])
        b_x.append(sh[:, None])
    w_x_taps = jnp.stack(taps, axis=0)                  # (1 + 9*len(rates), O, C)
    b_x = jnp.stack(b_x, axis=0)                        # (1 + len(rates), O, 1)

    w_post2d, b_post = fold2d(raw["w_post"].reshape(O, n_branches * O),
                              raw["bn_post"])
    w_post = jnp.stack([w_post2d[:, b * O:(b + 1) * O] for b in range(n_branches)],
                       axis=0)                          # (n_branches, O, O)

    folded = dict(w_img=w_img, b_img=b_img, w_edge=w_edge, b_edge=b_edge,
                  w_x_taps=w_x_taps, b_x=b_x, w_post=w_post, b_post=b_post)
    return folded, raw


# ---------------------------- pure-JAX reference ---------------------------- #
def reference_forward(x, edge, raw):
    eps, rates = raw["eps"], raw["rates"]
    hp = jax.lax.Precision.HIGHEST

    def conv(t, w, padding=0, dilation=1):
        return jax.lax.conv_general_dilated(
            t, w, window_strides=(1, 1),
            padding=[(padding, padding), (padding, padding)],
            rhs_dilation=(dilation, dilation),
            dimension_numbers=("NCHW", "OIHW", "NCHW"), precision=hp)

    def bn(t, p):
        g, b, m, v = p
        s = g / jnp.sqrt(v + eps)
        return t * s[None, :, None, None] + (b - m * s)[None, :, None, None]

    relu = lambda t: jnp.maximum(t, 0.0)
    N, _, H, W = x.shape
    c_out = raw["w_img"].shape[0]

    pool = jnp.mean(x, axis=(2, 3), keepdims=True)
    pool = relu(bn(conv(pool, raw["w_img"]), raw["bn_img"]))
    pool = jnp.broadcast_to(pool, (N, c_out, H, W))      # 1x1 -> HxW upsample

    edge_r = _resize_bilinear_align_corners(edge, H, W)
    edge_f = relu(bn(conv(edge_r, raw["w_edge"], padding=1), raw["bn_edge"]))

    feats = [relu(bn(conv(x, raw["w_f0"]), raw["bn_f0"]))]
    for r, w, p in zip(rates, raw["w_fr"], raw["bn_fr"]):
        feats.append(relu(bn(conv(x, w, padding=r, dilation=r), p)))

    cat = jnp.concatenate([pool, edge_f] + feats, axis=1)
    return relu(bn(conv(cat, raw["w_post"]), raw["bn_post"]))


# ----------------------------------- main ----------------------------------- #
if __name__ == "__main__":
    N, C_in, C_out, H, W = 2, 4, 8, 16, 16
    rates = _resolve_rates(output_stride=16)

    key = jax.random.PRNGKey(0)
    k_x, k_e, k_p = jax.random.split(key, 3)
    x = jax.random.normal(k_x, (N, C_in, H, W), jnp.float32)
    edge = jax.random.normal(k_e, (N, 1, 8, 8), jnp.float32)
    folded_params, raw_params = make_params(k_p, C_in, C_out, rates)

    fn = jax.jit(functools.partial(gscnn_aspp_forward, rates=rates))
    out = jax.block_until_ready(fn(x, edge, folded_params))

    ref = jax.block_until_ready(reference_forward(x, edge, raw_params))
    assert out.shape == (N, C_out, H, W), out.shape
    assert jnp.allclose(out, ref, atol=1e-3, rtol=1e-3), float(
        jnp.max(jnp.abs(out - ref)))
    print("KERNEL_OK")
</pallas_src>

<mosaic_0001>
module attributes {stable_mosaic.version = 11 : i64} {
  func.func @kernel(%arg0: i32, %arg1: memref<1x4x256xf32, #tpu.memory_space<vmem>>, %arg2: memref<1x1x256xf32, #tpu.memory_space<vmem>>, %arg3: memref<8x1x256xf32, #tpu.memory_space<vmem>>, %arg4: memref<8x4xf32, #tpu.memory_space<vmem>>, %arg5: memref<8x1xf32, #tpu.memory_space<vmem>>, %arg6: memref<9x8x1xf32, #tpu.memory_space<vmem>>, %arg7: memref<8x1xf32, #tpu.memory_space<vmem>>, %arg8: memref<28x8x4xf32, #tpu.memory_space<vmem>>, %arg9: memref<4x8x1xf32, #tpu.memory_space<vmem>>, %arg10: memref<6x8x8xf32, #tpu.memory_space<vmem>>, %arg11: memref<8x1xf32, #tpu.memory_space<vmem>>, %arg12: memref<1x8x256xf32, #tpu.memory_space<vmem>>, %arg13: memref<4x1024xf32, #tpu.memory_space<vmem>>, %arg14: memref<1x512xf32, #tpu.memory_space<vmem>>) attributes {dimension_semantics = [#tpu.dimension_semantics<parallel>], iteration_bounds = array<i64: 2>, scalar_prefetch = 0 : i64, scratch_operands = 2 : i64, tpu.core_type = #tpu.core_type<tc>, window_params = [{transform_indices = @transform_0, window_bounds = array<i64: 1, 4, 256>}, {transform_indices = @transform_1, window_bounds = array<i64: 1, 1, 256>}, {pipeline_mode = #tpu.pipeline_mode<synchronous>, transform_indices = @transform_2, window_bounds = array<i64: 8, 1, 256>}, {pipeline_mode = #tpu.pipeline_mode<synchronous>, transform_indices = @transform_3, window_bounds = array<i64: 8, 4>}, {pipeline_mode = #tpu.pipeline_mode<synchronous>, transform_indices = @transform_4, window_bounds = array<i64: 8, 1>}, {pipeline_mode = #tpu.pipeline_mode<synchronous>, transform_indices = @transform_5, window_bounds = array<i64: 9, 8, 1>}, {pipeline_mode = #tpu.pipeline_mode<synchronous>, transform_indices = @transform_6, window_bounds = array<i64: 8, 1>}, {pipeline_mode = #tpu.pipeline_mode<synchronous>, transform_indices = @transform_7, window_bounds = array<i64: 28, 8, 4>}, {pipeline_mode = #tpu.pipeline_mode<synchronous>, transform_indices = @transform_8, window_bounds = array<i64: 4, 8, 1>}, {pipeline_mode = #tpu.pipeline_mode<synchronous>, transform_indices = @transform_9, window_bounds = array<i64: 6, 8, 8>}, {pipeline_mode = #tpu.pipeline_mode<synchronous>, transform_indices = @transform_10, window_bounds = array<i64: 8, 1>}, {transform_indices = @transform_11, window_bounds = array<i64: 1, 8, 256>}]} {
    %cst = arith.constant 0.000000e+00 : f32
    %0 = vector.broadcast %cst : f32 to vector<4x1024xf32>
    %c0 = arith.constant 0 : index
    %c0_0 = arith.constant 0 : index
    %1 = vector.load %arg13[%c0, %c0_0] : memref<4x1024xf32, #tpu.memory_space<vmem>>, vector<4x1024xf32>
    tpu.vector_store %arg13[%c0, %c0_0], %0 {strides = array<i32>} : memref<4x1024xf32, #tpu.memory_space<vmem>>, vector<4x1024xf32>,
    %cst_1 = arith.constant 0.000000e+00 : f32
    %2 = vector.broadcast %cst_1 : f32 to vector<1x512xf32>
    %c0_2 = arith.constant 0 : index
    %c0_3 = arith.constant 0 : index
    %3 = vector.load %arg14[%c0_2, %c0_3] : memref<1x512xf32, #tpu.memory_space<vmem>>, vector<1x512xf32>
    tpu.vector_store %arg14[%c0_2, %c0_3], %2 {strides = array<i32>} : memref<1x512xf32, #tpu.memory_space<vmem>>, vector<1x512xf32>,
    %c0_4 = arith.constant 0 : index
    %c0_5 = arith.constant 0 : index
    %c0_6 = arith.constant 0 : index
    %4 = vector.load %arg1[%c0_4, %c0_5, %c0_6] : memref<1x4x256xf32, #tpu.memory_space<vmem>>, vector<1x4x256xf32>
    %5 = vector.shape_cast %4 : vector<1x4x256xf32> to vector<4x256xf32>
    %c0_7 = arith.constant 0 : index
    %c384 = arith.constant 384 : index
    %6 = vector.load %arg13[%c0_7, %c384] : memref<4x1024xf32, #tpu.memory_space<vmem>>, vector<4x256xf32>
    tpu.vector_store %arg13[%c0_7, %c384], %5 {strides = array<i32>} : memref<4x1024xf32, #tpu.memory_space<vmem>>, vector<4x256xf32>,
    %c0_8 = arith.constant 0 : index
    %c0_9 = arith.constant 0 : index
    %c0_10 = arith.constant 0 : index
    %7 = vector.load %arg2[%c0_8, %c0_9, %c0_10] : memref<1x1x256xf32, #tpu.memory_space<vmem>>, vector<1x1x256xf32>
    %8 = vector.shape_cast %7 : vector<1x1x256xf32> to vector<1x256xf32>
    %c0_11 = arith.constant 0 : index
    %c128 = arith.constant 128 : index
    %9 = vector.load %arg14[%c0_11, %c128] : memref<1x512xf32, #tpu.memory_space<vmem>>, vector<1x256xf32>
    tpu.vector_store %arg14[%c0_11, %c128], %8 {strides = array<i32>} : memref<1x512xf32, #tpu.memory_space<vmem>>, vector<1x256xf32>,
    %c0_12 = arith.constant 0 : index
    %c384_13 = arith.constant 384 : index
    %10 = vector.load %arg13[%c0_12, %c384_13] : memref<4x1024xf32, #tpu.memory_space<vmem>>, vector<4x256xf32>
    %cst_14 = arith.constant dense<0.000000e+00> : vector<4xf32>
    %11 = vector.multi_reduction <add>, %10, %cst_14 [1] : vector<4x256xf32> to vector<4xf32>
    %12 = vector.shape_cast %11 : vector<4xf32> to vector<4x1xf32>
    %cst_15 = arith.constant 3.906250e-03 : f32
    %13 = vector.broadcast %cst_15 : f32 to vector<4x1xf32>
    %14 = arith.mulf %12, %13 : vector<4x1xf32>
    %c0_16 = arith.constant 0 : index
    %c0_17 = arith.constant 0 : index
    %15 = vector.load %arg4[%c0_16, %c0_17] : memref<8x4xf32, #tpu.memory_space<vmem>>, vector<8x4xf32>
    %16 = vector.shape_cast %14 : vector<4x1xf32> to vector<4x1xf32>
    %17 = vector.broadcast %16 : vector<4x1xf32> to vector<4x256xf32>
    %cst_18 = arith.constant dense<0.000000e+00> : vector<8x256xf32>
    %18 = tpu.matmul %15, %17, %cst_18 {dimension_numbers = #tpu.dot_dimension_numbers<[1], [0], [0], [1], [0, 0, 1, 1], [], []>} : vector<8x4xf32>, vector<4x256xf32>, vector<8x256xf32> -> vector<8x256xf32>
    %c0_19 = arith.constant 0 : index
    %c0_20 = arith.constant 0 : index
    %19 = vector.load %arg5[%c0_19, %c0_20] : memref<8x1xf32, #tpu.memory_space<vmem>>, vector<8x1xf32>
    %20 = vector.broadcast %19 : vector<8x1xf32> to vector<8x256xf32>
    %21 = arith.addf %18, %20 : vector<8x256xf32>
    %cst_21 = arith.constant 0.000000e+00 : f32
    %22 = vector.broadcast %cst_21 : f32 to vector<8x256xf32>
    %23 = arith.maximumf %21, %22 : vector<8x256xf32>
    %c0_22 = arith.constant 0 : index
    %c0_23 = arith.constant 0 : index
    %c0_24 = arith.constant 0 : index
    %24 = vector.load %arg10[%c0_22, %c0_23, %c0_24] : memref<6x8x8xf32, #tpu.memory_space<vmem>>, vector<1x8x8xf32>
    %25 = vector.shape_cast %24 : vector<1x8x8xf32> to vector<8x8xf32>
    %cst_25 = arith.constant dense<0.000000e+00> : vector<8x256xf32>
    %26 = tpu.matmul %25, %23, %cst_25 {dimension_numbers = #tpu.dot_dimension_numbers<[1], [0], [0], [1], [0, 0, 1, 1], [], []>} : vector<8x8xf32>, vector<8x256xf32>, vector<8x256xf32> -> vector<8x256xf32>
    %cst_26 = arith.constant 0.000000e+00 : f32
    %27 = vector.broadcast %cst_26 : f32 to vector<8x256xf32>
    %c0_27 = arith.constant 0 : index
    %c0_28 = arith.constant 0 : index
    %28 = vector.load %arg7[%c0_27, %c0_28] : memref<8x1xf32, #tpu.memory_space<vmem>>, vector<8x1xf32>
    %29 = vector.broadcast %28 : vector<8x1xf32> to vector<8x256xf32>
    %30 = arith.addf %27, %29 : vector<8x256xf32>
    %c0_29 = arith.constant 0 : index
    %c0_30 = arith.constant 0 : index
    %c0_31 = arith.constant 0 : index
    %31 = vector.load %arg6[%c0_29, %c0_30, %c0_31] : memref<9x8x1xf32, #tpu.memory_space<vmem>>, vector<1x8x1xf32>
    %32 = vector.shape_cast %31 : vector<1x8x1xf32> to vector<8x1xf32>
    %c0_32 = arith.constant 0 : index
    %c111 = arith.constant 111 : index
    %33 = vector.load %arg14[%c0_32, %c111] : memref<1x512xf32, #tpu.memory_space<vmem>>, vector<1x256xf32>
    %c3 = arith.constant 3 : index
    %c0_33 = arith.constant 0 : index
    %c0_34 = arith.constant 0 : index
    %34 = vector.load %arg3[%c3, %c0_33, %c0_34] : memref<8x1x256xf32, #tpu.memory_space<vmem>>, vector<1x1x256xf32>
    %35 = vector.shape_cast %34 : vector<1x1x256xf32> to vector<1x256xf32>
    %36 = arith.mulf %33, %35 : vector<1x256xf32>
    %37 = vector.broadcast %32 : vector<8x1xf32> to vector<8x256xf32>
    %38 = vector.broadcast %36 : vector<1x256xf32> to vector<8x256xf32>
    %39 = arith.mulf %37, %38 : vector<8x256xf32>
    %40 = arith.addf %30, %39 : vector<8x256xf32>
    %c1 = arith.constant 1 : index
    %c0_35 = arith.constant 0 : index
    %c0_36 = arith.constant 0 : index
    %41 = vector.load %arg6[%c1, %c0_35, %c0_36] : memref<9x8x1xf32, #tpu.memory_space<vmem>>, vector<1x8x1xf32>
    %42 = vector.shape_cast %41 : vector<1x8x1xf32> to vector<8x1xf32>
    %c0_37 = arith.constant 0 : index
    %c112 = arith.constant 112 : index
    %43 = vector.load %arg14[%c0_37, %c112] : memref<1x512xf32, #tpu.memory_space<vmem>>, vector<1x256xf32>
    %44 = vector.broadcast %42 : vector<8x1xf32> to vector<8x256xf32>
    %45 = vector.broadcast %43 : vector<1x256xf32> to vector<8x256xf32>
    %46 = arith.mulf %44, %45 : vector<8x256xf32>
    %47 = arith.addf %40, %46 : vector<8x256xf32>
    %c2 = arith.constant 2 : index
    %c0_38 = arith.constant 0 : index
    %c0_39 = arith.constant 0 : index
    %48 = vector.load %arg6[%c2, %c0_38, %c0_39] : memref<9x8x1xf32, #tpu.memory_space<vmem>>, vector<1x8x1xf32>
    %49 = vector.shape_cast %48 : vector<1x8x1xf32> to vector<8x1xf32>
    %c0_40 = arith.constant 0 : index
    %c113 = arith.constant 113 : index
    %50 = vector.load %arg14[%c0_40, %c113] : memref<1x512xf32, #tpu.memory_space<vmem>>, vector<1x256xf32>
    %c4 = arith.constant 4 : index
    %c0_41 = arith.constant 0 : index
    %c0_42 = arith.constant 0 : index
    %51 = vector.load %arg3[%c4, %c0_41, %c0_42] : memref<8x1x256xf32, #tpu.memory_space<vmem>>, vector<1x1x256xf32>
    %52 = vector.shape_cast %51 : vector<1x1x256xf32> to vector<1x256xf32>
    %53 = arith.mulf %50, %52 : vector<1x256xf32>
    %54 = vector.broadcast %49 : vector<8x1xf32> to vector<8x256xf32>
    %55 = vector.broadcast %53 : vector<1x256xf32> to vector<8x256xf32>
    %56 = arith.mulf %54, %55 : vector<8x256xf32>
    %57 = arith.addf %47, %56 : vector<8x256xf32>
    %c3_43 = arith.constant 3 : index
    %c0_44 = arith.constant 0 : index
    %c0_45 = arith.constant 0 : index
    %58 = vector.load %arg6[%c3_43, %c0_44, %c0_45] : memref<9x8x1xf32, #tpu.memory_space<vmem>>, vector<1x8x1xf32>
    %59 = vector.shape_cast %58 : vector<1x8x1xf32> to vector<8x1xf32>
    %c0_46 = arith.constant 0 : index
    %c127 = arith.constant 127 : index
    %60 = vector.load %arg14[%c0_46, %c127] : memref<1x512xf32, #tpu.memory_space<vmem>>, vector<1x256xf32>
    %c3_47 = arith.constant 3 : index
    %c0_48 = arith.constant 0 : index
    %c0_49 = arith.constant 0 : index
    %61 = vector.load %arg3[%c3_47, %c0_48, %c0_49] : memref<8x1x256xf32, #tpu.memory_space<vmem>>, vector<1x1x256xf32>
    %62 = vector.shape_cast %61 : vector<1x1x256xf32> to vector<1x256xf32>
    %63 = arith.mulf %60, %62 : vector<1x256xf32>
    %64 = vector.broadcast %59 : vector<8x1xf32> to vector<8x256xf32>
    %65 = vector.broadcast %63 : vector<1x256xf32> to vector<8x256xf32>
    %66 = arith.mulf %64, %65 : vector<8x256xf32>
    %67 = arith.addf %57, %66 : vector<8x256xf32>
    %c4_50 = arith.constant 4 : index
    %c0_51 = arith.constant 0 : index
    %c0_52 = arith.constant 0 : index
    %68 = vector.load %arg6[%c4_50, %c0_51, %c0_52] : memref<9x8x1xf32, #tpu.memory_space<vmem>>, vector<1x8x1xf32>
    %69 = vector.shape_cast %68 : vector<1x8x1xf32> to vector<8x1xf32>
    %c0_53 = arith.constant 0 : index
    %c128_54 = arith.constant 128 : index
    %70 = vector.load %arg14[%c0_53, %c128_54] : memref<1x512xf32, #tpu.memory_space<vmem>>, vector<1x256xf32>
    %71 = vector.broadcast %69 : vector<8x1xf32> to vector<8x256xf32>
    %72 = vector.broadcast %70 : vector<1x256xf32> to vector<8x256xf32>
    %73 = arith.mulf %71, %72 : vector<8x256xf32>
    %74 = arith.addf %67, %73 : vector<8x256xf32>
    %c5 = arith.constant 5 : index
    %c0_55 = arith.constant 0 : index
    %c0_56 = arith.constant 0 : index
    %75 = vector.load %arg6[%c5, %c0_55, %c0_56] : memref<9x8x1xf32, #tpu.memory_space<vmem>>, vector<1x8x1xf32>
    %76 = vector.shape_cast %75 : vector<1x8x1xf32> to vector<8x1xf32>
    %c0_57 = arith.constant 0 : index
    %c129 = arith.constant 129 : index
    %77 = vector.load %arg14[%c0_57, %c129] : memref<1x512xf32, #tpu.memory_space<vmem>>, vector<1x256xf32>
    %c4_58 = arith.constant 4 : index
    %c0_59 = arith.constant 0 : index
    %c0_60 = arith.constant 0 : index
    %78 = vector.load %arg3[%c4_58, %c0_59, %c0_60] : memref<8x1x256xf32, #tpu.memory_space<vmem>>, vector<1x1x256xf32>
    %79 = vector.shape_cast %78 : vector<1x1x256xf32> to vector<1x256xf32>
    %80 = arith.mulf %77, %79 : vector<1x256xf32>
    %81 = vector.broadcast %76 : vector<8x1xf32> to vector<8x256xf32>
    %82 = vector.broadcast %80 : vector<1x256xf32> to vector<8x256xf32>
    %83 = arith.mulf %81, %82 : vector<8x256xf32>
    %84 = arith.addf %74, %83 : vector<8x256xf32>
    %c6 = arith.constant 6 : index
    %c0_61 = arith.constant 0 : index
    %c0_62 = arith.constant 0 : index
    %85 = vector.load %arg6[%c6, %c0_61, %c0_62] : memref<9x8x1xf32, #tpu.memory_space<vmem>>, vector<1x8x1xf32>
    %86 = vector.shape_cast %85 : vector<1x8x1xf32> to vector<8x1xf32>
    %c0_63 = arith.constant 0 : index
    %c143 = arith.constant 143 : index
    %87 = vector.load %arg14[%c0_63, %c143] : memref<1x512xf32, #tpu.memory_space<vmem>>, vector<1x256xf32>
    %c3_64 = arith.constant 3 : index
    %c0_65 = arith.constant 0 : index
    %c0_66 = arith.constant 0 : index
    %88 = vector.load %arg3[%c3_64, %c0_65, %c0_66] : memref<8x1x256xf32, #tpu.memory_space<vmem>>, vector<1x1x256xf32>
    %89 = vector.shape_cast %88 : vector<1x1x256xf32> to vector<1x256xf32>
    %90 = arith.mulf %87, %89 : vector<1x256xf32>
    %91 = vector.broadcast %86 : vector<8x1xf32> to vector<8x256xf32>
    %92 = vector.broadcast %90 : vector<1x256xf32> to vector<8x256xf32>
    %93 = arith.mulf %91, %92 : vector<8x256xf32>
    %94 = arith.addf %84, %93 : vector<8x256xf32>
    %c7 = arith.constant 7 : index
    %c0_67 = arith.constant 0 : index
    %c0_68 = arith.constant 0 : index
    %95 = vector.load %arg6[%c7, %c0_67, %c0_68] : memref<9x8x1xf32, #tpu.memory_space<vmem>>, vector<1x8x1xf32>
    %96 = vector.shape_cast %95 : vector<1x8x1xf32> to vector<8x1xf32>
    %c0_69 = arith.constant 0 : index
    %c144 = arith.constant 144 : index
    %97 = vector.load %arg14[%c0_69, %c144] : memref<1x512xf32, #tpu.memory_space<vmem>>, vector<1x256xf32>
    %98 = vector.broadcast %96 : vector<8x1xf32> to vector<8x256xf32>
    %99 = vector.broadcast %97 : vector<1x256xf32> to vector<8x256xf32>
    %100 = arith.mulf %98, %99 : vector<8x256xf32>
    %101 = arith.addf %94, %100 : vector<8x256xf32>
    %c8 = arith.constant 8 : index
    %c0_70 = arith.constant 0 : index
    %c0_71 = arith.constant 0 : index
    %102 = vector.load %arg6[%c8, %c0_70, %c0_71] : memref<9x8x1xf32, #tpu.memory_space<vmem>>, vector<1x8x1xf32>
    %103 = vector.shape_cast %102 : vector<1x8x1xf32> to vector<8x1xf32>
    %c0_72 = arith.constant 0 : index
    %c145 = arith.constant 145 : index
    %104 = vector.load %arg14[%c0_72, %c145] : memref<1x512xf32, #tpu.memory_space<vmem>>, vector<1x256xf32>
    %c4_73 = arith.constant 4 : index
    %c0_74 = arith.constant 0 : index
    %c0_75 = arith.constant 0 : index
    %105 = vector.load %arg3[%c4_73, %c0_74, %c0_75] : memref<8x1x256xf32, #tpu.memory_space<vmem>>, vector<1x1x256xf32>
    %106 = vector.shape_cast %105 : vector<1x1x256xf32> to vector<1x256xf32>
    %107 = arith.mulf %104, %106 : vector<1x256xf32>
    %108 = vector.broadcast %103 : vector<8x1xf32> to vector<8x256xf32>
    %109 = vector.broadcast %107 : vector<1x256xf32> to vector<8x256xf32>
    %110 = arith.mulf %108, %109 : vector<8x256xf32>
    %111 = arith.addf %101, %110 : vector<8x256xf32>
    %c1_76 = arith.constant 1 : index
    %c0_77 = arith.constant 0 : index
    %c0_78 = arith.constant 0 : index
    %112 = vector.load %arg10[%c1_76, %c0_77, %c0_78] : memref<6x8x8xf32, #tpu.memory_space<vmem>>, vector<1x8x8xf32>
    %113 = vector.shape_cast %112 : vector<1x8x8xf32> to vector<8x8xf32>
    %cst_79 = arith.constant 0.000000e+00 : f32
    %114 = vector.broadcast %cst_79 : f32 to vector<8x256xf32>
    %115 = arith.maximumf %111, %114 : vector<8x256xf32>
    %cst_80 = arith.constant dense<0.000000e+00> : vector<8x256xf32>
    %116 = tpu.matmul %113, %115, %cst_80 {dimension_numbers = #tpu.dot_dimension_numbers<[1], [0], [0], [1], [0, 0, 1, 1], [], []>} : vector<8x8xf32>, vector<8x256xf32>, vector<8x256xf32> -> vector<8x256xf32>
    %117 = arith.addf %26, %116 : vector<8x256xf32>
    %cst_81 = arith.constant 0.000000e+00 : f32
    %118 = vector.broadcast %cst_81 : f32 to vector<8x256xf32>
    %c0_82 = arith.constant 0 : index
    %c0_83 = arith.constant 0 : index
    %c0_84 = arith.constant 0 : index
    %119 = vector.load %arg9[%c0_82, %c0_83, %c0_84] : memref<4x8x1xf32, #tpu.memory_space<vmem>>, vector<1x8x1xf32>
    %120 = vector.shape_cast %119 : vector<1x8x1xf32> to vector<8x1xf32>
    %121 = vector.broadcast %120 : vector<8x1xf32> to vector<8x256xf32>
    %122 = arith.addf %118, %121 : vector<8x256xf32>
    %c0_85 = arith.constant 0 : index
    %c0_86 = arith.constant 0 : index
    %c0_87 = arith.constant 0 : index
    %123 = vector.load %arg8[%c0_85, %c0_86, %c0_87] : memref<28x8x4xf32, #tpu.memory_space<vmem>>, vector<1x8x4xf32>
    %124 = vector.shape_cast %123 : vector<1x8x4xf32> to vector<8x4xf32>
    %c0_88 = arith.constant 0 : index
    %c384_89 = arith.constant 384 : index
    %125 = vector.load %arg13[%c0_88, %c384_89] : memref<4x1024xf32, #tpu.memory_space<vmem>>, vector<4x256xf32>
    %cst_90 = arith.constant dense<0.000000e+00> : vector<8x256xf32>
    %126 = tpu.matmul %124, %125, %cst_90 {dimension_numbers = #tpu.dot_dimension_numbers<[1], [0], [0], [1], [0, 0, 1, 1], [], []>} : vector<8x4xf32>, vector<4x256xf32>, vector<8x256xf32> -> vector<8x256xf32>
    %127 = arith.addf %122, %126 : vector<8x256xf32>
    %c2_91 = arith.constant 2 : index
    %c0_92 = arith.constant 0 : index
    %c0_93 = arith.constant 0 : index
    %128 = vector.load %arg10[%c2_91, %c0_92, %c0_93] : memref<6x8x8xf32, #tpu.memory_space<vmem>>, vector<1x8x8xf32>
    %129 = vector.shape_cast %128 : vector<1x8x8xf32> to vector<8x8xf32>
    %cst_94 = arith.constant 0.000000e+00 : f32
    %130 = vector.broadcast %cst_94 : f32 to vector<8x256xf32>
    %131 = arith.maximumf %127, %130 : vector<8x256xf32>
    %cst_95 = arith.constant dense<0.000000e+00> : vector<8x256xf32>
    %132 = tpu.matmul %129, %131, %cst_95 {dimension_numbers = #tpu.dot_dimension_numbers<[1], [0], [0], [1], [0, 0, 1, 1], [], []>} : vector<8x8xf32>, vector<8x256xf32>, vector<8x256xf32> -> vector<8x256xf32>
    %133 = arith.addf %117, %132 : vector<8x256xf32>
    %cst_96 = arith.constant 0.000000e+00 : f32
    %134 = vector.broadcast %cst_96 : f32 to vector<8x256xf32>
    %c1_97 = arith.constant 1 : index
    %c0_98 = arith.constant 0 : index
    %c0_99 = arith.constant 0 : index
    %135 = vector.load %arg9[%c1_97, %c0_98, %c0_99] : memref<4x8x1xf32, #tpu.memory_space<vmem>>, vector<1x8x1xf32>
    %136 = vector.shape_cast %135 : vector<1x8x1xf32> to vector<8x1xf32>
    %137 = vector.broadcast %136 : vector<8x1xf32> to vector<8x256xf32>
    %138 = arith.addf %134, %137 : vector<8x256xf32>
    %c1_100 = arith.constant 1 : index
    %c0_101 = arith.constant 0 : index
    %c0_102 = arith.constant 0 : index
    %139 = vector.load %arg8[%c1_100, %c0_101, %c0_102] : memref<28x8x4xf32, #tpu.memory_space<vmem>>, vector<1x8x4xf32>
    %140 = vector.shape_cast %139 : vector<1x8x4xf32> to vector<8x4xf32>
    %c0_103 = arith.constant 0 : index
    %c282 = arith.constant 282 : index
    %141 = vector.load %arg13[%c0_103, %c282] : memref<4x1024xf32, #tpu.memory_space<vmem>>, vector<4x256xf32>
    %c2_104 = arith.constant 2 : index
    %c0_105 = arith.constant 0 : index
    %c0_106 = arith.constant 0 : index
    %142 = vector.load %arg3[%c2_104, %c0_105, %c0_106] : memref<8x1x256xf32, #tpu.memory_space<vmem>>, vector<1x1x256xf32>
    %143 = vector.shape_cast %142 : vector<1x1x256xf32> to vector<1x256xf32>
    %144 = vector.broadcast %143 : vector<1x256xf32> to vector<4x256xf32>
    %145 = arith.mulf %141, %144 : vector<4x256xf32>
    %cst_107 = arith.constant dense<0.000000e+00> : vector<8x256xf32>
    %146 = tpu.matmul %140, %145, %cst_107 {dimension_numbers = #tpu.dot_dimension_numbers<[1], [0], [0], [1], [0, 0, 1, 1], [], []>} : vector<8x4xf32>, vector<4x256xf32>, vector<8x256xf32> -> vector<8x256xf32>
    %147 = arith.addf %138, %146 : vector<8x256xf32>
    %c2_108 = arith.constant 2 : index
    %c0_109 = arith.constant 0 : index
    %c0_110 = arith.constant 0 : index
    %148 = vector.load %arg8[%c2_108, %c0_109, %c0_110] : memref<28x8x4xf32, #tpu.memory_space<vmem>>, vector<1x8x4xf32>
    %149 = vector.shape_cast %148 : vector<1x8x4xf32> to vector<8x4xf32>
    %c0_111 = arith.constant 0 : index
    %c288 = arith.constant 288 : index
    %150 = vector.load %arg13[%c0_111, %c288] : memref<4x1024xf32, #tpu.memory_space<vmem>>, vector<4x256xf32>
    %cst_112 = arith.constant dense<0.000000e+00> : vector<8x256xf32>
    %151 = tpu.matmul %149, %150, %cst_112 {dimension_numbers = #tpu.dot_dimension_numbers<[1], [0], [0], [1], [0, 0, 1, 1], [], []>} : vector<8x4xf32>, vector<4x256xf32>, vector<8x256xf32> -> vector<8x256xf32>
    %152 = arith.addf %147, %151 : vector<8x256xf32>
    %c3_113 = arith.constant 3 : index
    %c0_114 = arith.constant 0 : index
    %c0_115 = arith.constant 0 : index
    %153 = vector.load %arg8[%c3_113, %c0_114, %c0_115] : memref<28x8x4xf32, #tpu.memory_space<vmem>>, vector<1x8x4xf32>
    %154 = vector.shape_cast %153 : vector<1x8x4xf32> to vector<8x4xf32>
    %c0_116 = arith.constant 0 : index
    %c294 = arith.constant 294 : index
    %155 = vector.load %arg13[%c0_116, %c294] : memref<4x1024xf32, #tpu.memory_space<vmem>>, vector<4x256xf32>
    %c5_117 = arith.constant 5 : index
    %c0_118 = arith.constant 0 : index
    %c0_119 = arith.constant 0 : index
    %156 = vector.load %arg3[%c5_117, %c0_118, %c0_119] : memref<8x1x256xf32, #tpu.memory_space<vmem>>, vector<1x1x256xf32>
    %157 = vector.shape_cast %156 : vector<1x1x256xf32> to vector<1x256xf32>
    %158 = vector.broadcast %157 : vector<1x256xf32> to vector<4x256xf32>
    %159 = arith.mulf %155, %158 : vector<4x256xf32>
    %cst_120 = arith.constant dense<0.000000e+00> : vector<8x256xf32>
    %160 = tpu.matmul %154, %159, %cst_120 {dimension_numbers = #tpu.dot_dimension_numbers<[1], [0], [0], [1], [0, 0, 1, 1], [], []>} : vector<8x4xf32>, vector<4x256xf32>, vector<8x256xf32> -> vector<8x256xf32>
    %161 = arith.addf %152, %160 : vector<8x256xf32>
    %c4_121 = arith.constant 4 : index
    %c0_122 = arith.constant 0 : index
    %c0_123 = arith.constant 0 : index
    %162 = vector.load %arg8[%c4_121, %c0_122, %c0_123] : memref<28x8x4xf32, #tpu.memory_space<vmem>>, vector<1x8x4xf32>
    %163 = vector.shape_cast %162 : vector<1x8x4xf32> to vector<8x4xf32>
    %c0_124 = arith.constant 0 : index
    %c378 = arith.constant 378 : index
    %164 = vector.load %arg13[%c0_124, %c378] : memref<4x1024xf32, #tpu.memory_space<vmem>>, vector<4x256xf32>
    %c2_125 = arith.constant 2 : index
    %c0_126 = arith.constant 0 : index
    %c0_127 = arith.constant 0 : index
    %165 = vector.load %arg3[%c2_125, %c0_126, %c0_127] : memref<8x1x256xf32, #tpu.memory_space<vmem>>, vector<1x1x256xf32>
    %166 = vector.shape_cast %165 : vector<1x1x256xf32> to vector<1x256xf32>
    %167 = vector.broadcast %166 : vector<1x256xf32> to vector<4x256xf32>
    %168 = arith.mulf %164, %167 : vector<4x256xf32>
    %cst_128 = arith.constant dense<0.000000e+00> : vector<8x256xf32>
    %169 = tpu.matmul %163, %168, %cst_128 {dimension_numbers = #tpu.dot_dimension_numbers<[1], [0], [0], [1], [0, 0, 1, 1], [], []>} : vector<8x4xf32>, vector<4x256xf32>, vector<8x256xf32> -> vector<8x256xf32>
    %170 = arith.addf %161, %169 : vector<8x256xf32>
    %c5_129 = arith.constant 5 : index
    %c0_130 = arith.constant 0 : index
    %c0_131 = arith.constant 0 : index
    %171 = vector.load %arg8[%c5_129, %c0_130, %c0_131] : memref<28x8x4xf32, #tpu.memory_space<vmem>>, vector<1x8x4xf32>
    %172 = vector.shape_cast %171 : vector<1x8x4xf32> to vector<8x4xf32>
    %c0_132 = arith.constant 0 : index
    %c384_133 = arith.constant 384 : index
    %173 = vector.load %arg13[%c0_132, %c384_133] : memref<4x1024xf32, #tpu.memory_space<vmem>>, vector<4x256xf32>
    %cst_134 = arith.constant dense<0.000000e+00> : vector<8x256xf32>
    %174 = tpu.matmul %172, %173, %cst_134 {dimension_numbers = #tpu.dot_dimension_numbers<[1], [0], [0], [1], [0, 0, 1, 1], [], []>} : vector<8x4xf32>, vector<4x256xf32>, vector<8x256xf32> -> vector<8x256xf32>
    %175 = arith.addf %170, %174 : vector<8x256xf32>
    %c6_135 = arith.constant 6 : index
    %c0_136 = arith.constant 0 : index
    %c0_137 = arith.constant 0 : index
    %176 = vector.load %arg8[%c6_135, %c0_136, %c0_137] : memref<28x8x4xf32, #tpu.memory_space<vmem>>, vector<1x8x4xf32>
    %177 = vector.shape_cast %176 : vector<1x8x4xf32> to vector<8x4xf32>
    %c0_138 = arith.constant 0 : index
    %c390 = arith.constant 390 : index
    %178 = vector.load %arg13[%c0_138, %c390] : memref<4x1024xf32, #tpu.memory_space<vmem>>, vector<4x256xf32>
    %c5_139 = arith.constant 5 : index
    %c0_140 = arith.constant 0 : index
    %c0_141 = arith.constant 0 : index
    %179 = vector.load %arg3[%c5_139, %c0_140, %c0_141] : memref<8x1x256xf32, #tpu.memory_space<vmem>>, vector<1x1x256xf32>
    %180 = vector.shape_cast %179 : vector<1x1x256xf32> to vector<1x256xf32>
    %181 = vector.broadcast %180 : vector<1x256xf32> to vector<4x256xf32>
    %182 = arith.mulf %178, %181 : vector<4x256xf32>
    %cst_142 = arith.constant dense<0.000000e+00> : vector<8x256xf32>
    %183 = tpu.matmul %177, %182, %cst_142 {dimension_numbers = #tpu.dot_dimension_numbers<[1], [0], [0], [1], [0, 0, 1, 1], [], []>} : vector<8x4xf32>, vector<4x256xf32>, vector<8x256xf32> -> vector<8x256xf32>
    %184 = arith.addf %175, %183 : vector<8x256xf32>
    %c7_143 = arith.constant 7 : index
    %c0_144 = arith.constant 0 : index
    %c0_145 = arith.constant 0 : index
    %185 = vector.load %arg8[%c7_143, %c0_144, %c0_145] : memref<28x8x4xf32, #tpu.memory_space<vmem>>, vector<1x8x4xf32>
    %186 = vector.shape_cast %185 : vector<1x8x4xf32> to vector<8x4xf32>
    %c0_146 = arith.constant 0 : index
    %c474 = arith.constant 474 : index
    %187 = vector.load %arg13[%c0_146, %c474] : memref<4x1024xf32, #tpu.memory_space<vmem>>, vector<4x256xf32>
    %c2_147 = arith.constant 2 : index
    %c0_148 = arith.constant 0 : index
    %c0_149 = arith.constant 0 : index
    %188 = vector.load %arg3[%c2_147, %c0_148, %c0_149] : memref<8x1x256xf32, #tpu.memory_space<vmem>>, vector<1x1x256xf32>
    %189 = vector.shape_cast %188 : vector<1x1x256xf32> to vector<1x256xf32>
    %190 = vector.broadcast %189 : vector<1x256xf32> to vector<4x256xf32>
    %191 = arith.mulf %187, %190 : vector<4x256xf32>
    %cst_150 = arith.constant dense<0.000000e+00> : vector<8x256xf32>
    %192 = tpu.matmul %186, %191, %cst_150 {dimension_numbers = #tpu.dot_dimension_numbers<[1], [0], [0], [1], [0, 0, 1, 1], [], []>} : vector<8x4xf32>, vector<4x256xf32>, vector<8x256xf32> -> vector<8x256xf32>
    %193 = arith.addf %184, %192 : vector<8x256xf32>
    %c8_151 = arith.constant 8 : index
    %c0_152 = arith.constant 0 : index
    %c0_153 = arith.constant 0 : index
    %194 = vector.load %arg8[%c8_151, %c0_152, %c0_153] : memref<28x8x4xf32, #tpu.memory_space<vmem>>, vector<1x8x4xf32>
    %195 = vector.shape_cast %194 : vector<1x8x4xf32> to vector<8x4xf32>
    %c0_154 = arith.constant 0 : index
    %c480 = arith.constant 480 : index
    %196 = vector.load %arg13[%c0_154, %c480] : memref<4x1024xf32, #tpu.memory_space<vmem>>, vector<4x256xf32>
    %cst_155 = arith.constant dense<0.000000e+00> : vector<8x256xf32>
    %197 = tpu.matmul %195, %196, %cst_155 {dimension_numbers = #tpu.dot_dimension_numbers<[1], [0], [0], [1], [0, 0, 1, 1], [], []>} : vector<8x4xf32>, vector<4x256xf32>, vector<8x256xf32> -> vector<8x256xf32>
    %198 = arith.addf %193, %197 : vector<8x256xf32>
    %c9 = arith.constant 9 : index
    %c0_156 = arith.constant 0 : index
    %c0_157 = arith.constant 0 : index
    %199 = vector.load %arg8[%c9, %c0_156, %c0_157] : memref<28x8x4xf32, #tpu.memory_space<vmem>>, vector<1x8x4xf32>
    %200 = vector.shape_cast %199 : vector<1x8x4xf32> to vector<8x4xf32>
    %c0_158 = arith.constant 0 : index
    %c486 = arith.constant 486 : index
    %201 = vector.load %arg13[%c0_158, %c486] : memref<4x1024xf32, #tpu.memory_space<vmem>>, vector<4x256xf32>
    %c5_159 = arith.constant 5 : index
    %c0_160 = arith.constant 0 : index
    %c0_161 = arith.constant 0 : index
    %202 = vector.load %arg3[%c5_159, %c0_160, %c0_161] : memref<8x1x256xf32, #tpu.memory_space<vmem>>, vector<1x1x256xf32>
    %203 = vector.shape_cast %202 : vector<1x1x256xf32> to vector<1x256xf32>
    %204 = vector.broadcast %203 : vector<1x256xf32> to vector<4x256xf32>
    %205 = arith.mulf %201, %204 : vector<4x256xf32>
    %cst_162 = arith.constant dense<0.000000e+00> : vector<8x256xf32>
    %206 = tpu.matmul %200, %205, %cst_162 {dimension_numbers = #tpu.dot_dimension_numbers<[1], [0], [0], [1], [0, 0, 1, 1], [], []>} : vector<8x4xf32>, vector<4x256xf32>, vector<8x256xf32> -> vector<8x256xf32>
    %207 = arith.addf %198, %206 : vector<8x256xf32>
    %c3_163 = arith.constant 3 : index
    %c0_164 = arith.constant 0 : index
    %c0_165 = arith.constant 0 : index
    %208 = vector.load %arg10[%c3_163, %c0_164, %c0_165] : memref<6x8x8xf32, #tpu.memory_space<vmem>>, vector<1x8x8xf32>
    %209 = vector.shape_cast %208 : vector<1x8x8xf32> to vector<8x8xf32>
    %cst_166 = arith.constant 0.000000e+00 : f32
    %210 = vector.broadcast %cst_166 : f32 to vector<8x256xf32>
    %211 = arith.maximumf %207, %210 : vector<8x256xf32>
    %cst_167 = arith.constant dense<0.000000e+00> : vector<8x256xf32>
    %212 = tpu.matmul %209, %211, %cst_167 {dimension_numbers = #tpu.dot_dimension_numbers<[1], [0], [0], [1], [0, 0, 1, 1], [], []>} : vector<8x8xf32>, vector<8x256xf32>, vector<8x256xf32> -> vector<8x256xf32>
    %213 = arith.addf %133, %212 : vector<8x256xf32>
    %cst_168 = arith.constant 0.000000e+00 : f32
    %214 = vector.broadcast %cst_168 : f32 to vector<8x256xf32>
    %c2_169 = arith.constant 2 : index
    %c0_170 = arith.constant 0 : index
    %c0_171 = arith.constant 0 : index
    %215 = vector.load %arg9[%c2_169, %c0_170, %c0_171] : memref<4x8x1xf32, #tpu.memory_space<vmem>>, vector<1x8x1xf32>
    %216 = vector.shape_cast %215 : vector<1x8x1xf32> to vector<8x1xf32>
    %217 = vector.broadcast %216 : vector<8x1xf32> to vector<8x256xf32>
    %218 = arith.addf %214, %217 : vector<8x256xf32>
    %c10 = arith.constant 10 : index
    %c0_172 = arith.constant 0 : index
    %c0_173 = arith.constant 0 : index
    %219 = vector.load %arg8[%c10, %c0_172, %c0_173] : memref<28x8x4xf32, #tpu.memory_space<vmem>>, vector<1x8x4xf32>
    %220 = vector.shape_cast %219 : vector<1x8x4xf32> to vector<8x4xf32>
    %c0_174 = arith.constant 0 : index
    %c180 = arith.constant 180 : index
    %221 = vector.load %arg13[%c0_174, %c180] : memref<4x1024xf32, #tpu.memory_space<vmem>>, vector<4x256xf32>
    %c1_175 = arith.constant 1 : index
    %c0_176 = arith.constant 0 : index
    %c0_177 = arith.constant 0 : index
    %222 = vector.load %arg3[%c1_175, %c0_176, %c0_177] : memref<8x1x256xf32, #tpu.memory_space<vmem>>, vector<1x1x256xf32>
    %223 = vector.shape_cast %222 : vector<1x1x256xf32> to vector<1x256xf32>
    %224 = vector.broadcast %223 : vector<1x256xf32> to vector<4x256xf32>
    %225 = arith.mulf %221, %224 : vector<4x256xf32>
    %cst_178 = arith.constant dense<0.000000e+00> : vector<8x256xf32>
    %226 = tpu.matmul %220, %225, %cst_178 {dimension_numbers = #tpu.dot_dimension_numbers<[1], [0], [0], [1], [0, 0, 1, 1], [], []>} : vector<8x4xf32>, vector<4x256xf32>, vector<8x256xf32> -> vector<8x256xf32>
    %227 = arith.addf %218, %226 : vector<8x256xf32>
    %c11 = arith.constant 11 : index
    %c0_179 = arith.constant 0 : index
    %c0_180 = arith.constant 0 : index
    %228 = vector.load %arg8[%c11, %c0_179, %c0_180] : memref<28x8x4xf32, #tpu.memory_space<vmem>>, vector<1x8x4xf32>
    %229 = vector.shape_cast %228 : vector<1x8x4xf32> to vector<8x4xf32>
    %c0_181 = arith.constant 0 : index
    %c192 = arith.constant 192 : index
    %230 = vector.load %arg13[%c0_181, %c192] : memref<4x1024xf32, #tpu.memory_space<vmem>>, vector<4x256xf32>
    %cst_182 = arith.constant dense<0.000000e+00> : vector<8x256xf32>
    %231 = tpu.matmul %229, %230, %cst_182 {dimension_numbers = #tpu.dot_dimension_numbers<[1], [0], [0], [1], [0, 0, 1, 1], [], []>} : vector<8x4xf32>, vector<4x256xf32>, vector<8x256xf32> -> vector<8x256xf32>
    %232 = arith.addf %227, %231 : vector<8x256xf32>
    %c12 = arith.constant 12 : index
    %c0_183 = arith.constant 0 : index
    %c0_184 = arith.constant 0 : index
    %233 = vector.load %arg8[%c12, %c0_183, %c0_184] : memref<28x8x4xf32, #tpu.memory_space<vmem>>, vector<1x8x4xf32>
    %234 = vector.shape_cast %233 : vector<1x8x4xf32> to vector<8x4xf32>
    %c0_185 = arith.constant 0 : index
    %c204 = arith.constant 204 : index
    %235 = vector.load %arg13[%c0_185, %c204] : memref<4x1024xf32, #tpu.memory_space<vmem>>, vector<4x256xf32>
    %c6_186 = arith.constant 6 : index
    %c0_187 = arith.constant 0 : index
    %c0_188 = arith.constant 0 : index
    %236 = vector.load %arg3[%c6_186, %c0_187, %c0_188] : memref<8x1x256xf32, #tpu.memory_space<vmem>>, vector<1x1x256xf32>
    %237 = vector.shape_cast %236 : vector<1x1x256xf32> to vector<1x256xf32>
    %238 = vector.broadcast %237 : vector<1x256xf32> to vector<4x256xf32>
    %239 = arith.mulf %235, %238 : vector<4x256xf32>
    %cst_189 = arith.constant dense<0.000000e+00> : vector<8x256xf32>
    %240 = tpu.matmul %234, %239, %cst_189 {dimension_numbers = #tpu.dot_dimension_numbers<[1], [0], [0], [1], [0, 0, 1, 1], [], []>} : vector<8x4xf32>, vector<4x256xf32>, vector<8x256xf32> -> vector<8x256xf32>
    %241 = arith.addf %232, %240 : vector<8x256xf32>
    %c13 = arith.constant 13 : index
    %c0_190 = arith.constant 0 : index
    %c0_191 = arith.constant 0 : index
    %242 = vector.load %arg8[%c13, %c0_190, %c0_191] : memref<28x8x4xf32, #tpu.memory_space<vmem>>, vector<1x8x4xf32>
    %243 = vector.shape_cast %242 : vector<1x8x4xf32> to vector<8x4xf32>
    %c0_192 = arith.constant 0 : index
    %c372 = arith.constant 372 : index
    %244 = vector.load %arg13[%c0_192, %c372] : memref<4x1024xf32, #tpu.memory_space<vmem>>, vector<4x256xf32>
    %c1_193 = arith.constant 1 : index
    %c0_194 = arith.constant 0 : index
    %c0_195 = arith.constant 0 : index
    %245 = vector.load %arg3[%c1_193, %c0_194, %c0_195] : memref<8x1x256xf32, #tpu.memory_space<vmem>>, vector<1x1x256xf32>
    %246 = vector.shape_cast %245 : vector<1x1x256xf32> to vector<1x256xf32>
    %247 = vector.broadcast %246 : vector<1x256xf32> to vector<4x256xf32>
    %248 = arith.mulf %244, %247 : vector<4x256xf32>
    %cst_196 = arith.constant dense<0.000000e+00> : vector<8x256xf32>
    %249 = tpu.matmul %243, %248, %cst_196 {dimension_numbers = #tpu.dot_dimension_numbers<[1], [0], [0], [1], [0, 0, 1, 1], [], []>} : vector<8x4xf32>, vector<4x256xf32>, vector<8x256xf32> -> vector<8x256xf32>
    %250 = arith.addf %241, %249 : vector<8x256xf32>
    %c14 = arith.constant 14 : index
    %c0_197 = arith.constant 0 : index
    %c0_198 = arith.constant 0 : index
    %251 = vector.load %arg8[%c14, %c0_197, %c0_198] : memref<28x8x4xf32, #tpu.memory_space<vmem>>, vector<1x8x4xf32>
    %252 = vector.shape_cast %251 : vector<1x8x4xf32> to vector<8x4xf32>
    %c0_199 = arith.constant 0 : index
    %c384_200 = arith.constant 384 : index
    %253 = vector.load %arg13[%c0_199, %c384_200] : memref<4x1024xf32, #tpu.memory_space<vmem>>, vector<4x256xf32>
    %cst_201 = arith.constant dense<0.000000e+00> : vector<8x256xf32>
    %254 = tpu.matmul %252, %253, %cst_201 {dimension_numbers = #tpu.dot_dimension_numbers<[1], [0], [0], [1], [0, 0, 1, 1], [], []>} : vector<8x4xf32>, vector<4x256xf32>, vector<8x256xf32> -> vector<8x256xf32>
    %255 = arith.addf %250, %254 : vector<8x256xf32>
    %c15 = arith.constant 15 : index
    %c0_202 = arith.constant 0 : index
    %c0_203 = arith.constant 0 : index
    %256 = vector.load %arg8[%c15, %c0_202, %c0_203] : memref<28x8x4xf32, #tpu.memory_space<vmem>>, vector<1x8x4xf32>
    %257 = vector.shape_cast %256 : vector<1x8x4xf32> to vector<8x4xf32>
    %c0_204 = arith.constant 0 : index
    %c396 = arith.constant 396 : index
    %258 = vector.load %arg13[%c0_204, %c396] : memref<4x1024xf32, #tpu.memory_space<vmem>>, vector<4x256xf32>
    %c6_205 = arith.constant 6 : index
    %c0_206 = arith.constant 0 : index
    %c0_207 = arith.constant 0 : index
    %259 = vector.load %arg3[%c6_205, %c0_206, %c0_207] : memref<8x1x256xf32, #tpu.memory_space<vmem>>, vector<1x1x256xf32>
    %260 = vector.shape_cast %259 : vector<1x1x256xf32> to vector<1x256xf32>
    %261 = vector.broadcast %260 : vector<1x256xf32> to vector<4x256xf32>
    %262 = arith.mulf %258, %261 : vector<4x256xf32>
    %cst_208 = arith.constant dense<0.000000e+00> : vector<8x256xf32>
    %263 = tpu.matmul %257, %262, %cst_208 {dimension_numbers = #tpu.dot_dimension_numbers<[1], [0], [0], [1], [0, 0, 1, 1], [], []>} : vector<8x4xf32>, vector<4x256xf32>, vector<8x256xf32> -> vector<8x256xf32>
    %264 = arith.addf %255, %263 : vector<8x256xf32>
    %c16 = arith.constant 16 : index
    %c0_209 = arith.constant 0 : index
    %c0_210 = arith.constant 0 : index
    %265 = vector.load %arg8[%c16, %c0_209, %c0_210] : memref<28x8x4xf32, #tpu.memory_space<vmem>>, vector<1x8x4xf32>
    %266 = vector.shape_cast %265 : vector<1x8x4xf32> to vector<8x4xf32>
    %c0_211 = arith.constant 0 : index
    %c564 = arith.constant 564 : index
    %267 = vector.load %arg13[%c0_211, %c564] : memref<4x1024xf32, #tpu.memory_space<vmem>>, vector<4x256xf32>
    %c1_212 = arith.constant 1 : index
    %c0_213 = arith.constant 0 : index
    %c0_214 = arith.constant 0 : index
    %268 = vector.load %arg3[%c1_212, %c0_213, %c0_214] : memref<8x1x256xf32, #tpu.memory_space<vmem>>, vector<1x1x256xf32>
    %269 = vector.shape_cast %268 : vector<1x1x256xf32> to vector<1x256xf32>
    %270 = vector.broadcast %269 : vector<1x256xf32> to vector<4x256xf32>
    %271 = arith.mulf %267, %270 : vector<4x256xf32>
    %cst_215 = arith.constant dense<0.000000e+00> : vector<8x256xf32>
    %272 = tpu.matmul %266, %271, %cst_215 {dimension_numbers = #tpu.dot_dimension_numbers<[1], [0], [0], [1], [0, 0, 1, 1], [], []>} : vector<8x4xf32>, vector<4x256xf32>, vector<8x256xf32> -> vector<8x256xf32>
    %273 = arith.addf %264, %272 : vector<8x256xf32>
    %c17 = arith.constant 17 : index
    %c0_216 = arith.constant 0 : index
    %c0_217 = arith.constant 0 : index
    %274 = vector.load %arg8[%c17, %c0_216, %c0_217] : memref<28x8x4xf32, #tpu.memory_space<vmem>>, vector<1x8x4xf32>
    %275 = vector.shape_cast %274 : vector<1x8x4xf32> to vector<8x4xf32>
    %c0_218 = arith.constant 0 : index
    %c576 = arith.constant 576 : index
    %276 = vector.load %arg13[%c0_218, %c576] : memref<4x1024xf32, #tpu.memory_space<vmem>>, vector<4x256xf32>
    %cst_219 = arith.constant dense<0.000000e+00> : vector<8x256xf32>
    %277 = tpu.matmul %275, %276, %cst_219 {dimension_numbers = #tpu.dot_dimension_numbers<[1], [0], [0], [1], [0, 0, 1, 1], [], []>} : vector<8x4xf32>, vector<4x256xf32>, vector<8x256xf32> -> vector<8x256xf32>
    %278 = arith.addf %273, %277 : vector<8x256xf32>
    %c18 = arith.constant 18 : index
    %c0_220 = arith.constant 0 : index
    %c0_221 = arith.constant 0 : index
    %279 = vector.load %arg8[%c18, %c0_220, %c0_221] : memref<28x8x4xf32, #tpu.memory_space<vmem>>, vector<1x8x4xf32>
    %280 = vector.shape_cast %279 : vector<1x8x4xf32> to vector<8x4xf32>
    %c0_222 = arith.constant 0 : index
    %c588 = arith.constant 588 : index
    %281 = vector.load %arg13[%c0_222, %c588] : memref<4x1024xf32, #tpu.memory_space<vmem>>, vector<4x256xf32>
    %c6_223 = arith.constant 6 : index
    %c0_224 = arith.constant 0 : index
    %c0_225 = arith.constant 0 : index
    %282 = vector.load %arg3[%c6_223, %c0_224, %c0_225] : memref<8x1x256xf32, #tpu.memory_space<vmem>>, vector<1x1x256xf32>
    %283 = vector.shape_cast %282 : vector<1x1x256xf32> to vector<1x256xf32>
    %284 = vector.broadcast %283 : vector<1x256xf32> to vector<4x256xf32>
    %285 = arith.mulf %281, %284 : vector<4x256xf32>
    %cst_226 = arith.constant dense<0.000000e+00> : vector<8x256xf32>
    %286 = tpu.matmul %280, %285, %cst_226 {dimension_numbers = #tpu.dot_dimension_numbers<[1], [0], [0], [1], [0, 0, 1, 1], [], []>} : vector<8x4xf32>, vector<4x256xf32>, vector<8x256xf32> -> vector<8x256xf32>
    %287 = arith.addf %278, %286 : vector<8x256xf32>
    %c4_227 = arith.constant 4 : index
    %c0_228 = arith.constant 0 : index
    %c0_229 = arith.constant 0 : index
    %288 = vector.load %arg10[%c4_227, %c0_228, %c0_229] : memref<6x8x8xf32, #tpu.memory_space<vmem>>, vector<1x8x8xf32>
    %289 = vector.shape_cast %288 : vector<1x8x8xf32> to vector<8x8xf32>
    %cst_230 = arith.constant 0.000000e+00 : f32
    %290 = vector.broadcast %cst_230 : f32 to vector<8x256xf32>
    %291 = arith.maximumf %287, %290 : vector<8x256xf32>
    %cst_231 = arith.constant dense<0.000000e+00> : vector<8x256xf32>
    %292 = tpu.matmul %289, %291, %cst_231 {dimension_numbers = #tpu.dot_dimension_numbers<[1], [0], [0], [1], [0, 0, 1, 1], [], []>} : vector<8x8xf32>, vector<8x256xf32>, vector<8x256xf32> -> vector<8x256xf32>
    %293 = arith.addf %213, %292 : vector<8x256xf32>
    %cst_232 = arith.constant 0.000000e+00 : f32
    %294 = vector.broadcast %cst_232 : f32 to vector<8x256xf32>
    %c3_233 = arith.constant 3 : index
    %c0_234 = arith.constant 0 : index
    %c0_235 = arith.constant 0 : index
    %295 = vector.load %arg9[%c3_233, %c0_234, %c0_235] : memref<4x8x1xf32, #tpu.memory_space<vmem>>, vector<1x8x1xf32>
    %296 = vector.shape_cast %295 : vector<1x8x1xf32> to vector<8x1xf32>
    %297 = vector.broadcast %296 : vector<8x1xf32> to vector<8x256xf32>
    %298 = arith.addf %294, %297 : vector<8x256xf32>
    %c19 = arith.constant 19 : index
    %c0_236 = arith.constant 0 : index
    %c0_237 = arith.constant 0 : index
    %299 = vector.load %arg8[%c19, %c0_236, %c0_237] : memref<28x8x4xf32, #tpu.memory_space<vmem>>, vector<1x8x4xf32>
    %300 = vector.shape_cast %299 : vector<1x8x4xf32> to vector<8x4xf32>
    %c0_238 = arith.constant 0 : index
    %c78 = arith.constant 78 : index
    %301 = vector.load %arg13[%c0_238, %c78] : memref<4x1024xf32, #tpu.memory_space<vmem>>, vector<4x256xf32>
    %c0_239 = arith.constant 0 : index
    %c0_240 = arith.constant 0 : index
    %c0_241 = arith.constant 0 : index
    %302 = vector.load %arg3[%c0_239, %c0_240, %c0_241] : memref<8x1x256xf32, #tpu.memory_space<vmem>>, vector<1x1x256xf32>
    %303 = vector.shape_cast %302 : vector<1x1x256xf32> to vector<1x256xf32>
    %304 = vector.broadcast %303 : vector<1x256xf32> to vector<4x256xf32>
    %305 = arith.mulf %301, %304 : vector<4x256xf32>
    %cst_242 = arith.constant dense<0.000000e+00> : vector<8x256xf32>
    %306 = tpu.matmul %300, %305, %cst_242 {dimension_numbers = #tpu.dot_dimension_numbers<[1], [0], [0], [1], [0, 0, 1, 1], [], []>} : vector<8x4xf32>, vector<4x256xf32>, vector<8x256xf32> -> vector<8x256xf32>
    %307 = arith.addf %298, %306 : vector<8x256xf32>
    %c20 = arith.constant 20 : index
    %c0_243 = arith.constant 0 : index
    %c0_244 = arith.constant 0 : index
    %308 = vector.load %arg8[%c20, %c0_243, %c0_244] : memref<28x8x4xf32, #tpu.memory_space<vmem>>, vector<1x8x4xf32>
    %309 = vector.shape_cast %308 : vector<1x8x4xf32> to vector<8x4xf32>
    %c0_245 = arith.constant 0 : index
    %c96 = arith.constant 96 : index
    %310 = vector.load %arg13[%c0_245, %c96] : memref<4x1024xf32, #tpu.memory_space<vmem>>, vector<4x256xf32>
    %cst_246 = arith.constant dense<0.000000e+00> : vector<8x256xf32>
    %311 = tpu.matmul %309, %310, %cst_246 {dimension_numbers = #tpu.dot_dimension_numbers<[1], [0], [0], [1], [0, 0, 1, 1], [], []>} : vector<8x4xf32>, vector<4x256xf32>, vector<8x256xf32> -> vector<8x256xf32>
    %312 = arith.addf %307, %311 : vector<8x256xf32>
    %c21 = arith.constant 21 : index
    %c0_247 = arith.constant 0 : index
    %c0_248 = arith.constant 0 : index
    %313 = vector.load %arg8[%c21, %c0_247, %c0_248] : memref<28x8x4xf32, #tpu.memory_space<vmem>>, vector<1x8x4xf32>
    %314 = vector.shape_cast %313 : vector<1x8x4xf32> to vector<8x4xf32>
    %c0_249 = arith.constant 0 : index
    %c114 = arith.constant 114 : index
    %315 = vector.load %arg13[%c0_249, %c114] : memref<4x1024xf32, #tpu.memory_space<vmem>>, vector<4x256xf32>
    %c7_250 = arith.constant 7 : index
    %c0_251 = arith.constant 0 : index
    %c0_252 = arith.constant 0 : index
    %316 = vector.load %arg3[%c7_250, %c0_251, %c0_252] : memref<8x1x256xf32, #tpu.memory_space<vmem>>, vector<1x1x256xf32>
    %317 = vector.shape_cast %316 : vector<1x1x256xf32> to vector<1x256xf32>
    %318 = vector.broadcast %317 : vector<1x256xf32> to vector<4x256xf32>
    %319 = arith.mulf %315, %318 : vector<4x256xf32>
    %cst_253 = arith.constant dense<0.000000e+00> : vector<8x256xf32>
    %320 = tpu.matmul %314, %319, %cst_253 {dimension_numbers = #tpu.dot_dimension_numbers<[1], [0], [0], [1], [0, 0, 1, 1], [], []>} : vector<8x4xf32>, vector<4x256xf32>, vector<8x256xf32> -> vector<8x256xf32>
    %321 = arith.addf %312, %320 : vector<8x256xf32>
    %c22 = arith.constant 22 : index
    %c0_254 = arith.constant 0 : index
    %c0_255 = arith.constant 0 : index
    %322 = vector.load %arg8[%c22, %c0_254, %c0_255] : memref<28x8x4xf32, #tpu.memory_space<vmem>>, vector<1x8x4xf32>
    %323 = vector.shape_cast %322 : vector<1x8x4xf32> to vector<8x4xf32>
    %c0_256 = arith.constant 0 : index
    %c366 = arith.constant 366 : index
    %324 = vector.load %arg13[%c0_256, %c366] : memref<4x1024xf32, #tpu.memory_space<vmem>>, vector<4x256xf32>
    %c0_257 = arith.constant 0 : index
    %c0_258 = arith.constant 0 : index
    %c0_259 = arith.constant 0 : index
    %325 = vector.load %arg3[%c0_257, %c0_258, %c0_259] : memref<8x1x256xf32, #tpu.memory_space<vmem>>, vector<1x1x256xf32>
    %326 = vector.shape_cast %325 : vector<1x1x256xf32> to vector<1x256xf32>
    %327 = vector.broadcast %326 : vector<1x256xf32> to vector<4x256xf32>
    %328 = arith.mulf %324, %327 : vector<4x256xf32>
    %cst_260 = arith.constant dense<0.000000e+00> : vector<8x256xf32>
    %329 = tpu.matmul %323, %328, %cst_260 {dimension_numbers = #tpu.dot_dimension_numbers<[1], [0], [0], [1], [0, 0, 1, 1], [], []>} : vector<8x4xf32>, vector<4x256xf32>, vector<8x256xf32> -> vector<8x256xf32>
    %330 = arith.addf %321, %329 : vector<8x256xf32>
    %c23 = arith.constant 23 : index
    %c0_261 = arith.constant 0 : index
    %c0_262 = arith.constant 0 : index
    %331 = vector.load %arg8[%c23, %c0_261, %c0_262] : memref<28x8x4xf32, #tpu.memory_space<vmem>>, vector<1x8x4xf32>
    %332 = vector.shape_cast %331 : vector<1x8x4xf32> to vector<8x4xf32>
    %c0_263 = arith.constant 0 : index
    %c384_264 = arith.constant 384 : index
    %333 = vector.load %arg13[%c0_263, %c384_264] : memref<4x1024xf32, #tpu.memory_space<vmem>>, vector<4x256xf32>
    %cst_265 = arith.constant dense<0.000000e+00> : vector<8x256xf32>
    %334 = tpu.matmul %332, %333, %cst_265 {dimension_numbers = #tpu.dot_dimension_numbers<[1], [0], [0], [1], [0, 0, 1, 1], [], []>} : vector<8x4xf32>, vector<4x256xf32>, vector<8x256xf32> -> vector<8x256xf32>
    %335 = arith.addf %330, %334 : vector<8x256xf32>
    %c24 = arith.constant 24 : index
    %c0_266 = arith.constant 0 : index
    %c0_267 = arith.constant 0 : index
    %336 = vector.load %arg8[%c24, %c0_266, %c0_267] : memref<28x8x4xf32, #tpu.memory_space<vmem>>, vector<1x8x4xf32>
    %337 = vector.shape_cast %336 : vector<1x8x4xf32> to vector<8x4xf32>
    %c0_268 = arith.constant 0 : index
    %c402 = arith.constant 402 : index
    %338 = vector.load %arg13[%c0_268, %c402] : memref<4x1024xf32, #tpu.memory_space<vmem>>, vector<4x256xf32>
    %c7_269 = arith.constant 7 : index
    %c0_270 = arith.constant 0 : index
    %c0_271 = arith.constant 0 : index
    %339 = vector.load %arg3[%c7_269, %c0_270, %c0_271] : memref<8x1x256xf32, #tpu.memory_space<vmem>>, vector<1x1x256xf32>
    %340 = vector.shape_cast %339 : vector<1x1x256xf32> to vector<1x256xf32>
    %341 = vector.broadcast %340 : vector<1x256xf32> to vector<4x256xf32>
    %342 = arith.mulf %338, %341 : vector<4x256xf32>
    %cst_272 = arith.constant dense<0.000000e+00> : vector<8x256xf32>
    %343 = tpu.matmul %337, %342, %cst_272 {dimension_numbers = #tpu.dot_dimension_numbers<[1], [0], [0], [1], [0, 0, 1, 1], [], []>} : vector<8x4xf32>, vector<4x256xf32>, vector<8x256xf32> -> vector<8x256xf32>
    %344 = arith.addf %335, %343 : vector<8x256xf32>
    %c25 = arith.constant 25 : index
    %c0_273 = arith.constant 0 : index
    %c0_274 = arith.constant 0 : index
    %345 = vector.load %arg8[%c25, %c0_273, %c0_274] : memref<28x8x4xf32, #tpu.memory_space<vmem>>, vector<1x8x4xf32>
    %346 = vector.shape_cast %345 : vector<1x8x4xf32> to vector<8x4xf32>
    %c0_275 = arith.constant 0 : index
    %c654 = arith.constant 654 : index
    %347 = vector.load %arg13[%c0_275, %c654] : memref<4x1024xf32, #tpu.memory_space<vmem>>, vector<4x256xf32>
    %c0_276 = arith.constant 0 : index
    %c0_277 = arith.constant 0 : index
    %c0_278 = arith.constant 0 : index
    %348 = vector.load %arg3[%c0_276, %c0_277, %c0_278] : memref<8x1x256xf32, #tpu.memory_space<vmem>>, vector<1x1x256xf32>
    %349 = vector.shape_cast %348 : vector<1x1x256xf32> to vector<1x256xf32>
    %350 = vector.broadcast %349 : vector<1x256xf32> to vector<4x256xf32>
    %351 = arith.mulf %347, %350 : vector<4x256xf32>
    %cst_279 = arith.constant dense<0.000000e+00> : vector<8x256xf32>
    %352 = tpu.matmul %346, %351, %cst_279 {dimension_numbers = #tpu.dot_dimension_numbers<[1], [0], [0], [1], [0, 0, 1, 1], [], []>} : vector<8x4xf32>, vector<4x256xf32>, vector<8x256xf32> -> vector<8x256xf32>
    %353 = arith.addf %344, %352 : vector<8x256xf32>
    %c26 = arith.constant 26 : index
    %c0_280 = arith.constant 0 : index
    %c0_281 = arith.constant 0 : index
    %354 = vector.load %arg8[%c26, %c0_280, %c0_281] : memref<28x8x4xf32, #tpu.memory_space<vmem>>, vector<1x8x4xf32>
    %355 = vector.shape_cast %354 : vector<1x8x4xf32> to vector<8x4xf32>
    %c0_282 = arith.constant 0 : index
    %c672 = arith.constant 672 : index
    %356 = vector.load %arg13[%c0_282, %c672] : memref<4x1024xf32, #tpu.memory_space<vmem>>, vector<4x256xf32>
    %cst_283 = arith.constant dense<0.000000e+00> : vector<8x256xf32>
    %357 = tpu.matmul %355, %356, %cst_283 {dimension_numbers = #tpu.dot_dimension_numbers<[1], [0], [0], [1], [0, 0, 1, 1], [], []>} : vector<8x4xf32>, vector<4x256xf32>, vector<8x256xf32> -> vector<8x256xf32>
    %358 = arith.addf %353, %357 : vector<8x256xf32>
    %c27 = arith.constant 27 : index
    %c0_284 = arith.constant 0 : index
    %c0_285 = arith.constant 0 : index
    %359 = vector.load %arg8[%c27, %c0_284, %c0_285] : memref<28x8x4xf32, #tpu.memory_space<vmem>>, vector<1x8x4xf32>
    %360 = vector.shape_cast %359 : vector<1x8x4xf32> to vector<8x4xf32>
    %c0_286 = arith.constant 0 : index
    %c690 = arith.constant 690 : index
    %361 = vector.load %arg13[%c0_286, %c690] : memref<4x1024xf32, #tpu.memory_space<vmem>>, vector<4x256xf32>
    %c7_287 = arith.constant 7 : index
    %c0_288 = arith.constant 0 : index
    %c0_289 = arith.constant 0 : index
    %362 = vector.load %arg3[%c7_287, %c0_288, %c0_289] : memref<8x1x256xf32, #tpu.memory_space<vmem>>, vector<1x1x256xf32>
    %363 = vector.shape_cast %362 : vector<1x1x256xf32> to vector<1x256xf32>
    %364 = vector.broadcast %363 : vector<1x256xf32> to vector<4x256xf32>
    %365 = arith.mulf %361, %364 : vector<4x256xf32>
    %cst_290 = arith.constant dense<0.000000e+00> : vector<8x256xf32>
    %366 = tpu.matmul %360, %365, %cst_290 {dimension_numbers = #tpu.dot_dimension_numbers<[1], [0], [0], [1], [0, 0, 1, 1], [], []>} : vector<8x4xf32>, vector<4x256xf32>, vector<8x256xf32> -> vector<8x256xf32>
    %367 = arith.addf %358, %366 : vector<8x256xf32>
    %c5_291 = arith.constant 5 : index
    %c0_292 = arith.constant 0 : index
    %c0_293 = arith.constant 0 : index
    %368 = vector.load %arg10[%c5_291, %c0_292, %c0_293] : memref<6x8x8xf32, #tpu.memory_space<vmem>>, vector<1x8x8xf32>
    %369 = vector.shape_cast %368 : vector<1x8x8xf32> to vector<8x8xf32>
    %cst_294 = arith.constant 0.000000e+00 : f32
    %370 = vector.broadcast %cst_294 : f32 to vector<8x256xf32>
    %371 = arith.maximumf %367, %370 : vector<8x256xf32>
    %cst_295 = arith.constant dense<0.000000e+00> : vector<8x256xf32>
    %372 = tpu.matmul %369, %371, %cst_295 {dimension_numbers = #tpu.dot_dimension_numbers<[1], [0], [0], [1], [0, 0, 1, 1], [], []>} : vector<8x8xf32>, vector<8x256xf32>, vector<8x256xf32> -> vector<8x256xf32>
    %373 = arith.addf %293, %372 : vector<8x256xf32>
    %c0_296 = arith.constant 0 : index
    %c0_297 = arith.constant 0 : index
    %374 = vector.load %arg11[%c0_296, %c0_297] : memref<8x1xf32, #tpu.memory_space<vmem>>, vector<8x1xf32>
    %375 = vector.broadcast %374 : vector<8x1xf32> to vector<8x256xf32>
    %376 = arith.addf %373, %375 : vector<8x256xf32>
    %cst_298 = arith.constant 0.000000e+00 : f32
    %377 = vector.broadcast %cst_298 : f32 to vector<8x256xf32>
    %378 = arith.maximumf %376, %377 : vector<8x256xf32>
    %c0_299 = arith.constant 0 : index
    %c0_300 = arith.constant 0 : index
    %c0_301 = arith.constant 0 : index
    %379 = vector.load %arg12[%c0_299, %c0_300, %c0_301] : memref<1x8x256xf32, #tpu.memory_space<vmem>>, vector<1x8x256xf32>
    %380 = vector.shape_cast %379 : vector<1x8x256xf32> to vector<8x256xf32>
    %381 = vector.shape_cast %378 : vector<8x256xf32> to vector<1x8x256xf32>
    tpu.vector_store %arg12[%c0_299, %c0_300, %c0_301], %381 {strides = array<i32>} : memref<1x8x256xf32, #tpu.memory_space<vmem>>, vector<1x8x256xf32>,
    return
  }
  func.func @transform_0(%arg0: i32) -> (i32, i32, i32) {
    %c0_i32 = arith.constant 0 : i32
    %c0_i32_0 = arith.constant 0 : i32
    %c0_i32_1 = arith.constant 0 : i32
    return %arg0, %c0_i32, %c0_i32_0 : i32, i32, i32
  }
  func.func @transform_1(%arg0: i32) -> (i32, i32, i32) {
    %c0_i32 = arith.constant 0 : i32
    %c0_i32_0 = arith.constant 0 : i32
    %c0_i32_1 = arith.constant 0 : i32
    return %arg0, %c0_i32, %c0_i32_0 : i32, i32, i32
  }
  func.func @transform_2(%arg0: i32) -> (i32, i32, i32) {
    %c0_i32 = arith.constant 0 : i32
    %c0_i32_0 = arith.constant 0 : i32
    %c0_i32_1 = arith.constant 0 : i32
    %c0_i32_2 = arith.constant 0 : i32
    return %c0_i32, %c0_i32_0, %c0_i32_1 : i32, i32, i32
  }
  func.func @transform_3(%arg0: i32) -> (i32, i32) {
    %c0_i32 = arith.constant 0 : i32
    %c0_i32_0 = arith.constant 0 : i32
    %c0_i32_1 = arith.constant 0 : i32
    return %c0_i32, %c0_i32_0 : i32, i32
  }
  func.func @transform_4(%arg0: i32) -> (i32, i32) {
    %c0_i32 = arith.constant 0 : i32
    %c0_i32_0 = arith.constant 0 : i32
    %c0_i32_1 = arith.constant 0 : i32
    return %c0_i32, %c0_i32_0 : i32, i32
  }
  func.func @transform_5(%arg0: i32) -> (i32, i32, i32) {
    %c0_i32 = arith.constant 0 : i32
    %c0_i32_0 = arith.constant 0 : i32
    %c0_i32_1 = arith.constant 0 : i32
    %c0_i32_2 = arith.constant 0 : i32
    return %c0_i32, %c0_i32_0, %c0_i32_1 : i32, i32, i32
  }
  func.func @transform_6(%arg0: i32) -> (i32, i32) {
    %c0_i32 = arith.constant 0 : i32
    %c0_i32_0 = arith.constant 0 : i32
    %c0_i32_1 = arith.constant 0 : i32
    return %c0_i32, %c0_i32_0 : i32, i32
  }
  func.func @transform_7(%arg0: i32) -> (i32, i32, i32) {
    %c0_i32 = arith.constant 0 : i32
    %c0_i32_0 = arith.constant 0 : i32
    %c0_i32_1 = arith.constant 0 : i32
    %c0_i32_2 = arith.constant 0 : i32
    return %c0_i32, %c0_i32_0, %c0_i32_1 : i32, i32, i32
  }
  func.func @transform_8(%arg0: i32) -> (i32, i32, i32) {
    %c0_i32 = arith.constant 0 : i32
    %c0_i32_0 = arith.constant 0 : i32
    %c0_i32_1 = arith.constant 0 : i32
    %c0_i32_2 = arith.constant 0 : i32
    return %c0_i32, %c0_i32_0, %c0_i32_1 : i32, i32, i32
  }
  func.func @transform_9(%arg0: i32) -> (i32, i32, i32) {
    %c0_i32 = arith.constant 0 : i32
    %c0_i32_0 = arith.constant 0 : i32
    %c0_i32_1 = arith.constant 0 : i32
    %c0_i32_2 = arith.constant 0 : i32
    return %c0_i32, %c0_i32_0, %c0_i32_1 : i32, i32, i32
  }
  func.func @transform_10(%arg0: i32) -> (i32, i32) {
    %c0_i32 = arith.constant 0 : i32
    %c0_i32_0 = arith.constant 0 : i32
    %c0_i32_1 = arith.constant 0 : i32
    return %c0_i32, %c0_i32_0 : i32, i32
  }
  func.func @transform_11(%arg0: i32) -> (i32, i32, i32) {
    %c0_i32 = arith.constant 0 : i32
    %c0_i32_0 = arith.constant 0 : i32
    %c0_i32_1 = arith.constant 0 : i32
    return %arg0, %c0_i32, %c0_i32_0 : i32, i32, i32
  }
}

</mosaic_0001>

<llo_original>
// kernel: gscnn_aspp_forward.1
$region0: #{gscnn_aspp_forward.1}
  #allocation0 [shape = 'u32[]', space=smem, size = 0x4, offset = 0x4, fixed_abs, tag = 'smem constant byte address 0x4 - core index']
  #allocation1 [shape = 'u32[144,128]{1,0:T(1,128)}', space=vmem, size = 0x12000, scoped, tag = 'internal scratch']
  #allocation2 [shape = 'f32[4,1024]{1,0:T(4,128)}', space=vmem, size = 0x4000, scoped, tag = 'scratch operand']
  #allocation3 [shape = 'f32[1,512]{1,0:T(1,128)}', space=vmem, size = 0x800, scoped, tag = 'scratch operand']
  %s0 = inlined_call_operand.vmem [shape: f32[2,4,256], index: 0, kind: input, shape index: {}]
  %s1 = inlined_call_operand.vmem [shape: f32[2,1,256], index: 1, kind: input, shape index: {}]
  %s2 = inlined_call_operand.vmem [shape: f32[8,1,256], index: 2, kind: input, shape index: {}]
  %s3 = inlined_call_operand.vmem [shape: f32[8,4], index: 3, kind: input, shape index: {}]
  %s4 = inlined_call_operand.vmem [shape: f32[8,1], index: 4, kind: input, shape index: {}]
  %s5 = inlined_call_operand.vmem [shape: f32[9,8,1], index: 5, kind: input, shape index: {}]
  %s6 = inlined_call_operand.vmem [shape: f32[8,1], index: 6, kind: input, shape index: {}]
  %s7 = inlined_call_operand.vmem [shape: f32[28,8,4], index: 7, kind: input, shape index: {}]
  %s8 = inlined_call_operand.vmem [shape: f32[4,8,1], index: 8, kind: input, shape index: {}]
  %s9 = inlined_call_operand.vmem [shape: f32[6,8,8], index: 9, kind: input, shape index: {}]
  %s10 = inlined_call_operand.vmem [shape: f32[8,1], index: 10, kind: input, shape index: {}]
  %s11 = inlined_call_operand.vmem [shape: f32[2,8,256], index: 11, kind: output, shape index: {}]
  %s12 = sld [smem:[#allocation0]]
  $region77: #{gscnn_aspp_forward.1} parent=0
    _
  %s14 = ssub.s32 1, %s12
  %s15 = scalar_select 0, %s14, %s12
  loop: start=0, step=1, limit=4
  $region2: #{gscnn_aspp_forward.1} parent=0 // loop_pre_header
    _
  $region3: #{gscnn_aspp_forward.1} parent=0 // loop_header
    %s17 = sphi 0, %s21
    %p18 = scmp.ge.s32.totalorder %s17, 4
    %s27 = sphi 0, %s29
    %s30 = sphi 0, %s27
    %s31 = sphi 0, %s30
    %s47 = sphi 0, %s31
    %s53 = sphi 0, %s55
    %s56 = sphi 0, %s53
    %s57 = sphi 0, %s56
    %s73 = sphi 0, %s57
    %s77 = sphi 0, %s77
    %s79 = sphi 0, %s77
    %s80 = sphi 0, %s79
    %s94 = sphi 0, %s80
    %s98 = sphi 0, %s98
    %s100 = sphi 0, %s98
    %s101 = sphi 0, %s100
    %s115 = sphi 0, %s101
    %s119 = sphi 0, %s119
    %s121 = sphi 0, %s119
    %s122 = sphi 0, %s121
    %s136 = sphi 0, %s122
    %s140 = sphi 0, %s140
    %s142 = sphi 0, %s140
    %s143 = sphi 0, %s142
    %s157 = sphi 0, %s143
    %s161 = sphi 0, %s161
    %s163 = sphi 0, %s161
    %s164 = sphi 0, %s163
    %s178 = sphi 0, %s164
    %s182 = sphi 0, %s182
    %s184 = sphi 0, %s182
    %s185 = sphi 0, %s184
    %s199 = sphi 0, %s185
    %s203 = sphi 0, %s203
    %s205 = sphi 0, %s203
    %s206 = sphi 0, %s205
    %s220 = sphi 0, %s206
    %s224 = sphi 0, %s224
    %s226 = sphi 0, %s224
    %s227 = sphi 0, %s226
    %s241 = sphi 0, %s227
    %s245 = sphi 0, %s245
    %s247 = sphi 0, %s245
    %s248 = sphi 0, %s247
    %s262 = sphi 0, %s248
    %s268 = sphi 0, %s270
    %s271 = sphi 0, %s268
    %s272 = sphi 0, %s271
    %s288 = sphi 0, %s272
  $region4: #{gscnn_aspp_forward.1} parent=0 // loop_header_branch
    %20 = sbr.rel (%p18) target = $region8
  $region5: #{gscnn_aspp_forward.1} parent=0 // loop_body
    %s22 = ssub.s32 %s17, 1
    %s23 = ssub.s32 %s17, 2
    %s24 = sadd.s32 %s17, 1
    %s25 = ssub.s32 %s17, %s24
    %p26 = scmp.eq.s32.totalorder %s25, 0
    %s28 = sadd.s32 %s27, 1
    %s29 = scalar_select %p26, %s27, %s28
    %p32 = pneg %p26
    %p33 = scmp.eq.s32.totalorder %s17, 1
    %p34 = por %p32, %p33
    %p35 = scmp.ne.s32.totalorder %s27, %s30
    %p36 = scmp.eq.s32.totalorder %s17, 0
    %p37 = por %p35, %p36
    %p38 = scmp.ne.s32.totalorder %s27, %s30
    %p39 = scmp.eq.s32.totalorder %s22, 1
    %p40 = por %p38, %p39
    %p41 = scmp.ne.s32.totalorder %s30, %s31
    %p42 = scmp.eq.s32.totalorder %s22, 0
    %p43 = por %p41, %p42
    %p44 = scmp.ne.s32.totalorder %s30, %s31
    %p45 = scmp.eq.s32.totalorder %s23, 1
    %p46 = por %p44, %p45
    %p48 = scmp.ne.s32.totalorder %s31, %s47
    %p49 = scmp.eq.s32.totalorder %s23, 0
    %p50 = por %p48, %p49
    %s51 = ssub.s32 %s17, %s24
    %p52 = scmp.eq.s32.totalorder %s51, 0
    %s54 = sadd.s32 %s53, 1
    %s55 = scalar_select %p52, %s53, %s54
    %p58 = pneg %p52
    %p59 = scmp.eq.s32.totalorder %s17, 1
    %p60 = por %p58, %p59
    %p61 = scmp.ne.s32.totalorder %s53, %s56
    %p62 = scmp.eq.s32.totalorder %s17, 0
    %p63 = por %p61, %p62
    %p64 = scmp.ne.s32.totalorder %s53, %s56
    %p65 = scmp.eq.s32.totalorder %s22, 1
    %p66 = por %p64, %p65
    %p67 = scmp.ne.s32.totalorder %s56, %s57
    %p68 = scmp.eq.s32.totalorder %s22, 0
    %p69 = por %p67, %p68
    %p70 = scmp.ne.s32.totalorder %s56, %s57
    %p71 = scmp.eq.s32.totalorder %s23, 1
    %p72 = por %p70, %p71
    %p74 = scmp.ne.s32.totalorder %s57, %s73
    %p75 = scmp.eq.s32.totalorder %s23, 0
    %p76 = por %p74, %p75
    %s78 = sadd.s32 %s77, 1
    %p81 = scmp.eq.s32.totalorder %s17, 1
    %p82 = scmp.ne.s32.totalorder %s77, %s79
    %p83 = scmp.eq.s32.totalorder %s17, 0
    %p84 = por %p82, %p83
    %p85 = scmp.ne.s32.totalorder %s77, %s79
    %p86 = scmp.eq.s32.totalorder %s22, 1
    %p87 = por %p85, %p86
    %p88 = scmp.ne.s32.totalorder %s79, %s80
    %p89 = scmp.eq.s32.totalorder %s22, 0
    %p90 = por %p88, %p89
    %p91 = scmp.ne.s32.totalorder %s79, %s80
    %p92 = scmp.eq.s32.totalorder %s23, 1
    %p93 = por %p91, %p92
    %p95 = scmp.ne.s32.totalorder %s80, %s94
    %p96 = scmp.eq.s32.totalorder %s23, 0
    %p97 = por %p95, %p96
    %s99 = sadd.s32 %s98, 1
    %p102 = scmp.eq.s32.totalorder %s17, 1
    %p103 = scmp.ne.s32.totalorder %s98, %s100
    %p104 = scmp.eq.s32.totalorder %s17, 0
    %p105 = por %p103, %p104
    %p106 = scmp.ne.s32.totalorder %s98, %s100
    %p107 = scmp.eq.s32.totalorder %s22, 1
    %p108 = por %p106, %p107
    %p109 = scmp.ne.s32.totalorder %s100, %s101
    %p110 = scmp.eq.s32.totalorder %s22, 0
    %p111 = por %p109, %p110
    %p112 = scmp.ne.s32.totalorder %s100, %s101
    %p113 = scmp.eq.s32.totalorder %s23, 1
    %p114 = por %p112, %p113
    %p116 = scmp.ne.s32.totalorder %s101, %s115
    %p117 = scmp.eq.s32.totalorder %s23, 0
    %p118 = por %p116, %p117
    %s120 = sadd.s32 %s119, 1
    %p123 = scmp.eq.s32.totalorder %s17, 1
    %p124 = scmp.ne.s32.totalorder %s119, %s121
    %p125 = scmp.eq.s32.totalorder %s17, 0
    %p126 = por %p124, %p125
    %p127 = scmp.ne.s32.totalorder %s119, %s121
    %p128 = scmp.eq.s32.totalorder %s22, 1
    %p129 = por %p127, %p128
    %p130 = scmp.ne.s32.totalorder %s121, %s122
    %p131 = scmp.eq.s32.totalorder %s22, 0
    %p132 = por %p130, %p131
    %p133 = scmp.ne.s32.totalorder %s121, %s122
    %p134 = scmp.eq.s32.totalorder %s23, 1
    %p135 = por %p133, %p134
    %p137 = scmp.ne.s32.totalorder %s122, %s136
    %p138 = scmp.eq.s32.totalorder %s23, 0
    %p139 = por %p137, %p138
    %s141 = sadd.s32 %s140, 1
    %p144 = scmp.eq.s32.totalorder %s17, 1
    %p145 = scmp.ne.s32.totalorder %s140, %s142
    %p146 = scmp.eq.s32.totalorder %s17, 0
    %p147 = por %p145, %p146
    %p148 = scmp.ne.s32.totalorder %s140, %s142
    %p149 = scmp.eq.s32.totalorder %s22, 1
    %p150 = por %p148, %p149
    %p151 = scmp.ne.s32.totalorder %s142, %s143
    %p152 = scmp.eq.s32.totalorder %s22, 0
    %p153 = por %p151, %p152
    %p154 = scmp.ne.s32.totalorder %s142, %s143
    %p155 = scmp.eq.s32.totalorder %s23, 1
    %p156 = por %p154, %p155
    %p158 = scmp.ne.s32.totalorder %s143, %s157
    %p159 = scmp.eq.s32.totalorder %s23, 0
    %p160 = por %p158, %p159
    %s162 = sadd.s32 %s161, 1
    %p165 = scmp.eq.s32.totalorder %s17, 1
    %p166 = scmp.ne.s32.totalorder %s161, %s163
    %p167 = scmp.eq.s32.totalorder %s17, 0
    %p168 = por %p166, %p167
    %p169 = scmp.ne.s32.totalorder %s161, %s163
    %p170 = scmp.eq.s32.totalorder %s22, 1
    %p171 = por %p169, %p170
    %p172 = scmp.ne.s32.totalorder %s163, %s164
    %p173 = scmp.eq.s32.totalorder %s22, 0
    %p174 = por %p172, %p173
    %p175 = scmp.ne.s32.totalorder %s163, %s164
    %p176 = scmp.eq.s32.totalorder %s23, 1
    %p177 = por %p175, %p176
    %p179 = scmp.ne.s32.totalorder %s164, %s178
    %p180 = scmp.eq.s32.totalorder %s23, 0
    %p181 = por %p179, %p180
    %s183 = sadd.s32 %s182, 1
    %p186 = scmp.eq.s32.totalorder %s17, 1
    %p187 = scmp.ne.s32.totalorder %s182, %s184
    %p188 = scmp.eq.s32.totalorder %s17, 0
    %p189 = por %p187, %p188
    %p190 = scmp.ne.s32.totalorder %s182, %s184
    %p191 = scmp.eq.s32.totalorder %s22, 1
    %p192 = por %p190, %p191
    %p193 = scmp.ne.s32.totalorder %s184, %s185
    %p194 = scmp.eq.s32.totalorder %s22, 0
    %p195 = por %p193, %p194
    %p196 = scmp.ne.s32.totalorder %s184, %s185
    %p197 = scmp.eq.s32.totalorder %s23, 1
    %p198 = por %p196, %p197
    %p200 = scmp.ne.s32.totalorder %s185, %s199
    %p201 = scmp.eq.s32.totalorder %s23, 0
    %p202 = por %p200, %p201
    %s204 = sadd.s32 %s203, 1
    %p207 = scmp.eq.s32.totalorder %s17, 1
    %p208 = scmp.ne.s32.totalorder %s203, %s205
    %p209 = scmp.eq.s32.totalorder %s17, 0
    %p210 = por %p208, %p209
    %p211 = scmp.ne.s32.totalorder %s203, %s205
    %p212 = scmp.eq.s32.totalorder %s22, 1
    %p213 = por %p211, %p212
    %p214 = scmp.ne.s32.totalorder %s205, %s206
    %p215 = scmp.eq.s32.totalorder %s22, 0
    %p216 = por %p214, %p215
    %p217 = scmp.ne.s32.totalorder %s205, %s206
    %p218 = scmp.eq.s32.totalorder %s23, 1
    %p219 = por %p217, %p218
    %p221 = scmp.ne.s32.totalorder %s206, %s220
    %p222 = scmp.eq.s32.totalorder %s23, 0
    %p223 = por %p221, %p222
    %s225 = sadd.s32 %s224, 1
    %p228 = scmp.eq.s32.totalorder %s17, 1
    %p229 = scmp.ne.s32.totalorder %s224, %s226
    %p230 = scmp.eq.s32.totalorder %s17, 0
    %p231 = por %p229, %p230
    %p232 = scmp.ne.s32.totalorder %s224, %s226
    %p233 = scmp.eq.s32.totalorder %s22, 1
    %p234 = por %p232, %p233
    %p235 = scmp.ne.s32.totalorder %s226, %s227
    %p236 = scmp.eq.s32.totalorder %s22, 0
    %p237 = por %p235, %p236
    %p238 = scmp.ne.s32.totalorder %s226, %s227
    %p239 = scmp.eq.s32.totalorder %s23, 1
    %p240 = por %p238, %p239
    %p242 = scmp.ne.s32.totalorder %s227, %s241
    %p243 = scmp.eq.s32.totalorder %s23, 0
    %p244 = por %p242, %p243
    %s246 = sadd.s32 %s245, 1
    %p249 = scmp.eq.s32.totalorder %s17, 1
    %p250 = scmp.ne.s32.totalorder %s245, %s247
    %p251 = scmp.eq.s32.totalorder %s17, 0
    %p252 = por %p250, %p251
    %p253 = scmp.ne.s32.totalorder %s245, %s247
    %p254 = scmp.eq.s32.totalorder %s22, 1
    %p255 = por %p253, %p254
    %p256 = scmp.ne.s32.totalorder %s247, %s248
    %p257 = scmp.eq.s32.totalorder %s22, 0
    %p258 = por %p256, %p257
    %p259 = scmp.ne.s32.totalorder %s247, %s248
    %p260 = scmp.eq.s32.totalorder %s23, 1
    %p261 = por %p259, %p260
    %p263 = scmp.ne.s32.totalorder %s248, %s262
    %p264 = scmp.eq.s32.totalorder %s23, 0
    %p265 = por %p263, %p264
    %s266 = ssub.s32 %s17, %s24
    %p267 = scmp.eq.s32.totalorder %s266, 0
    %s269 = sadd.s32 %s268, 1
    %s270 = scalar_select %p267, %s268, %s269
    %p273 = pneg %p267
    %p274 = scmp.eq.s32.totalorder %s17, 1
    %p275 = por %p273, %p274
    %p276 = scmp.ne.s32.totalorder %s268, %s271
    %p277 = scmp.eq.s32.totalorder %s17, 0
    %p278 = por %p276, %p277
    %p279 = scmp.ne.s32.totalorder %s268, %s271
    %p280 = scmp.eq.s32.totalorder %s22, 1
    %p281 = por %p279, %p280
    %p282 = scmp.ne.s32.totalorder %s271, %s272
    %p283 = scmp.eq.s32.totalorder %s22, 0
    %p284 = por %p282, %p283
    %p285 = scmp.ne.s32.totalorder %s271, %s272
    %p286 = scmp.eq.s32.totalorder %s23, 1
    %p287 = por %p285, %p286
    %p289 = scmp.ne.s32.totalorder %s272, %s288
    %p290 = scmp.eq.s32.totalorder %s23, 0
    %p291 = por %p289, %p290
    %p292 = scmp.le.s32.totalorder 1, %s17
    %p293 = scmp.lt.s32.totalorder %s17, 3
    %p294 = pnand %p292, %p293
    %p295 = pneg %p294
    // Predicated region
    $region9: #{gscnn_aspp_forward.1} parent=5 // pred_check
      _
    $region10: #{gscnn_aspp_forward.1} parent=5 // pred_check_branch
      %297 = sbr.rel (%p294) target = $region12
    $region11: #{gscnn_aspp_forward.1} parent=5 // pred_region
      %s298 = ssub.s32 %s17, 1
      // Predicated region
      $region13: #{gscnn_aspp_forward.1} parent=11 // pred_check
        %p299 = pneg %p90
      $region14: #{gscnn_aspp_forward.1} parent=11 // pred_check_branch
        %301 = sbr.rel (%p299) target = $region16
      $region15: #{gscnn_aspp_forward.1} parent=11 // pred_region
        _
      $region16: #{gscnn_aspp_forward.1} parent=11 // pred_fallthru
        _
      // Predicated region
      $region17: #{gscnn_aspp_forward.1} parent=11 // pred_check
        %p302 = pneg %p111
      $region18: #{gscnn_aspp_forward.1} parent=11 // pred_check_branch
        %304 = sbr.rel (%p302) target = $region20
      $region19: #{gscnn_aspp_forward.1} parent=11 // pred_region
        _
      $region20: #{gscnn_aspp_forward.1} parent=11 // pred_fallthru
        _
      // Predicated region
      $region21: #{gscnn_aspp_forward.1} parent=11 // pred_check
        %p305 = pneg %p132
      $region22: #{gscnn_aspp_forward.1} parent=11 // pred_check_branch
        %307 = sbr.rel (%p305) target = $region24
      $region23: #{gscnn_aspp_forward.1} parent=11 // pred_region
        _
      $region24: #{gscnn_aspp_forward.1} parent=11 // pred_fallthru
        _
      // Predicated region
      $region25: #{gscnn_aspp_forward.1} parent=11 // pred_check
        %p308 = pneg %p153
      $region26: #{gscnn_aspp_forward.1} parent=11 // pred_check_branch
        %310 = sbr.rel (%p308) target = $region28
      $region27: #{gscnn_aspp_forward.1} parent=11 // pred_region
        _
      $region28: #{gscnn_aspp_forward.1} parent=11 // pred_fallthru
        _
      // Predicated region
      $region29: #{gscnn_aspp_forward.1} parent=11 // pred_check
        %p311 = pneg %p174
      $region30: #{gscnn_aspp_forward.1} parent=11 // pred_check_branch
        %313 = sbr.rel (%p311) target = $region32
      $region31: #{gscnn_aspp_forward.1} parent=11 // pred_region
        _
      $region32: #{gscnn_aspp_forward.1} parent=11 // pred_fallthru
        _
      // Predicated region
      $region33: #{gscnn_aspp_forward.1} parent=11 // pred_check
        %p314 = pneg %p195
      $region34: #{gscnn_aspp_forward.1} parent=11 // pred_check_branch
        %316 = sbr.rel (%p314) target = $region36
      $region35: #{gscnn_aspp_forward.1} parent=11 // pred_region
        _
      $region36: #{gscnn_aspp_forward.1} parent=11 // pred_fallthru
        _
      // Predicated region
      $region37: #{gscnn_aspp_forward.1} parent=11 // pred_check
        %p317 = pneg %p216
      $region38: #{gscnn_aspp_forward.1} parent=11 // pred_check_branch
        %319 = sbr.rel (%p317) target = $region40
      $region39: #{gscnn_aspp_forward.1} parent=11 // pred_region
        _
      $region40: #{gscnn_aspp_forward.1} parent=11 // pred_fallthru
        _
      // Predicated region
      $region41: #{gscnn_aspp_forward.1} parent=11 // pred_check
        %p320 = pneg %p237
      $region42: #{gscnn_aspp_forward.1} parent=11 // pred_check_branch
        %322 = sbr.rel (%p320) target = $region44
      $region43: #{gscnn_aspp_forward.1} parent=11 // pred_region
        _
      $region44: #{gscnn_aspp_forward.1} parent=11 // pred_fallthru
        _
      // Predicated region
      $region45: #{gscnn_aspp_forward.1} parent=11 // pred_check
        %p323 = pneg %p258
      $region46: #{gscnn_aspp_forward.1} parent=11 // pred_check_branch
        %325 = sbr.rel (%p323) target = $region48
      $region47: #{gscnn_aspp_forward.1} parent=11 // pred_region
        _
      $region48: #{gscnn_aspp_forward.1} parent=11 // pred_fallthru
        _
    $region12: #{gscnn_aspp_forward.1} parent=5 // pred_fallthru
      _
    %p326 = scmp.lt.s32.totalorder %s17, 2
    // Predicated region
    $region49: #{gscnn_aspp_forward.1} parent=5 // pred_check
      %p327 = pneg %p326
    $region50: #{gscnn_aspp_forward.1} parent=5 // pred_check_branch
      %329 = sbr.rel (%p327) target = $region52
    $region51: #{gscnn_aspp_forward.1} parent=5 // pred_region
      // Predicated region
      $region53: #{gscnn_aspp_forward.1} parent=51 // pred_check
        %p330 = pneg %p37
      $region54: #{gscnn_aspp_forward.1} parent=51 // pred_check_branch
        %332 = sbr.rel (%p330) target = $region56
      $region55: #{gscnn_aspp_forward.1} parent=51 // pred_region
        %p333 = scmp.lt.s32.totalorder %s17, 1
        %s334 = scalar_select %p333, %s17, 1
        %s335 = smul.addr %s334, 2
        %s336 = smul.addr %s335, 4
        %s337 = scalar_lea.vmem %s0, %s336
      $region56: #{gscnn_aspp_forward.1} parent=51 // pred_fallthru
        _
      // Predicated region
      $region57: #{gscnn_aspp_forward.1} parent=51 // pred_check
        %p338 = pneg %p63
      $region58: #{gscnn_aspp_forward.1} parent=51 // pred_check_branch
        %340 = sbr.rel (%p338) target = $region60
      $region59: #{gscnn_aspp_forward.1} parent=51 // pred_region
        %p341 = scmp.lt.s32.totalorder %s17, 1
        %s342 = scalar_select %p341, %s17, 1
        %s343 = smul.addr %s342, 2
        %s344 = scalar_lea.vmem %s1, %s343
      $region60: #{gscnn_aspp_forward.1} parent=51 // pred_fallthru
        _
    $region52: #{gscnn_aspp_forward.1} parent=5 // pred_fallthru
      _
    %p345 = scmp.le.s32.totalorder 1, %s17
    %p346 = scmp.lt.s32.totalorder %s17, 3
    %p347 = pnand %p345, %p346
    %p348 = pneg %p347
    // Predicated region
    $region61: #{gscnn_aspp_forward.1} parent=5 // pred_check
      _
    $region62: #{gscnn_aspp_forward.1} parent=5 // pred_check_branch
      %350 = sbr.rel (%p347) target = $region64
    $region63: #{gscnn_aspp_forward.1} parent=5 // pred_region
      %s351 = ssub.s32 %s17, 1
      %p352 = scmp.lt.s32.totalorder %s22, 1
      %s353 = scalar_select %p352, %s22, 1
      %s354 = smul.addr %s353, 2
      %s355 = smul.addr %s354, 4
      %s356 = scalar_lea.vmem %s0, %s355
      %p357 = pneg %p43
      %p358 = pneg %p40
      %p359 = scmp.lt.s32.totalorder %s22, 1
      %s360 = scalar_select %p359, %s22, 1
      %s361 = smul.addr %s360, 2
      %s362 = scalar_lea.vmem %s1, %s361
      %p363 = pneg %p69
      %p364 = pneg %p66
      %p365 = pneg %p90
      %p366 = pneg %p87
      %p367 = pneg %p111
      %p368 = pneg %p108
      %p369 = pneg %p132
      %p370 = pneg %p129
      %p371 = pneg %p153
      %p372 = pneg %p150
      %p373 = pneg %p174
      %p374 = pneg %p171
      %p375 = pneg %p195
      %p376 = pneg %p192
      %p377 = pneg %p216
      %p378 = pneg %p213
      %p379 = pneg %p237
      %p380 = pneg %p234
      %p381 = pneg %p258
      %p382 = pneg %p255
      %p383 = pneg %p284
      %p384 = pneg %p281
      %p385 = scmp.lt.s32.totalorder %s22, 1
      %s386 = scalar_select %p385, %s22, 1
      %s387 = smul.addr %s386, 2
      %s388 = smul.addr %s387, 8
      %s389 = scalar_lea.vmem %s11, %s388
      %p390 = scmp.lt.s32.totalorder %s22, 1
      %s391 = scalar_select %p390, %s22, 1
      %s392 = smul.addr %s391, 2
      %s393 = smul.addr %s392, 4
      %s394 = scalar_lea.vmem %s0, %s393
      %p395 = scmp.lt.s32.totalorder %s22, 1
      %s396 = scalar_select %p395, %s22, 1
      %s397 = smul.addr %s396, 2
      %s398 = scalar_lea.vmem %s1, %s397
      %p399 = scmp.lt.s32.totalorder %s22, 1
      %s400 = scalar_select %p399, %s22, 1
      %s401 = smul.addr %s400, 2
      %s402 = smul.addr %s401, 8
      %s403 = scalar_lea.vmem %s11, %s402
      %404 = vst [vmem:[#allocation2] sm:$0xff] 0.0
      %405 = vst [vmem:[#allocation2 + $0x8] sm:$0xff] 0.0
      %406 = vst [vmem:[#allocation2 + $0x10] sm:$0xff] 0.0
      %407 = vst [vmem:[#allocation2 + $0x18] sm:$0xff] 0.0
      %v408 = vlaneseq
      %vm409 = vcmp.ge.s32.totalorder %v408, 0
      %vm410 = vcmp.lt.s32.totalorder %v408, 512
      %vm411 = vmand %vm409, %vm410
      %412 = vst.msk [vmem:[#allocation3] sm:$0xf] %vm411, 0.0
      %v413 = vld [vmem:[%s394] sm:$0xff]
      %414 = vst [vmem:[#allocation2 + $0xc] sm:$0xff] %v413
      %v415 = vld [vmem:[%s398] sm:$0x3]
      %vm416 = vcmp.lt.s32.totalorder %v408, 256
      %vm417 = vmand %vm409, %vm416
      %418 = vst.msk [vmem:[#allocation3 + $0x1] sm:$0x3] %vm417, %v415
      %v419 = vld [vmem:[#allocation2 + $0xc] sm:$0xff]
      %v421 = vcombine.high %v419, %v419
      %vm423 = vcmask 1043456
      %v424 = vsel %vm423, %v419, 0.0
      %v425 = vsel %vm423, %v421, 0.0
      %v426 = vadd.f32 %v424, %v425
      %427 = vadd.xlane.f32.xlu0 %v426
      %v428 = vpop.xlane.xlu0 %427
      %v429 = vmul.f32 %v428, 0.00390625
      %v430 = vld [vmem:[%s3] sm:$0xff]
      %v431 = vld [vmem:[%s4] sm:$0xff]
      %433 = vset.pattern.permute.xlu0 0
      %434 = vperm.xlu0 %433, %v431
      %v435 = vpop.permute.xlu0 %434
      %vm438 = vcmask 31744
      %v440 = vsel %vm438, %v430, 0
      %v442 = vsel %vm423, %v429, 0
      %444 = vmatprep.subr.mxu0 %v442
      %445 = vmatpush1.msra.mxu0 %v442
      %446 = vmatprep.subr.mxu0 0.0
      %447 = vmatpush1.msra.mxu0 0.0
      %448 = vmatprep.subr.mxu0 0.0
      %449 = vmatpush1.msra.mxu0 0.0
      %450 = vmatprep.subr.mxu0 0.0
      %451 = vmatpush1.msra.mxu0 0.0
      %452 = vmatprep.subr.mxu0 0.0
      %453 = vmatpush1.msra.mxu0 0.0
      %454 = vmatprep.subr.mxu0 0.0
      %455 = vmatpush1.msra.mxu0 0.0
      %456 = vmatprep.subr.mxu0 0.0
      %457 = vmatpush1.msra.mxu0 0.0
      %458 = vmatprep.subr.mxu0 0.0
      %459 = vmatpush1.msra.mxu0 0.0
      %460 = vmatprep.subr.mxu0 0.0
      %461 = vmatpush1.msra.mxu0 0.0
      %462 = vmatprep.subr.mxu0 0.0
      %463 = vmatpush1.msra.mxu0 0.0
      %464 = vmatprep.subr.mxu0 0.0
      %465 = vmatpush1.msra.mxu0 0.0
      %466 = vmatprep.subr.mxu0 0.0
      %467 = vmatpush1.msra.mxu0 0.0
      %468 = vmatprep.subr.mxu0 0.0
      %469 = vmatpush1.msra.mxu0 0.0
      %470 = vmatprep.subr.mxu0 0.0
      %471 = vmatpush1.msra.mxu0 0.0
      %472 = vmatprep.subr.mxu0 0.0
      %473 = vmatpush1.msra.mxu0 0.0
      %474 = vmatprep.subr.mxu0 0.0
      %475 = vmatpush1.msra.mxu0 0.0
      %476 = vmatprep.subr.mxu0 0.0
      %477 = vmatpush1.msra.mxu0 0.0
      %478 = vmatprep.subr.mxu0 0.0
      %479 = vmatpush1.msra.mxu0 0.0
      %480 = vmatprep.subr.mxu0 0.0
      %481 = vmatpush1.msra.mxu0 0.0
      %482 = vmatprep.subr.mxu0 0.0
      %483 = vmatpush1.msra.mxu0 0.0
      %484 = vmatprep.subr.mxu0 0.0
      %485 = vmatpush1.msra.mxu0 0.0
      %486 = vmatprep.subr.mxu0 0.0
      %487 = vmatpush1.msra.mxu0 0.0
      %488 = vmatprep.subr.mxu0 0.0
      %489 = vmatpush1.msra.mxu0 0.0
      %490 = vmatprep.subr.mxu0 0.0
      %491 = vmatpush1.msra.mxu0 0.0
      %492 = vmatprep.subr.mxu0 0.0
      %493 = vmatpush1.msra.mxu0 0.0
      %494 = vmatprep.subr.mxu0 0.0
      %495 = vmatpush1.msra.mxu0 0.0
      %496 = vmatprep.subr.mxu0 0.0
      %497 = vmatpush1.msra.mxu0 0.0
      %498 = vmatprep.subr.mxu0 0.0
      %499 = vmatpush1.msra.mxu0 0.0
      %500 = vmatprep.subr.mxu0 0.0
      %501 = vmatpush1.msra.mxu0 0.0
      %502 = vmatprep.subr.mxu0 0.0
      %503 = vmatpush1.msra.mxu0 0.0
      %504 = vmatprep.subr.mxu0 0.0
      %505 = vmatpush1.msra.mxu0 0.0
      %506 = vmatprep.subr.mxu0 0.0
      %507 = vmatpush1.msra.mxu0 0.0
      %508 = vmatprep.mubr.f32.mxu0 0.0
      %509 = vmatmul.mubr.f32.gmra.mrb[0].mxu0 %v440
      %v510 = vpop.f32.mrb[0].mxu0
      %v511 = vadd.f32 %v435, %v510
      %v512 = vpop.f32.mrb[0].mxu0
      %v513 = vadd.f32 %v435, %v512
      %514 = vdwg.mxu0
      %v515 = vmax.f32 %v511, 0.0
      %v516 = vmax.f32 %v513, 0.0
      %v517 = vld [vmem:[%s9] sm:$0xff]
      %v518 = vld [vmem:[%s6] sm:$0xff]
      %520 = vset.pattern.permute.xlu0 0
      %521 = vperm.xlu0 %520, %v518
      %v522 = vpop.permute.xlu0 %521
      %v524 = vadd.f32 %v522, 0.0
      %v525 = vld [vmem:[%s5] sm:$0xff]
      %v526 = vld [vmem:[#allocation3] sm:$0x7]
      %s527 = scalar_lea.vmem %s2, 6
      %v528 = vld [vmem:[%s527] sm:$0x3]
      %530 = vrot.lane.b32.xlu0 %v528, 111
      %v531 = vpop.permute.xlu0 %530
      %v532 = vrot.slane %v531, 7
      %vm533 = vcmask 908288
      %v534 = vsel %vm533, %v532, %v531
      %v536 = vmul.f32 %v526, %v534
      %538 = vset.pattern.permute.xlu0 0
      %539 = vperm.xlu0 %538, %v525
      %v540 = vpop.permute.xlu0 %539
      %v543 = vlaneseq
      %v544 = vshrl.u32 %v543, 7
      %v545 = vsub.s32 0, %v544
      %v546 = vrot.slane %v536, %v545
      %v547 = vlaneseq
      %v548 = vshrl.u32 %v547, 7
      %v549 = vsub.s32 1, %v548
      %v550 = vrot.slane %v536, %v549
      %v551 = vlaneseq
      %v552 = vshrl.u32 %v551, 7
      %v553 = vsub.s32 2, %v552
      %v554 = vrot.slane %v536, %v553
      %v558 = vmul.f32 %v540, %v546
      %v559 = vmul.f32 %v540, %v550
      %v560 = vmul.f32 %v540, %v554
      %v561 = vadd.f32 %v524, %v558
      %v562 = vadd.f32 %v524, %v559
      %v563 = vadd.f32 %v524, %v560
      %s564 = scalar_lea.vmem %s5, 8
      %v565 = vld [vmem:[%s564] sm:$0xff]
      %567 = vset.pattern.permute.xlu0 0
      %568 = vperm.xlu0 %567, %v565
      %v569 = vpop.permute.xlu0 %568
      %v572 = vlaneseq
      %v573 = vshrl.u32 %v572, 7
      %v574 = vsub.s32 0, %v573
      %v575 = vrot.slane %v526, %v574
      %v576 = vlaneseq
      %v577 = vshrl.u32 %v576, 7
      %v578 = vsub.s32 1, %v577
      %v579 = vrot.slane %v526, %v578
      %v580 = vlaneseq
      %v581 = vshrl.u32 %v580, 7
      %v582 = vsub.s32 2, %v581
      %v583 = vrot.slane %v526, %v582
      %v587 = vmul.f32 %v569, %v575
      %v588 = vmul.f32 %v569, %v579
      %v589 = vmul.f32 %v569, %v583
      %593 = vrot.lane.b32.xlu0 %v587, 127
      %v594 = vpop.permute.xlu0 %593
      %595 = vrot.lane.b32.xlu0 %v588, 127
      %v596 = vpop.permute.xlu0 %595
      %597 = vrot.lane.b32.xlu0 %v589, 127
      %v598 = vpop.permute.xlu0 %597
      %vm599 = vcmask 1039360
      %v600 = vsel %vm599, %v594, %v596
      %v601 = vsel %vm599, %v596, %v598
      %v605 = vadd.f32 %v561, %v600
      %v606 = vadd.f32 %v562, %v601
      %v607 = vadd.f32 %v563, %v598
      %s608 = scalar_lea.vmem %s5, 16
      %v609 = vld [vmem:[%s608] sm:$0xff]
      %s610 = scalar_lea.vmem %s2, 8
      %v611 = vld [vmem:[%s610] sm:$0x3]
      %613 = vrot.lane.b32.xlu0 %v611, 113
      %v614 = vpop.permute.xlu0 %613
      %v615 = vrot.slane %v614, 7
      %vm616 = vcmask 924672
      %v617 = vsel %vm616, %v615, %v614
      %v619 = vmul.f32 %v526, %v617
      %621 = vset.pattern.permute.xlu0 0
      %622 = vperm.xlu0 %621, %v609
      %v623 = vpop.permute.xlu0 %622
      %v626 = vlaneseq
      %v627 = vshrl.u32 %v626, 7
      %v628 = vsub.s32 0, %v627
      %v629 = vrot.slane %v619, %v628
      %v630 = vlaneseq
      %v631 = vshrl.u32 %v630, 7
      %v632 = vsub.s32 1, %v631
      %v633 = vrot.slane %v619, %v632
      %v634 = vlaneseq
      %v635 = vshrl.u32 %v634, 7
      %v636 = vsub.s32 2, %v635
      %v637 = vrot.slane %v619, %v636
      %v641 = vmul.f32 %v623, %v629
      %v642 = vmul.f32 %v623, %v633
      %v643 = vmul.f32 %v623, %v637
      %647 = vrot.lane.b32.xlu0 %v641, 126
      %v648 = vpop.permute.xlu0 %647
      %649 = vrot.lane.b32.xlu0 %v642, 126
      %v650 = vpop.permute.xlu0 %649
      %651 = vrot.lane.b32.xlu0 %v643, 126
      %v652 = vpop.permute.xlu0 %651
      %vm653 = vcmask 1031168
      %v654 = vsel %vm653, %v648, %v650
      %v655 = vsel %vm653, %v650, %v652
      %v659 = vadd.f32 %v605, %v654
      %v660 = vadd.f32 %v606, %v655
      %v661 = vadd.f32 %v607, %v652
      %s662 = scalar_lea.vmem %s5, 24
      %v663 = vld [vmem:[%s662] sm:$0xff]
      %664 = vrot.lane.b32.xlu0 %v528, 127
      %v665 = vpop.permute.xlu0 %664
      %v666 = vrot.slane %v665, 7
      %v667 = vsel %vm599, %v666, %v665
      %v669 = vmul.f32 %v526, %v667
      %671 = vset.pattern.permute.xlu0 0
      %672 = vperm.xlu0 %671, %v663
      %v673 = vpop.permute.xlu0 %672
      %v676 = vlaneseq
      %v677 = vshrl.u32 %v676, 7
      %v678 = vsub.s32 0, %v677
      %v679 = vrot.slane %v669, %v678
      %v680 = vlaneseq
      %v681 = vshrl.u32 %v680, 7
      %v682 = vsub.s32 1, %v681
      %v683 = vrot.slane %v669, %v682
      %v684 = vlaneseq
      %v685 = vshrl.u32 %v684, 7
      %v686 = vsub.s32 2, %v685
      %v687 = vrot.slane %v669, %v686
      %v691 = vmul.f32 %v673, %v679
      %v692 = vmul.f32 %v673, %v683
      %v693 = vmul.f32 %v673, %v687
      %697 = vrot.lane.b32.xlu0 %v691, 112
      %v698 = vpop.permute.xlu0 %697
      %699 = vrot.lane.b32.xlu0 %v692, 112
      %v700 = vpop.permute.xlu0 %699
      %701 = vrot.lane.b32.xlu0 %v693, 112
      %v702 = vpop.permute.xlu0 %701
      %vm703 = vcmask 916480
      %v704 = vsel %vm703, %v698, %v700
      %v705 = vsel %vm703, %v700, %v702
      %v709 = vadd.f32 %v659, %v704
      %v710 = vadd.f32 %v660, %v705
      %v711 = vadd.f32 %v661, %v702
      %s712 = scalar_lea.vmem %s5, 32
      %v713 = vld [vmem:[%s712] sm:$0xff]
      %v714 = vld [vmem:[#allocation3 + $0x1] sm:$0x3]
      %716 = vset.pattern.permute.xlu0 0
      %717 = vperm.xlu0 %716, %v713
      %v718 = vpop.permute.xlu0 %717
      %v721 = vlaneseq
      %v722 = vshrl.u32 %v721, 7
      %v723 = vsub.s32 0, %v722
      %v724 = vrot.slane %v714, %v723
      %v725 = vlaneseq
      %v726 = vshrl.u32 %v725, 7
      %v727 = vsub.s32 1, %v726
      %v728 = vrot.slane %v714, %v727
      %v731 = vmul.f32 %v718, %v724
      %v732 = vmul.f32 %v718, %v728
      %735 = vrot.lane.b32.xlu0 %v731, 111
      %v736 = vpop.permute.xlu0 %735
      %737 = vrot.lane.b32.xlu0 %v732, 111
      %v738 = vpop.permute.xlu0 %737
      %v739 = vsel %vm533, %v736, %v738
      %v743 = vadd.f32 %v709, %v736
      %v744 = vadd.f32 %v710, %v739
      %v745 = vadd.f32 %v711, %v738
      %s746 = scalar_lea.vmem %s5, 40
      %v747 = vld [vmem:[%s746] sm:$0xff]
      %v748 = vld [vmem:[#allocation3 + $0x1] sm:$0x7]
      %749 = vrot.lane.b32.xlu0 %v611, 1
      %v750 = vpop.permute.xlu0 %749
      %v751 = vrot.slane %v750, 7
      %vm752 = vcmask 7168
      %v753 = vsel %vm752, %v751, %v750
      %v755 = vmul.f32 %v748, %v753
      %757 = vset.pattern.permute.xlu0 0
      %758 = vperm.xlu0 %757, %v747
      %v759 = vpop.permute.xlu0 %758
      %v762 = vlaneseq
      %v763 = vshrl.u32 %v762, 7
      %v764 = vsub.s32 0, %v763
      %v765 = vrot.slane %v755, %v764
      %v766 = vlaneseq
      %v767 = vshrl.u32 %v766, 7
      %v768 = vsub.s32 1, %v767
      %v769 = vrot.slane %v755, %v768
      %v770 = vlaneseq
      %v771 = vshrl.u32 %v770, 7
      %v772 = vsub.s32 2, %v771
      %v773 = vrot.slane %v755, %v772
      %v777 = vmul.f32 %v759, %v765
      %v778 = vmul.f32 %v759, %v769
      %v779 = vmul.f32 %v759, %v773
      %783 = vrot.lane.b32.xlu0 %v777, 110
      %v784 = vpop.permute.xlu0 %783
      %785 = vrot.lane.b32.xlu0 %v778, 110
      %v786 = vpop.permute.xlu0 %785
      %787 = vrot.lane.b32.xlu0 %v779, 110
      %v788 = vpop.permute.xlu0 %787
      %vm789 = vcmask 900096
      %v790 = vsel %vm789, %v784, %v786
      %v791 = vsel %vm789, %v786, %v788
      %v795 = vadd.f32 %v743, %v784
      %v796 = vadd.f32 %v744, %v790
      %v797 = vadd.f32 %v745, %v791
      %s798 = scalar_lea.vmem %s5, 48
      %v799 = vld [vmem:[%s798] sm:$0xff]
      %800 = vrot.lane.b32.xlu0 %v528, 15
      %v801 = vpop.permute.xlu0 %800
      %v802 = vrot.slane %v801, 7
      %vm803 = vcmask 121856
      %v804 = vsel %vm803, %v802, %v801
      %v806 = vmul.f32 %v748, %v804
      %808 = vset.pattern.permute.xlu0 0
      %809 = vperm.xlu0 %808, %v799
      %v810 = vpop.permute.xlu0 %809
      %v813 = vlaneseq
      %v814 = vshrl.u32 %v813, 7
      %v815 = vsub.s32 0, %v814
      %v816 = vrot.slane %v806, %v815
      %v817 = vlaneseq
      %v818 = vshrl.u32 %v817, 7
      %v819 = vsub.s32 1, %v818
      %v820 = vrot.slane %v806, %v819
      %v821 = vlaneseq
      %v822 = vshrl.u32 %v821, 7
      %v823 = vsub.s32 2, %v822
      %v824 = vrot.slane %v806, %v823
      %v828 = vmul.f32 %v810, %v816
      %v829 = vmul.f32 %v810, %v820
      %v830 = vmul.f32 %v810, %v824
      %834 = vrot.lane.b32.xlu0 %v828, 96
      %v835 = vpop.permute.xlu0 %834
      %836 = vrot.lane.b32.xlu0 %v829, 96
      %v837 = vpop.permute.xlu0 %836
      %838 = vrot.lane.b32.xlu0 %v830, 96
      %v839 = vpop.permute.xlu0 %838
      %vm840 = vcmask 785408
      %v841 = vsel %vm840, %v835, %v837
      %v842 = vsel %vm840, %v837, %v839
      %v846 = vadd.f32 %v795, %v835
      %v847 = vadd.f32 %v796, %v841
      %v848 = vadd.f32 %v797, %v842
      %s849 = scalar_lea.vmem %s5, 56
      %v850 = vld [vmem:[%s849] sm:$0xff]
      %852 = vset.pattern.permute.xlu0 0
      %853 = vperm.xlu0 %852, %v850
      %v854 = vpop.permute.xlu0 %853
      %v857 = vlaneseq
      %v858 = vshrl.u32 %v857, 7
      %v859 = vsub.s32 0, %v858
      %v860 = vrot.slane %v748, %v859
      %v861 = vlaneseq
      %v862 = vshrl.u32 %v861, 7
      %v863 = vsub.s32 1, %v862
      %v864 = vrot.slane %v748, %v863
      %v865 = vlaneseq
      %v866 = vshrl.u32 %v865, 7
      %v867 = vsub.s32 2, %v866
      %v868 = vrot.slane %v748, %v867
      %v872 = vmul.f32 %v854, %v860
      %v873 = vmul.f32 %v854, %v864
      %v874 = vmul.f32 %v854, %v868
      %878 = vrot.lane.b32.xlu0 %v872, 95
      %v879 = vpop.permute.xlu0 %878
      %880 = vrot.lane.b32.xlu0 %v873, 95
      %v881 = vpop.permute.xlu0 %880
      %882 = vrot.lane.b32.xlu0 %v874, 95
      %v883 = vpop.permute.xlu0 %882
      %vm884 = vcmask 777216
      %v885 = vsel %vm884, %v879, %v881
      %v886 = vsel %vm884, %v881, %v883
      %v890 = vadd.f32 %v846, %v879
      %v891 = vadd.f32 %v847, %v885
      %v892 = vadd.f32 %v848, %v886
      %s893 = scalar_lea.vmem %s5, 64
      %v894 = vld [vmem:[%s893] sm:$0xff]
      %895 = vrot.lane.b32.xlu0 %v611, 17
      %v896 = vpop.permute.xlu0 %895
      %v897 = vrot.slane %v896, 7
      %vm898 = vcmask 138240
      %v899 = vsel %vm898, %v897, %v896
      %v901 = vmul.f32 %v748, %v899
      %903 = vset.pattern.permute.xlu0 0
      %904 = vperm.xlu0 %903, %v894
      %v905 = vpop.permute.xlu0 %904
      %v908 = vlaneseq
      %v909 = vshrl.u32 %v908, 7
      %v910 = vsub.s32 0, %v909
      %v911 = vrot.slane %v901, %v910
      %v912 = vlaneseq
      %v913 = vshrl.u32 %v912, 7
      %v914 = vsub.s32 1, %v913
      %v915 = vrot.slane %v901, %v914
      %v916 = vlaneseq
      %v917 = vshrl.u32 %v916, 7
      %v918 = vsub.s32 2, %v917
      %v919 = vrot.slane %v901, %v918
      %v923 = vmul.f32 %v905, %v911
      %v924 = vmul.f32 %v905, %v915
      %v925 = vmul.f32 %v905, %v919
      %929 = vrot.lane.b32.xlu0 %v923, 94
      %v930 = vpop.permute.xlu0 %929
      %931 = vrot.lane.b32.xlu0 %v924, 94
      %v932 = vpop.permute.xlu0 %931
      %933 = vrot.lane.b32.xlu0 %v925, 94
      %v934 = vpop.permute.xlu0 %933
      %vm935 = vcmask 769024
      %v936 = vsel %vm935, %v930, %v932
      %v937 = vsel %vm935, %v932, %v934
      %v941 = vadd.f32 %v890, %v930
      %v942 = vadd.f32 %v891, %v936
      %v943 = vadd.f32 %v892, %v937
      %s944 = scalar_lea.vmem %s9, 8
      %v945 = vld [vmem:[%s944] sm:$0xff]
      %v946 = vmax.f32 %v941, 0.0
      %v947 = vmax.f32 %v942, 0.0
      %v948 = vmax.f32 %v943, 0.0
      %952 = vrot.lane.b32.xlu0 %v946, 17
      %v953 = vpop.permute.xlu0 %952
      %954 = vrot.lane.b32.xlu0 %v947, 17
      %v955 = vpop.permute.xlu0 %954
      %956 = vrot.lane.b32.xlu0 %v948, 17
      %v957 = vpop.permute.xlu0 %956
      %v958 = vsel %vm898, %v953, %v955
      %v959 = vsel %vm898, %v955, %v957
      %vm962 = vcmask 64512
      %v964 = vsel %vm962, %v945, 0
      %966 = vmatprep.subr.mxu0 %v959
      %967 = vmatpush1.msra.mxu0 %v958
      %968 = vmatprep.subr.mxu0 0.0
      %969 = vmatpush1.msra.mxu0 0.0
      %970 = vmatprep.subr.mxu0 0.0
      %971 = vmatpush1.msra.mxu0 0.0
      %972 = vmatprep.subr.mxu0 0.0
      %973 = vmatpush1.msra.mxu0 0.0
      %974 = vmatprep.subr.mxu0 0.0
      %975 = vmatpush1.msra.mxu0 0.0
      %976 = vmatprep.subr.mxu0 0.0
      %977 = vmatpush1.msra.mxu0 0.0
      %978 = vmatprep.subr.mxu0 0.0
      %979 = vmatpush1.msra.mxu0 0.0
      %980 = vmatprep.subr.mxu0 0.0
      %981 = vmatpush1.msra.mxu0 0.0
      %982 = vmatprep.subr.mxu0 0.0
      %983 = vmatpush1.msra.mxu0 0.0
      %984 = vmatprep.subr.mxu0 0.0
      %985 = vmatpush1.msra.mxu0 0.0
      %986 = vmatprep.subr.mxu0 0.0
      %987 = vmatpush1.msra.mxu0 0.0
      %988 = vmatprep.subr.mxu0 0.0
      %989 = vmatpush1.msra.mxu0 0.0
      %990 = vmatprep.subr.mxu0 0.0
      %991 = vmatpush1.msra.mxu0 0.0
      %992 = vmatprep.subr.mxu0 0.0
      %993 = vmatpush1.msra.mxu0 0.0
      %994 = vmatprep.subr.mxu0 0.0
      %995 = vmatpush1.msra.mxu0 0.0
      %996 = vmatprep.subr.mxu0 0.0
      %997 = vmatpush1.msra.mxu0 0.0
      %998 = vmatprep.subr.mxu0 0.0
      %999 = vmatpush1.msra.mxu0 0.0
      %1000 = vmatprep.subr.mxu0 0.0
      %1001 = vmatpush1.msra.mxu0 0.0
      %1002 = vmatprep.subr.mxu0 0.0
      %1003 = vmatpush1.msra.mxu0 0.0
      %1004 = vmatprep.subr.mxu0 0.0
      %1005 = vmatpush1.msra.mxu0 0.0
      %1006 = vmatprep.subr.mxu0 0.0
      %1007 = vmatpush1.msra.mxu0 0.0
      %1008 = vmatprep.subr.mxu0 0.0
      %1009 = vmatpush1.msra.mxu0 0.0
      %1010 = vmatprep.subr.mxu0 0.0
      %1011 = vmatpush1.msra.mxu0 0.0
      %1012 = vmatprep.subr.mxu0 0.0
      %1013 = vmatpush1.msra.mxu0 0.0
      %1014 = vmatprep.subr.mxu0 0.0
      %1015 = vmatpush1.msra.mxu0 0.0
      %1016 = vmatprep.subr.mxu0 0.0
      %1017 = vmatpush1.msra.mxu0 0.0
      %1018 = vmatprep.subr.mxu0 0.0
      %1019 = vmatpush1.msra.mxu0 0.0
      %1020 = vmatprep.subr.mxu0 0.0
      %1021 = vmatpush1.msra.mxu0 0.0
      %1022 = vmatprep.subr.mxu0 0.0
      %1023 = vmatpush1.msra.mxu0 0.0
      %1024 = vmatprep.subr.mxu0 0.0
      %1025 = vmatpush1.msra.mxu0 0.0
      %1026 = vmatprep.subr.mxu0 0.0
      %1027 = vmatpush1.msra.mxu0 0.0
      %1028 = vmatprep.subr.mxu0 0.0
      %1029 = vmatpush1.msra.mxu0 0.0
      %1030 = vmatprep.mubr.f32.mxu0 0.0
      %1031 = vmatmul.mubr.f32.gmra.mrb[0].mxu0 %v964
      %v1032 = vpop.f32.mrb[0].mxu0
      %v1033 = vadd.f32 0.0, %v1032
      %v1034 = vpop.f32.mrb[0].mxu0
      %v1035 = vadd.f32 0.0, %v1034
      %1036 = vdwg.mxu0
      %v1038 = vsel %vm962, %v517, 0
      %1040 = vmatprep.subr.mxu0 %v516
      %1041 = vmatpush1.msra.mxu0 %v515
      %1042 = vmatprep.subr.mxu0 0.0
      %1043 = vmatpush1.msra.mxu0 0.0
      %1044 = vmatprep.subr.mxu0 0.0
      %1045 = vmatpush1.msra.mxu0 0.0
      %1046 = vmatprep.subr.mxu0 0.0
      %1047 = vmatpush1.msra.mxu0 0.0
      %1048 = vmatprep.subr.mxu0 0.0
      %1049 = vmatpush1.msra.mxu0 0.0
      %1050 = vmatprep.subr.mxu0 0.0
      %1051 = vmatpush1.msra.mxu0 0.0
      %1052 = vmatprep.subr.mxu0 0.0
      %1053 = vmatpush1.msra.mxu0 0.0
      %1054 = vmatprep.subr.mxu0 0.0
      %1055 = vmatpush1.msra.mxu0 0.0
      %1056 = vmatprep.subr.mxu0 0.0
      %1057 = vmatpush1.msra.mxu0 0.0
      %1058 = vmatprep.subr.mxu0 0.0
      %1059 = vmatpush1.msra.mxu0 0.0
      %1060 = vmatprep.subr.mxu0 0.0
      %1061 = vmatpush1.msra.mxu0 0.0
      %1062 = vmatprep.subr.mxu0 0.0
      %1063 = vmatpush1.msra.mxu0 0.0
      %1064 = vmatprep.subr.mxu0 0.0
      %1065 = vmatpush1.msra.mxu0 0.0
      %1066 = vmatprep.subr.mxu0 0.0
      %1067 = vmatpush1.msra.mxu0 0.0
      %1068 = vmatprep.subr.mxu0 0.0
      %1069 = vmatpush1.msra.mxu0 0.0
      %1070 = vmatprep.subr.mxu0 0.0
      %1071 = vmatpush1.msra.mxu0 0.0
      %1072 = vmatprep.subr.mxu0 0.0
      %1073 = vmatpush1.msra.mxu0 0.0
      %1074 = vmatprep.subr.mxu0 0.0
      %1075 = vmatpush1.msra.mxu0 0.0
      %1076 = vmatprep.subr.mxu0 0.0
      %1077 = vmatpush1.msra.mxu0 0.0
      %1078 = vmatprep.subr.mxu0 0.0
      %1079 = vmatpush1.msra.mxu0 0.0
      %1080 = vmatprep.subr.mxu0 0.0
      %1081 = vmatpush1.msra.mxu0 0.0
      %1082 = vmatprep.subr.mxu0 0.0
      %1083 = vmatpush1.msra.mxu0 0.0
      %1084 = vmatprep.subr.mxu0 0.0
      %1085 = vmatpush1.msra.mxu0 0.0
      %1086 = vmatprep.subr.mxu0 0.0
      %1087 = vmatpush1.msra.mxu0 0.0
      %1088 = vmatprep.subr.mxu0 0.0
      %1089 = vmatpush1.msra.mxu0 0.0
      %1090 = vmatprep.subr.mxu0 0.0
      %1091 = vmatpush1.msra.mxu0 0.0
      %1092 = vmatprep.subr.mxu0 0.0
      %1093 = vmatpush1.msra.mxu0 0.0
      %1094 = vmatprep.subr.mxu0 0.0
      %1095 = vmatpush1.msra.mxu0 0.0
      %1096 = vmatprep.subr.mxu0 0.0
      %1097 = vmatpush1.msra.mxu0 0.0
      %1098 = vmatprep.subr.mxu0 0.0
      %1099 = vmatpush1.msra.mxu0 0.0
      %1100 = vmatprep.subr.mxu0 0.0
      %1101 = vmatpush1.msra.mxu0 0.0
      %1102 = vmatprep.subr.mxu0 0.0
      %1103 = vmatpush1.msra.mxu0 0.0
      %1104 = vmatprep.mubr.f32.mxu0 0.0
      %1105 = vmatmul.mubr.f32.gmra.mrb[0].mxu0 %v1038
      %v1106 = vpop.f32.mrb[0].mxu0
      %v1107 = vadd.f32 %v1033, %v1106
      %v1108 = vpop.f32.mrb[0].mxu0
      %v1109 = vadd.f32 %v1035, %v1108
      %1110 = vdwg.mxu0
      %v1111 = vld [vmem:[%s8] sm:$0xff]
      %1113 = vset.pattern.permute.xlu0 0
      %1114 = vperm.xlu0 %1113, %v1111
      %v1115 = vpop.permute.xlu0 %1114
      %v1117 = vadd.f32 %v1115, 0.0
      %v1118 = vld [vmem:[%s7] sm:$0xff]
      %v1120 = vsel %vm438, %v1118, 0
      %v1122 = vsel %vm423, %v419, 0
      %v1124 = vsel %vm423, %v421, 0
      %1126 = vmatprep.subr.mxu0 %v1124
      %1127 = vmatpush1.msra.mxu0 %v1122
      %1128 = vmatprep.subr.mxu0 0.0
      %1129 = vmatpush1.msra.mxu0 0.0
      %1130 = vmatprep.subr.mxu0 0.0
      %1131 = vmatpush1.msra.mxu0 0.0
      %1132 = vmatprep.subr.mxu0 0.0
      %1133 = vmatpush1.msra.mxu0 0.0
      %1134 = vmatprep.subr.mxu0 0.0
      %1135 = vmatpush1.msra.mxu0 0.0
      %1136 = vmatprep.subr.mxu0 0.0
      %1137 = vmatpush1.msra.mxu0 0.0
      %1138 = vmatprep.subr.mxu0 0.0
      %1139 = vmatpush1.msra.mxu0 0.0
      %1140 = vmatprep.subr.mxu0 0.0
      %1141 = vmatpush1.msra.mxu0 0.0
      %1142 = vmatprep.subr.mxu0 0.0
      %1143 = vmatpush1.msra.mxu0 0.0
      %1144 = vmatprep.subr.mxu0 0.0
      %1145 = vmatpush1.msra.mxu0 0.0
      %1146 = vmatprep.subr.mxu0 0.0
      %1147 = vmatpush1.msra.mxu0 0.0
      %1148 = vmatprep.subr.mxu0 0.0
      %1149 = vmatpush1.msra.mxu0 0.0
      %1150 = vmatprep.subr.mxu0 0.0
      %1151 = vmatpush1.msra.mxu0 0.0
      %1152 = vmatprep.subr.mxu0 0.0
      %1153 = vmatpush1.msra.mxu0 0.0
      %1154 = vmatprep.subr.mxu0 0.0
      %1155 = vmatpush1.msra.mxu0 0.0
      %1156 = vmatprep.subr.mxu0 0.0
      %1157 = vmatpush1.msra.mxu0 0.0
      %1158 = vmatprep.subr.mxu0 0.0
      %1159 = vmatpush1.msra.mxu0 0.0
      %1160 = vmatprep.subr.mxu0 0.0
      %1161 = vmatpush1.msra.mxu0 0.0
      %1162 = vmatprep.subr.mxu0 0.0
      %1163 = vmatpush1.msra.mxu0 0.0
      %1164 = vmatprep.subr.mxu0 0.0
      %1165 = vmatpush1.msra.mxu0 0.0
      %1166 = vmatprep.subr.mxu0 0.0
      %1167 = vmatpush1.msra.mxu0 0.0
      %1168 = vmatprep.subr.mxu0 0.0
      %1169 = vmatpush1.msra.mxu0 0.0
      %1170 = vmatprep.subr.mxu0 0.0
      %1171 = vmatpush1.msra.mxu0 0.0
      %1172 = vmatprep.subr.mxu0 0.0
      %1173 = vmatpush1.msra.mxu0 0.0
      %1174 = vmatprep.subr.mxu0 0.0
      %1175 = vmatpush1.msra.mxu0 0.0
      %1176 = vmatprep.subr.mxu0 0.0
      %1177 = vmatpush1.msra.mxu0 0.0
      %1178 = vmatprep.subr.mxu0 0.0
      %1179 = vmatpush1.msra.mxu0 0.0
      %1180 = vmatprep.subr.mxu0 0.0
      %1181 = vmatpush1.msra.mxu0 0.0
      %1182 = vmatprep.subr.mxu0 0.0
      %1183 = vmatpush1.msra.mxu0 0.0
      %1184 = vmatprep.subr.mxu0 0.0
      %1185 = vmatpush1.msra.mxu0 0.0
      %1186 = vmatprep.subr.mxu0 0.0
      %1187 = vmatpush1.msra.mxu0 0.0
      %1188 = vmatprep.subr.mxu0 0.0
      %1189 = vmatpush1.msra.mxu0 0.0
      %1190 = vmatprep.mubr.f32.mxu0 0.0
      %1191 = vmatmul.mubr.f32.gmra.mrb[0].mxu0 %v1120
      %v1192 = vpop.f32.mrb[0].mxu0
      %v1193 = vadd.f32 0.0, %v1192
      %v1194 = vpop.f32.mrb[0].mxu0
      %v1195 = vadd.f32 0.0, %v1194
      %1196 = vdwg.mxu0
      %v1197 = vadd.f32 %v1117, %v1193
      %v1198 = vadd.f32 %v1117, %v1195
      %s1199 = scalar_lea.vmem %s9, 16
      %v1200 = vld [vmem:[%s1199] sm:$0xff]
      %v1201 = vmax.f32 %v1197, 0.0
      %v1202 = vmax.f32 %v1198, 0.0
      %v1204 = vsel %vm962, %v1200, 0
      %1206 = vmatprep.subr.mxu0 %v1202
      %1207 = vmatpush1.msra.mxu0 %v1201
      %1208 = vmatprep.subr.mxu0 0.0
      %1209 = vmatpush1.msra.mxu0 0.0
      %1210 = vmatprep.subr.mxu0 0.0
      %1211 = vmatpush1.msra.mxu0 0.0
      %1212 = vmatprep.subr.mxu0 0.0
      %1213 = vmatpush1.msra.mxu0 0.0
      %1214 = vmatprep.subr.mxu0 0.0
      %1215 = vmatpush1.msra.mxu0 0.0
      %1216 = vmatprep.subr.mxu0 0.0
      %1217 = vmatpush1.msra.mxu0 0.0
      %1218 = vmatprep.subr.mxu0 0.0
      %1219 = vmatpush1.msra.mxu0 0.0
      %1220 = vmatprep.subr.mxu0 0.0
      %1221 = vmatpush1.msra.mxu0 0.0
      %1222 = vmatprep.subr.mxu0 0.0
      %1223 = vmatpush1.msra.mxu0 0.0
      %1224 = vmatprep.subr.mxu0 0.0
      %1225 = vmatpush1.msra.mxu0 0.0
      %1226 = vmatprep.subr.mxu0 0.0
      %1227 = vmatpush1.msra.mxu0 0.0
      %1228 = vmatprep.subr.mxu0 0.0
      %1229 = vmatpush1.msra.mxu0 0.0
      %1230 = vmatprep.subr.mxu0 0.0
      %1231 = vmatpush1.msra.mxu0 0.0
      %1232 = vmatprep.subr.mxu0 0.0
      %1233 = vmatpush1.msra.mxu0 0.0
      %1234 = vmatprep.subr.mxu0 0.0
      %1235 = vmatpush1.msra.mxu0 0.0
      %1236 = vmatprep.subr.mxu0 0.0
      %1237 = vmatpush1.msra.mxu0 0.0
      %1238 = vmatprep.subr.mxu0 0.0
      %1239 = vmatpush1.msra.mxu0 0.0
      %1240 = vmatprep.subr.mxu0 0.0
      %1241 = vmatpush1.msra.mxu0 0.0
      %1242 = vmatprep.subr.mxu0 0.0
      %1243 = vmatpush1.msra.mxu0 0.0
      %1244 = vmatprep.subr.mxu0 0.0
      %1245 = vmatpush1.msra.mxu0 0.0
      %1246 = vmatprep.subr.mxu0 0.0
      %1247 = vmatpush1.msra.mxu0 0.0
      %1248 = vmatprep.subr.mxu0 0.0
      %1249 = vmatpush1.msra.mxu0 0.0
      %1250 = vmatprep.subr.mxu0 0.0
      %1251 = vmatpush1.msra.mxu0 0.0
      %1252 = vmatprep.subr.mxu0 0.0
      %1253 = vmatpush1.msra.mxu0 0.0
      %1254 = vmatprep.subr.mxu0 0.0
      %1255 = vmatpush1.msra.mxu0 0.0
      %1256 = vmatprep.subr.mxu0 0.0
      %1257 = vmatpush1.msra.mxu0 0.0
      %1258 = vmatprep.subr.mxu0 0.0
      %1259 = vmatpush1.msra.mxu0 0.0
      %1260 = vmatprep.subr.mxu0 0.0
      %1261 = vmatpush1.msra.mxu0 0.0
      %1262 = vmatprep.subr.mxu0 0.0
      %1263 = vmatpush1.msra.mxu0 0.0
      %1264 = vmatprep.subr.mxu0 0.0
      %1265 = vmatpush1.msra.mxu0 0.0
      %1266 = vmatprep.subr.mxu0 0.0
      %1267 = vmatpush1.msra.mxu0 0.0
      %1268 = vmatprep.subr.mxu0 0.0
      %1269 = vmatpush1.msra.mxu0 0.0
      %1270 = vmatprep.mubr.f32.mxu0 0.0
      %1271 = vmatmul.mubr.f32.gmra.mrb[0].mxu0 %v1204
      %v1272 = vpop.f32.mrb[0].mxu0
      %v1273 = vadd.f32 0.0, %v1272
      %v1274 = vpop.f32.mrb[0].mxu0
      %v1275 = vadd.f32 0.0, %v1274
      %1276 = vdwg.mxu0
      %v1277 = vadd.f32 %v1107, %v1273
      %v1278 = vadd.f32 %v1109, %v1275
      %s1279 = scalar_lea.vmem %s8, 8
      %v1280 = vld [vmem:[%s1279] sm:$0xff]
      %1282 = vset.pattern.permute.xlu0 0
      %1283 = vperm.xlu0 %1282, %v1280
      %v1284 = vpop.permute.xlu0 %1283
      %v1286 = vadd.f32 %v1284, 0.0
      %s1287 = scalar_lea.vmem %s7, 8
      %v1288 = vld [vmem:[%s1287] sm:$0xff]
      %v1289 = vld [vmem:[#allocation2 + $0x8] sm:$0xff]
      %v1290 = vld [vmem:[#allocation2 + $0x10] sm:$0xf]
      %s1291 = scalar_lea.vmem %s2, 4
      %v1292 = vld [vmem:[%s1291] sm:$0x3]
      %v1294 = vlaneseq
      %v1295 = vshrl.u32 %v1294, 7
      %v1296 = vsub.s32 0, %v1295
      %v1297 = vrot.slane %v1292, %v1296
      %v1298 = vlaneseq
      %v1299 = vshrl.u32 %v1298, 7
      %v1300 = vsub.s32 1, %v1299
      %v1301 = vrot.slane %v1292, %v1300
      %v1302 = vcombine.low %v1297, %v1301
      %1303 = vrot.lane.b32.xlu0 %v1302, 26
      %v1304 = vpop.permute.xlu0 %1303
      %v1305 = vrot.slane %v1304, 4
      %vm1306 = vcmask 211968
      %v1307 = vsel %vm1306, %v1305, %v1304
      %v1310 = vmul.f32 %v1289, %v1307
      %v1311 = vmul.f32 %v1290, %v1305
      %v1314 = vcombine.high %v1310, %v1310
      %1315 = vrot.lane.b32.xlu0 %v1310, 102
      %v1316 = vpop.permute.xlu0 %1315
      %1317 = vrot.lane.b32.xlu0 %v1314, 102
      %v1318 = vpop.permute.xlu0 %1317
      %1319 = vrot.lane.b32.xlu0 %v1311, 102
      %v1320 = vpop.permute.xlu0 %1319
      %vm1321 = vcmask 834560
      %v1322 = vsel %vm1321, %v1316, %v1318
      %v1323 = vsel %vm1321, %v1318, %v1320
      %v1325 = vsel %vm438, %v1288, 0
      %v1327 = vsel %vm423, %v1322, 0
      %v1329 = vsel %vm423, %v1323, 0
      %1331 = vmatprep.subr.mxu0 %v1329
      %1332 = vmatpush1.msra.mxu0 %v1327
      %1333 = vmatprep.subr.mxu0 0.0
      %1334 = vmatpush1.msra.mxu0 0.0
      %1335 = vmatprep.subr.mxu0 0.0
      %1336 = vmatpush1.msra.mxu0 0.0
      %1337 = vmatprep.subr.mxu0 0.0
      %1338 = vmatpush1.msra.mxu0 0.0
      %1339 = vmatprep.subr.mxu0 0.0
      %1340 = vmatpush1.msra.mxu0 0.0
      %1341 = vmatprep.subr.mxu0 0.0
      %1342 = vmatpush1.msra.mxu0 0.0
      %1343 = vmatprep.subr.mxu0 0.0
      %1344 = vmatpush1.msra.mxu0 0.0
      %1345 = vmatprep.subr.mxu0 0.0
      %1346 = vmatpush1.msra.mxu0 0.0
      %1347 = vmatprep.subr.mxu0 0.0
      %1348 = vmatpush1.msra.mxu0 0.0
      %1349 = vmatprep.subr.mxu0 0.0
      %1350 = vmatpush1.msra.mxu0 0.0
      %1351 = vmatprep.subr.mxu0 0.0
      %1352 = vmatpush1.msra.mxu0 0.0
      %1353 = vmatprep.subr.mxu0 0.0
      %1354 = vmatpush1.msra.mxu0 0.0
      %1355 = vmatprep.subr.mxu0 0.0
      %1356 = vmatpush1.msra.mxu0 0.0
      %1357 = vmatprep.subr.mxu0 0.0
      %1358 = vmatpush1.msra.mxu0 0.0
      %1359 = vmatprep.subr.mxu0 0.0
      %1360 = vmatpush1.msra.mxu0 0.0
      %1361 = vmatprep.subr.mxu0 0.0
      %1362 = vmatpush1.msra.mxu0 0.0
      %1363 = vmatprep.subr.mxu0 0.0
      %1364 = vmatpush1.msra.mxu0 0.0
      %1365 = vmatprep.subr.mxu0 0.0
      %1366 = vmatpush1.msra.mxu0 0.0
      %1367 = vmatprep.subr.mxu0 0.0
      %1368 = vmatpush1.msra.mxu0 0.0
      %1369 = vmatprep.subr.mxu0 0.0
      %1370 = vmatpush1.msra.mxu0 0.0
      %1371 = vmatprep.subr.mxu0 0.0
      %1372 = vmatpush1.msra.mxu0 0.0
      %1373 = vmatprep.subr.mxu0 0.0
      %1374 = vmatpush1.msra.mxu0 0.0
      %1375 = vmatprep.subr.mxu0 0.0
      %1376 = vmatpush1.msra.mxu0 0.0
      %1377 = vmatprep.subr.mxu0 0.0
      %1378 = vmatpush1.msra.mxu0 0.0
      %1379 = vmatprep.subr.mxu0 0.0
      %1380 = vmatpush1.msra.mxu0 0.0
      %1381 = vmatprep.subr.mxu0 0.0
      %1382 = vmatpush1.msra.mxu0 0.0
      %1383 = vmatprep.subr.mxu0 0.0
      %1384 = vmatpush1.msra.mxu0 0.0
      %1385 = vmatprep.subr.mxu0 0.0
      %1386 = vmatpush1.msra.mxu0 0.0
      %1387 = vmatprep.subr.mxu0 0.0
      %1388 = vmatpush1.msra.mxu0 0.0
      %1389 = vmatprep.subr.mxu0 0.0
      %1390 = vmatpush1.msra.mxu0 0.0
      %1391 = vmatprep.subr.mxu0 0.0
      %1392 = vmatpush1.msra.mxu0 0.0
      %1393 = vmatprep.subr.mxu0 0.0
      %1394 = vmatpush1.msra.mxu0 0.0
      %1395 = vmatprep.mubr.f32.mxu0 0.0
      %1396 = vmatmul.mubr.f32.gmra.mrb[0].mxu0 %v1325
      %v1397 = vpop.f32.mrb[0].mxu0
      %v1398 = vadd.f32 0.0, %v1397
      %v1399 = vpop.f32.mrb[0].mxu0
      %v1400 = vadd.f32 0.0, %v1399
      %1401 = vdwg.mxu0
      %v1402 = vadd.f32 %v1286, %v1398
      %v1403 = vadd.f32 %v1286, %v1400
      %s1404 = scalar_lea.vmem %s7, 16
      %v1405 = vld [vmem:[%s1404] sm:$0xff]
      %v1406 = vld [vmem:[#allocation2 + $0x8] sm:$0xff]
      %v1407 = vld [vmem:[#allocation2 + $0x10] sm:$0xf]
      %v1410 = vcombine.high %v1406, %v1406
      %1411 = vrot.lane.b32.xlu0 %v1406, 96
      %v1412 = vpop.permute.xlu0 %1411
      %1413 = vrot.lane.b32.xlu0 %v1410, 96
      %v1414 = vpop.permute.xlu0 %1413
      %1415 = vrot.lane.b32.xlu0 %v1407, 96
      %v1416 = vpop.permute.xlu0 %1415
      %v1417 = vsel %vm840, %v1412, %v1414
      %v1418 = vsel %vm840, %v1414, %v1416
      %v1420 = vsel %vm438, %v1405, 0
      %v1422 = vsel %vm423, %v1417, 0
      %v1424 = vsel %vm423, %v1418, 0
      %1426 = vmatprep.subr.mxu0 %v1424
      %1427 = vmatpush1.msra.mxu0 %v1422
      %1428 = vmatprep.subr.mxu0 0.0
      %1429 = vmatpush1.msra.mxu0 0.0
      %1430 = vmatprep.subr.mxu0 0.0
      %1431 = vmatpush1.msra.mxu0 0.0
      %1432 = vmatprep.subr.mxu0 0.0
      %1433 = vmatpush1.msra.mxu0 0.0
      %1434 = vmatprep.subr.mxu0 0.0
      %1435 = vmatpush1.msra.mxu0 0.0
      %1436 = vmatprep.subr.mxu0 0.0
      %1437 = vmatpush1.msra.mxu0 0.0
      %1438 = vmatprep.subr.mxu0 0.0
      %1439 = vmatpush1.msra.mxu0 0.0
      %1440 = vmatprep.subr.mxu0 0.0
      %1441 = vmatpush1.msra.mxu0 0.0
      %1442 = vmatprep.subr.mxu0 0.0
      %1443 = vmatpush1.msra.mxu0 0.0
      %1444 = vmatprep.subr.mxu0 0.0
      %1445 = vmatpush1.msra.mxu0 0.0
      %1446 = vmatprep.subr.mxu0 0.0
      %1447 = vmatpush1.msra.mxu0 0.0
      %1448 = vmatprep.subr.mxu0 0.0
      %1449 = vmatpush1.msra.mxu0 0.0
      %1450 = vmatprep.subr.mxu0 0.0
      %1451 = vmatpush1.msra.mxu0 0.0
      %1452 = vmatprep.subr.mxu0 0.0
      %1453 = vmatpush1.msra.mxu0 0.0
      %1454 = vmatprep.subr.mxu0 0.0
      %1455 = vmatpush1.msra.mxu0 0.0
      %1456 = vmatprep.subr.mxu0 0.0
      %1457 = vmatpush1.msra.mxu0 0.0
      %1458 = vmatprep.subr.mxu0 0.0
      %1459 = vmatpush1.msra.mxu0 0.0
      %1460 = vmatprep.subr.mxu0 0.0
      %1461 = vmatpush1.msra.mxu0 0.0
      %1462 = vmatprep.subr.mxu0 0.0
      %1463 = vmatpush1.msra.mxu0 0.0
      %1464 = vmatprep.subr.mxu0 0.0
      %1465 = vmatpush1.msra.mxu0 0.0
      %1466 = vmatprep.subr.mxu0 0.0
      %1467 = vmatpush1.msra.mxu0 0.0
      %1468 = vmatprep.subr.mxu0 0.0
      %1469 = vmatpush1.msra.mxu0 0.0
      %1470 = vmatprep.subr.mxu0 0.0
      %1471 = vmatpush1.msra.mxu0 0.0
      %1472 = vmatprep.subr.mxu0 0.0
      %1473 = vmatpush1.msra.mxu0 0.0
      %1474 = vmatprep.subr.mxu0 0.0
      %1475 = vmatpush1.msra.mxu0 0.0
      %1476 = vmatprep.subr.mxu0 0.0
      %1477 = vmatpush1.msra.mxu0 0.0
      %1478 = vmatprep.subr.mxu0 0.0
      %1479 = vmatpush1.msra.mxu0 0.0
      %1480 = vmatprep.subr.mxu0 0.0
      %1481 = vmatpush1.msra.mxu0 0.0
      %1482 = vmatprep.subr.mxu0 0.0
      %1483 = vmatpush1.msra.mxu0 0.0
      %1484 = vmatprep.subr.mxu0 0.0
      %1485 = vmatpush1.msra.mxu0 0.0
      %1486 = vmatprep.subr.mxu0 0.0
      %1487 = vmatpush1.msra.mxu0 0.0
      %1488 = vmatprep.subr.mxu0 0.0
      %1489 = vmatpush1.msra.mxu0 0.0
      %1490 = vmatprep.mubr.f32.mxu0 0.0
      %1491 = vmatmul.mubr.f32.gmra.mrb[0].mxu0 %v1420
      %v1492 = vpop.f32.mrb[0].mxu0
      %v1493 = vadd.f32 0.0, %v1492
      %v1494 = vpop.f32.mrb[0].mxu0
      %v1495 = vadd.f32 0.0, %v1494
      %1496 = vdwg.mxu0
      %v1497 = vadd.f32 %v1402, %v1493
      %v1498 = vadd.f32 %v1403, %v1495
      %s1499 = scalar_lea.vmem %s7, 24
      %v1500 = vld [vmem:[%s1499] sm:$0xff]
      %v1501 = vld [vmem:[#allocation2 + $0x8] sm:$0xff]
      %v1502 = vld [vmem:[#allocation2 + $0x10] sm:$0xf]
      %s1503 = scalar_lea.vmem %s2, 10
      %v1504 = vld [vmem:[%s1503] sm:$0x3]
      %v1506 = vlaneseq
      %v1507 = vshrl.u32 %v1506, 7
      %v1508 = vsub.s32 0, %v1507
      %v1509 = vrot.slane %v1504, %v1508
      %v1510 = vlaneseq
      %v1511 = vshrl.u32 %v1510, 7
      %v1512 = vsub.s32 1, %v1511
      %v1513 = vrot.slane %v1504, %v1512
      %v1514 = vcombine.low %v1509, %v1513
      %1515 = vrot.lane.b32.xlu0 %v1514, 38
      %v1516 = vpop.permute.xlu0 %1515
      %v1517 = vrot.slane %v1516, 4
      %vm1518 = vcmask 310272
      %v1519 = vsel %vm1518, %v1517, %v1516
      %v1522 = vmul.f32 %v1501, %v1519
      %v1523 = vmul.f32 %v1502, %v1517
      %v1526 = vcombine.high %v1522, %v1522
      %1527 = vrot.lane.b32.xlu0 %v1522, 90
      %v1528 = vpop.permute.xlu0 %1527
      %1529 = vrot.lane.b32.xlu0 %v1526, 90
      %v1530 = vpop.permute.xlu0 %1529
      %1531 = vrot.lane.b32.xlu0 %v1523, 90
      %v1532 = vpop.permute.xlu0 %1531
      %vm1533 = vcmask 736256
      %v1534 = vsel %vm1533, %v1528, %v1530
      %v1535 = vsel %vm1533, %v1530, %v1532
      %v1537 = vsel %vm438, %v1500, 0
      %v1539 = vsel %vm423, %v1534, 0
      %v1541 = vsel %vm423, %v1535, 0
      %1543 = vmatprep.subr.mxu0 %v1541
      %1544 = vmatpush1.msra.mxu0 %v1539
      %1545 = vmatprep.subr.mxu0 0.0
      %1546 = vmatpush1.msra.mxu0 0.0
      %1547 = vmatprep.subr.mxu0 0.0
      %1548 = vmatpush1.msra.mxu0 0.0
      %1549 = vmatprep.subr.mxu0 0.0
      %1550 = vmatpush1.msra.mxu0 0.0
      %1551 = vmatprep.subr.mxu0 0.0
      %1552 = vmatpush1.msra.mxu0 0.0
      %1553 = vmatprep.subr.mxu0 0.0
      %1554 = vmatpush1.msra.mxu0 0.0
      %1555 = vmatprep.subr.mxu0 0.0
      %1556 = vmatpush1.msra.mxu0 0.0
      %1557 = vmatprep.subr.mxu0 0.0
      %1558 = vmatpush1.msra.mxu0 0.0
      %1559 = vmatprep.subr.mxu0 0.0
      %1560 = vmatpush1.msra.mxu0 0.0
      %1561 = vmatprep.subr.mxu0 0.0
      %1562 = vmatpush1.msra.mxu0 0.0
      %1563 = vmatprep.subr.mxu0 0.0
      %1564 = vmatpush1.msra.mxu0 0.0
      %1565 = vmatprep.subr.mxu0 0.0
      %1566 = vmatpush1.msra.mxu0 0.0
      %1567 = vmatprep.subr.mxu0 0.0
      %1568 = vmatpush1.msra.mxu0 0.0
      %1569 = vmatprep.subr.mxu0 0.0
      %1570 = vmatpush1.msra.mxu0 0.0
      %1571 = vmatprep.subr.mxu0 0.0
      %1572 = vmatpush1.msra.mxu0 0.0
      %1573 = vmatprep.subr.mxu0 0.0
      %1574 = vmatpush1.msra.mxu0 0.0
      %1575 = vmatprep.subr.mxu0 0.0
      %1576 = vmatpush1.msra.mxu0 0.0
      %1577 = vmatprep.subr.mxu0 0.0
      %1578 = vmatpush1.msra.mxu0 0.0
      %1579 = vmatprep.subr.mxu0 0.0
      %1580 = vmatpush1.msra.mxu0 0.0
      %1581 = vmatprep.subr.mxu0 0.0
      %1582 = vmatpush1.msra.mxu0 0.0
      %1583 = vmatprep.subr.mxu0 0.0
      %1584 = vmatpush1.msra.mxu0 0.0
      %1585 = vmatprep.subr.mxu0 0.0
      %1586 = vmatpush1.msra.mxu0 0.0
      %1587 = vmatprep.subr.mxu0 0.0
      %1588 = vmatpush1.msra.mxu0 0.0
      %1589 = vmatprep.subr.mxu0 0.0
      %1590 = vmatpush1.msra.mxu0 0.0
      %1591 = vmatprep.subr.mxu0 0.0
      %1592 = vmatpush1.msra.mxu0 0.0
      %1593 = vmatprep.subr.mxu0 0.0
      %1594 = vmatpush1.msra.mxu0 0.0
      %1595 = vmatprep.subr.mxu0 0.0
      %1596 = vmatpush1.msra.mxu0 0.0
      %1597 = vmatprep.subr.mxu0 0.0
      %1598 = vmatpush1.msra.mxu0 0.0
      %1599 = vmatprep.subr.mxu0 0.0
      %1600 = vmatpush1.msra.mxu0 0.0
      %1601 = vmatprep.subr.mxu0 0.0
      %1602 = vmatpush1.msra.mxu0 0.0
      %1603 = vmatprep.subr.mxu0 0.0
      %1604 = vmatpush1.msra.mxu0 0.0
      %1605 = vmatprep.subr.mxu0 0.0
      %1606 = vmatpush1.msra.mxu0 0.0
      %1607 = vmatprep.mubr.f32.mxu0 0.0
      %1608 = vmatmul.mubr.f32.gmra.mrb[0].mxu0 %v1537
      %v1609 = vpop.f32.mrb[0].mxu0
      %v1610 = vadd.f32 0.0, %v1609
      %v1611 = vpop.f32.mrb[0].mxu0
      %v1612 = vadd.f32 0.0, %v1611
      %1613 = vdwg.mxu0
      %v1614 = vadd.f32 %v1497, %v1610
      %v1615 = vadd.f32 %v1498, %v1612
      %s1616 = scalar_lea.vmem %s7, 32
      %v1617 = vld [vmem:[%s1616] sm:$0xff]
      %v1618 = vld [vmem:[#allocation2 + $0x8] sm:$0xff]
      %v1619 = vld [vmem:[#allocation2 + $0x10] sm:$0xf]
      %1620 = vrot.lane.b32.xlu0 %v1302, 122
      %v1621 = vpop.permute.xlu0 %1620
      %v1622 = vrot.slane %v1621, 4
      %vm1623 = vcmask 998400
      %v1624 = vsel %vm1623, %v1622, %v1621
      %v1627 = vmul.f32 %v1618, %v1624
      %v1628 = vmul.f32 %v1619, %v1622
      %v1631 = vcombine.high %v1627, %v1627
      %1632 = vrot.lane.b32.xlu0 %v1627, 6
      %v1633 = vpop.permute.xlu0 %1632
      %1634 = vrot.lane.b32.xlu0 %v1631, 6
      %v1635 = vpop.permute.xlu0 %1634
      %1636 = vrot.lane.b32.xlu0 %v1628, 6
      %v1637 = vpop.permute.xlu0 %1636
      %vm1638 = vcmask 48128
      %v1639 = vsel %vm1638, %v1633, %v1635
      %v1640 = vsel %vm1638, %v1635, %v1637
      %v1642 = vsel %vm438, %v1617, 0
      %v1644 = vsel %vm423, %v1639, 0
      %v1646 = vsel %vm423, %v1640, 0
      %1648 = vmatprep.subr.mxu0 %v1646
      %1649 = vmatpush1.msra.mxu0 %v1644
      %1650 = vmatprep.subr.mxu0 0.0
      %1651 = vmatpush1.msra.mxu0 0.0
      %1652 = vmatprep.subr.mxu0 0.0
      %1653 = vmatpush1.msra.mxu0 0.0
      %1654 = vmatprep.subr.mxu0 0.0
      %1655 = vmatpush1.msra.mxu0 0.0
      %1656 = vmatprep.subr.mxu0 0.0
      %1657 = vmatpush1.msra.mxu0 0.0
      %1658 = vmatprep.subr.mxu0 0.0
      %1659 = vmatpush1.msra.mxu0 0.0
      %1660 = vmatprep.subr.mxu0 0.0
      %1661 = vmatpush1.msra.mxu0 0.0
      %1662 = vmatprep.subr.mxu0 0.0
      %1663 = vmatpush1.msra.mxu0 0.0
      %1664 = vmatprep.subr.mxu0 0.0
      %1665 = vmatpush1.msra.mxu0 0.0
      %1666 = vmatprep.subr.mxu0 0.0
      %1667 = vmatpush1.msra.mxu0 0.0
      %1668 = vmatprep.subr.mxu0 0.0
      %1669 = vmatpush1.msra.mxu0 0.0
      %1670 = vmatprep.subr.mxu0 0.0
      %1671 = vmatpush1.msra.mxu0 0.0
      %1672 = vmatprep.subr.mxu0 0.0
      %1673 = vmatpush1.msra.mxu0 0.0
      %1674 = vmatprep.subr.mxu0 0.0
      %1675 = vmatpush1.msra.mxu0 0.0
      %1676 = vmatprep.subr.mxu0 0.0
      %1677 = vmatpush1.msra.mxu0 0.0
      %1678 = vmatprep.subr.mxu0 0.0
      %1679 = vmatpush1.msra.mxu0 0.0
      %1680 = vmatprep.subr.mxu0 0.0
      %1681 = vmatpush1.msra.mxu0 0.0
      %1682 = vmatprep.subr.mxu0 0.0
      %1683 = vmatpush1.msra.mxu0 0.0
      %1684 = vmatprep.subr.mxu0 0.0
      %1685 = vmatpush1.msra.mxu0 0.0
      %1686 = vmatprep.subr.mxu0 0.0
      %1687 = vmatpush1.msra.mxu0 0.0
      %1688 = vmatprep.subr.mxu0 0.0
      %1689 = vmatpush1.msra.mxu0 0.0
      %1690 = vmatprep.subr.mxu0 0.0
      %1691 = vmatpush1.msra.mxu0 0.0
      %1692 = vmatprep.subr.mxu0 0.0
      %1693 = vmatpush1.msra.mxu0 0.0
      %1694 = vmatprep.subr.mxu0 0.0
      %1695 = vmatpush1.msra.mxu0 0.0
      %1696 = vmatprep.subr.mxu0 0.0
      %1697 = vmatpush1.msra.mxu0 0.0
      %1698 = vmatprep.subr.mxu0 0.0
      %1699 = vmatpush1.msra.mxu0 0.0
      %1700 = vmatprep.subr.mxu0 0.0
      %1701 = vmatpush1.msra.mxu0 0.0
      %1702 = vmatprep.subr.mxu0 0.0
      %1703 = vmatpush1.msra.mxu0 0.0
      %1704 = vmatprep.subr.mxu0 0.0
      %1705 = vmatpush1.msra.mxu0 0.0
      %1706 = vmatprep.subr.mxu0 0.0
      %1707 = vmatpush1.msra.mxu0 0.0
      %1708 = vmatprep.subr.mxu0 0.0
      %1709 = vmatpush1.msra.mxu0 0.0
      %1710 = vmatprep.subr.mxu0 0.0
      %1711 = vmatpush1.msra.mxu0 0.0
      %1712 = vmatprep.mubr.f32.mxu0 0.0
      %1713 = vmatmul.mubr.f32.gmra.mrb[0].mxu0 %v1642
      %v1714 = vpop.f32.mrb[0].mxu0
      %v1715 = vadd.f32 0.0, %v1714
      %v1716 = vpop.f32.mrb[0].mxu0
      %v1717 = vadd.f32 0.0, %v1716
      %1718 = vdwg.mxu0
      %v1719 = vadd.f32 %v1614, %v1715
      %v1720 = vadd.f32 %v1615, %v1717
      %s1721 = scalar_lea.vmem %s7, 40
      %v1722 = vld [vmem:[%s1721] sm:$0xff]
      %v1724 = vsel %vm438, %v1722, 0
      %1726 = vmatprep.subr.mxu0 %v1124
      %1727 = vmatpush1.msra.mxu0 %v1122
      %1728 = vmatprep.subr.mxu0 0.0
      %1729 = vmatpush1.msra.mxu0 0.0
      %1730 = vmatprep.subr.mxu0 0.0
      %1731 = vmatpush1.msra.mxu0 0.0
      %1732 = vmatprep.subr.mxu0 0.0
      %1733 = vmatpush1.msra.mxu0 0.0
      %1734 = vmatprep.subr.mxu0 0.0
      %1735 = vmatpush1.msra.mxu0 0.0
      %1736 = vmatprep.subr.mxu0 0.0
      %1737 = vmatpush1.msra.mxu0 0.0
      %1738 = vmatprep.subr.mxu0 0.0
      %1739 = vmatpush1.msra.mxu0 0.0
      %1740 = vmatprep.subr.mxu0 0.0
      %1741 = vmatpush1.msra.mxu0 0.0
      %1742 = vmatprep.subr.mxu0 0.0
      %1743 = vmatpush1.msra.mxu0 0.0
      %1744 = vmatprep.subr.mxu0 0.0
      %1745 = vmatpush1.msra.mxu0 0.0
      %1746 = vmatprep.subr.mxu0 0.0
      %1747 = vmatpush1.msra.mxu0 0.0
      %1748 = vmatprep.subr.mxu0 0.0
      %1749 = vmatpush1.msra.mxu0 0.0
      %1750 = vmatprep.subr.mxu0 0.0
      %1751 = vmatpush1.msra.mxu0 0.0
      %1752 = vmatprep.subr.mxu0 0.0
      %1753 = vmatpush1.msra.mxu0 0.0
      %1754 = vmatprep.subr.mxu0 0.0
      %1755 = vmatpush1.msra.mxu0 0.0
      %1756 = vmatprep.subr.mxu0 0.0
      %1757 = vmatpush1.msra.mxu0 0.0
      %1758 = vmatprep.subr.mxu0 0.0
      %1759 = vmatpush1.msra.mxu0 0.0
      %1760 = vmatprep.subr.mxu0 0.0
      %1761 = vmatpush1.msra.mxu0 0.0
      %1762 = vmatprep.subr.mxu0 0.0
      %1763 = vmatpush1.msra.mxu0 0.0
      %1764 = vmatprep.subr.mxu0 0.0
      %1765 = vmatpush1.msra.mxu0 0.0
      %1766 = vmatprep.subr.mxu0 0.0
      %1767 = vmatpush1.msra.mxu0 0.0
      %1768 = vmatprep.subr.mxu0 0.0
      %1769 = vmatpush1.msra.mxu0 0.0
      %1770 = vmatprep.subr.mxu0 0.0
      %1771 = vmatpush1.msra.mxu0 0.0
      %1772 = vmatprep.subr.mxu0 0.0
      %1773 = vmatpush1.msra.mxu0 0.0
      %1774 = vmatprep.subr.mxu0 0.0
      %1775 = vmatpush1.msra.mxu0 0.0
      %1776 = vmatprep.subr.mxu0 0.0
      %1777 = vmatpush1.msra.mxu0 0.0
      %1778 = vmatprep.subr.mxu0 0.0
      %1779 = vmatpush1.msra.mxu0 0.0
      %1780 = vmatprep.subr.mxu0 0.0
      %1781 = vmatpush1.msra.mxu0 0.0
      %1782 = vmatprep.subr.mxu0 0.0
      %1783 = vmatpush1.msra.mxu0 0.0
      %1784 = vmatprep.subr.mxu0 0.0
      %1785 = vmatpush1.msra.mxu0 0.0
      %1786 = vmatprep.subr.mxu0 0.0
      %1787 = vmatpush1.msra.mxu0 0.0
      %1788 = vmatprep.subr.mxu0 0.0
      %1789 = vmatpush1.msra.mxu0 0.0
      %1790 = vmatprep.mubr.f32.mxu0 0.0
      %1791 = vmatmul.mubr.f32.gmra.mrb[0].mxu0 %v1724
      %v1792 = vpop.f32.mrb[0].mxu0
      %v1793 = vadd.f32 0.0, %v1792
      %v1794 = vpop.f32.mrb[0].mxu0
      %v1795 = vadd.f32 0.0, %v1794
      %1796 = vdwg.mxu0
      %v1797 = vadd.f32 %v1719, %v1793
      %v1798 = vadd.f32 %v1720, %v1795
      %s1799 = scalar_lea.vmem %s7, 48
      %v1800 = vld [vmem:[%s1799] sm:$0xff]
      %v1801 = vld [vmem:[#allocation2 + $0xc] sm:$0xff]
      %v1802 = vld [vmem:[#allocation2 + $0x14] sm:$0xf]
      %1803 = vrot.lane.b32.xlu0 %v1514, 6
      %v1804 = vpop.permute.xlu0 %1803
      %v1805 = vrot.slane %v1804, 4
      %v1806 = vsel %vm1638, %v1805, %v1804
      %v1809 = vmul.f32 %v1801, %v1806
      %v1810 = vmul.f32 %v1802, %v1805
      %v1813 = vcombine.high %v1809, %v1809
      %1814 = vrot.lane.b32.xlu0 %v1809, 122
      %v1815 = vpop.permute.xlu0 %1814
      %1816 = vrot.lane.b32.xlu0 %v1813, 122
      %v1817 = vpop.permute.xlu0 %1816
      %1818 = vrot.lane.b32.xlu0 %v1810, 122
      %v1819 = vpop.permute.xlu0 %1818
      %v1820 = vsel %vm1623, %v1815, %v1817
      %v1821 = vsel %vm1623, %v1817, %v1819
      %v1823 = vsel %vm438, %v1800, 0
      %v1825 = vsel %vm423, %v1820, 0
      %v1827 = vsel %vm423, %v1821, 0
      %1829 = vmatprep.subr.mxu0 %v1827
      %1830 = vmatpush1.msra.mxu0 %v1825
      %1831 = vmatprep.subr.mxu0 0.0
      %1832 = vmatpush1.msra.mxu0 0.0
      %1833 = vmatprep.subr.mxu0 0.0
      %1834 = vmatpush1.msra.mxu0 0.0
      %1835 = vmatprep.subr.mxu0 0.0
      %1836 = vmatpush1.msra.mxu0 0.0
      %1837 = vmatprep.subr.mxu0 0.0
      %1838 = vmatpush1.msra.mxu0 0.0
      %1839 = vmatprep.subr.mxu0 0.0
      %1840 = vmatpush1.msra.mxu0 0.0
      %1841 = vmatprep.subr.mxu0 0.0
      %1842 = vmatpush1.msra.mxu0 0.0
      %1843 = vmatprep.subr.mxu0 0.0
      %1844 = vmatpush1.msra.mxu0 0.0
      %1845 = vmatprep.subr.mxu0 0.0
      %1846 = vmatpush1.msra.mxu0 0.0
      %1847 = vmatprep.subr.mxu0 0.0
      %1848 = vmatpush1.msra.mxu0 0.0
      %1849 = vmatprep.subr.mxu0 0.0
      %1850 = vmatpush1.msra.mxu0 0.0
      %1851 = vmatprep.subr.mxu0 0.0
      %1852 = vmatpush1.msra.mxu0 0.0
      %1853 = vmatprep.subr.mxu0 0.0
      %1854 = vmatpush1.msra.mxu0 0.0
      %1855 = vmatprep.subr.mxu0 0.0
      %1856 = vmatpush1.msra.mxu0 0.0
      %1857 = vmatprep.subr.mxu0 0.0
      %1858 = vmatpush1.msra.mxu0 0.0
      %1859 = vmatprep.subr.mxu0 0.0
      %1860 = vmatpush1.msra.mxu0 0.0
      %1861 = vmatprep.subr.mxu0 0.0
      %1862 = vmatpush1.msra.mxu0 0.0
      %1863 = vmatprep.subr.mxu0 0.0
      %1864 = vmatpush1.msra.mxu0 0.0
      %1865 = vmatprep.subr.mxu0 0.0
      %1866 = vmatpush1.msra.mxu0 0.0
      %1867 = vmatprep.subr.mxu0 0.0
      %1868 = vmatpush1.msra.mxu0 0.0
      %1869 = vmatprep.subr.mxu0 0.0
      %1870 = vmatpush1.msra.mxu0 0.0
      %1871 = vmatprep.subr.mxu0 0.0
      %1872 = vmatpush1.msra.mxu0 0.0
      %1873 = vmatprep.subr.mxu0 0.0
      %1874 = vmatpush1.msra.mxu0 0.0
      %1875 = vmatprep.subr.mxu0 0.0
      %1876 = vmatpush1.msra.mxu0 0.0
      %1877 = vmatprep.subr.mxu0 0.0
      %1878 = vmatpush1.msra.mxu0 0.0
      %1879 = vmatprep.subr.mxu0 0.0
      %1880 = vmatpush1.msra.mxu0 0.0
      %1881 = vmatprep.subr.mxu0 0.0
      %1882 = vmatpush1.msra.mxu0 0.0
      %1883 = vmatprep.subr.mxu0 0.0
      %1884 = vmatpush1.msra.mxu0 0.0
      %1885 = vmatprep.subr.mxu0 0.0
      %1886 = vmatpush1.msra.mxu0 0.0
      %1887 = vmatprep.subr.mxu0 0.0
      %1888 = vmatpush1.msra.mxu0 0.0
      %1889 = vmatprep.subr.mxu0 0.0
      %1890 = vmatpush1.msra.mxu0 0.0
      %1891 = vmatprep.subr.mxu0 0.0
      %1892 = vmatpush1.msra.mxu0 0.0
      %1893 = vmatprep.mubr.f32.mxu0 0.0
      %1894 = vmatmul.mubr.f32.gmra.mrb[0].mxu0 %v1823
      %v1895 = vpop.f32.mrb[0].mxu0
      %v1896 = vadd.f32 0.0, %v1895
      %v1897 = vpop.f32.mrb[0].mxu0
      %v1898 = vadd.f32 0.0, %v1897
      %1899 = vdwg.mxu0
      %v1900 = vadd.f32 %v1797, %v1896
      %v1901 = vadd.f32 %v1798, %v1898
      %s1902 = scalar_lea.vmem %s7, 56
      %v1903 = vld [vmem:[%s1902] sm:$0xff]
      %v1904 = vld [vmem:[#allocation2 + $0xc] sm:$0xff]
      %v1905 = vld [vmem:[#allocation2 + $0x14] sm:$0xf]
      %1906 = vrot.lane.b32.xlu0 %v1302, 90
      %v1907 = vpop.permute.xlu0 %1906
      %v1908 = vrot.slane %v1907, 4
      %v1909 = vsel %vm1533, %v1908, %v1907
      %v1912 = vmul.f32 %v1904, %v1909
      %v1913 = vmul.f32 %v1905, %v1908
      %v1916 = vcombine.high %v1912, %v1912
      %1917 = vrot.lane.b32.xlu0 %v1912, 38
      %v1918 = vpop.permute.xlu0 %1917
      %1919 = vrot.lane.b32.xlu0 %v1916, 38
      %v1920 = vpop.permute.xlu0 %1919
      %1921 = vrot.lane.b32.xlu0 %v1913, 38
      %v1922 = vpop.permute.xlu0 %1921
      %v1923 = vsel %vm1518, %v1918, %v1920
      %v1924 = vsel %vm1518, %v1920, %v1922
      %v1926 = vsel %vm438, %v1903, 0
      %v1928 = vsel %vm423, %v1923, 0
      %v1930 = vsel %vm423, %v1924, 0
      %1932 = vmatprep.subr.mxu0 %v1930
      %1933 = vmatpush1.msra.mxu0 %v1928
      %1934 = vmatprep.subr.mxu0 0.0
      %1935 = vmatpush1.msra.mxu0 0.0
      %1936 = vmatprep.subr.mxu0 0.0
      %1937 = vmatpush1.msra.mxu0 0.0
      %1938 = vmatprep.subr.mxu0 0.0
      %1939 = vmatpush1.msra.mxu0 0.0
      %1940 = vmatprep.subr.mxu0 0.0
      %1941 = vmatpush1.msra.mxu0 0.0
      %1942 = vmatprep.subr.mxu0 0.0
      %1943 = vmatpush1.msra.mxu0 0.0
      %1944 = vmatprep.subr.mxu0 0.0
      %1945 = vmatpush1.msra.mxu0 0.0
      %1946 = vmatprep.subr.mxu0 0.0
      %1947 = vmatpush1.msra.mxu0 0.0
      %1948 = vmatprep.subr.mxu0 0.0
      %1949 = vmatpush1.msra.mxu0 0.0
      %1950 = vmatprep.subr.mxu0 0.0
      %1951 = vmatpush1.msra.mxu0 0.0
      %1952 = vmatprep.subr.mxu0 0.0
      %1953 = vmatpush1.msra.mxu0 0.0
      %1954 = vmatprep.subr.mxu0 0.0
      %1955 = vmatpush1.msra.mxu0 0.0
      %1956 = vmatprep.subr.mxu0 0.0
      %1957 = vmatpush1.msra.mxu0 0.0
      %1958 = vmatprep.subr.mxu0 0.0
      %1959 = vmatpush1.msra.mxu0 0.0
      %1960 = vmatprep.subr.mxu0 0.0
      %1961 = vmatpush1.msra.mxu0 0.0
      %1962 = vmatprep.subr.mxu0 0.0
      %1963 = vmatpush1.msra.mxu0 0.0
      %1964 = vmatprep.subr.mxu0 0.0
      %1965 = vmatpush1.msra.mxu0 0.0
      %1966 = vmatprep.subr.mxu0 0.0
      %1967 = vmatpush1.msra.mxu0 0.0
      %1968 = vmatprep.subr.mxu0 0.0
      %1969 = vmatpush1.msra.mxu0 0.0
      %1970 = vmatprep.subr.mxu0 0.0
      %1971 = vmatpush1.msra.mxu0 0.0
      %1972 = vmatprep.subr.mxu0 0.0
      %1973 = vmatpush1.msra.mxu0 0.0
      %1974 = vmatprep.subr.mxu0 0.0
      %1975 = vmatpush1.msra.mxu0 0.0
      %1976 = vmatprep.subr.mxu0 0.0
      %1977 = vmatpush1.msra.mxu0 0.0
      %1978 = vmatprep.subr.mxu0 0.0
      %1979 = vmatpush1.msra.mxu0 0.0
      %1980 = vmatprep.subr.mxu0 0.0
      %1981 = vmatpush1.msra.mxu0 0.0
      %1982 = vmatprep.subr.mxu0 0.0
      %1983 = vmatpush1.msra.mxu0 0.0
      %1984 = vmatprep.subr.mxu0 0.0
      %1985 = vmatpush1.msra.mxu0 0.0
      %1986 = vmatprep.subr.mxu0 0.0
      %1987 = vmatpush1.msra.mxu0 0.0
      %1988 = vmatprep.subr.mxu0 0.0
      %1989 = vmatpush1.msra.mxu0 0.0
      %1990 = vmatprep.subr.mxu0 0.0
      %1991 = vmatpush1.msra.mxu0 0.0
      %1992 = vmatprep.subr.mxu0 0.0
      %1993 = vmatpush1.msra.mxu0 0.0
      %1994 = vmatprep.subr.mxu0 0.0
      %1995 = vmatpush1.msra.mxu0 0.0
      %1996 = vmatprep.mubr.f32.mxu0 0.0
      %1997 = vmatmul.mubr.f32.gmra.mrb[0].mxu0 %v1926
      %v1998 = vpop.f32.mrb[0].mxu0
      %v1999 = vadd.f32 0.0, %v1998
      %v2000 = vpop.f32.mrb[0].mxu0
      %v2001 = vadd.f32 0.0, %v2000
      %2002 = vdwg.mxu0
      %v2003 = vadd.f32 %v1900, %v1999
      %v2004 = vadd.f32 %v1901, %v2001
      %s2005 = scalar_lea.vmem %s7, 64
      %v2006 = vld [vmem:[%s2005] sm:$0xff]
      %v2007 = vld [vmem:[#allocation2 + $0xc] sm:$0xff]
      %v2008 = vld [vmem:[#allocation2 + $0x14] sm:$0xf]
      %v2011 = vcombine.high %v2007, %v2007
      %2012 = vrot.lane.b32.xlu0 %v2007, 32
      %v2013 = vpop.permute.xlu0 %2012
      %2014 = vrot.lane.b32.xlu0 %v2011, 32
      %v2015 = vpop.permute.xlu0 %2014
      %2016 = vrot.lane.b32.xlu0 %v2008, 32
      %v2017 = vpop.permute.xlu0 %2016
      %vm2018 = vcmask 261120
      %v2019 = vsel %vm2018, %v2013, %v2015
      %v2020 = vsel %vm2018, %v2015, %v2017
      %v2022 = vsel %vm438, %v2006, 0
      %v2024 = vsel %vm423, %v2019, 0
      %v2026 = vsel %vm423, %v2020, 0
      %2028 = vmatprep.subr.mxu0 %v2026
      %2029 = vmatpush1.msra.mxu0 %v2024
      %2030 = vmatprep.subr.mxu0 0.0
      %2031 = vmatpush1.msra.mxu0 0.0
      %2032 = vmatprep.subr.mxu0 0.0
      %2033 = vmatpush1.msra.mxu0 0.0
      %2034 = vmatprep.subr.mxu0 0.0
      %2035 = vmatpush1.msra.mxu0 0.0
      %2036 = vmatprep.subr.mxu0 0.0
      %2037 = vmatpush1.msra.mxu0 0.0
      %2038 = vmatprep.subr.mxu0 0.0
      %2039 = vmatpush1.msra.mxu0 0.0
      %2040 = vmatprep.subr.mxu0 0.0
      %2041 = vmatpush1.msra.mxu0 0.0
      %2042 = vmatprep.subr.mxu0 0.0
      %2043 = vmatpush1.msra.mxu0 0.0
      %2044 = vmatprep.subr.mxu0 0.0
      %2045 = vmatpush1.msra.mxu0 0.0
      %2046 = vmatprep.subr.mxu0 0.0
      %2047 = vmatpush1.msra.mxu0 0.0
      %2048 = vmatprep.subr.mxu0 0.0
      %2049 = vmatpush1.msra.mxu0 0.0
      %2050 = vmatprep.subr.mxu0 0.0
      %2051 = vmatpush1.msra.mxu0 0.0
      %2052 = vmatprep.subr.mxu0 0.0
      %2053 = vmatpush1.msra.mxu0 0.0
      %2054 = vmatprep.subr.mxu0 0.0
      %2055 = vmatpush1.msra.mxu0 0.0
      %2056 = vmatprep.subr.mxu0 0.0
      %2057 = vmatpush1.msra.mxu0 0.0
      %2058 = vmatprep.subr.mxu0 0.0
      %2059 = vmatpush1.msra.mxu0 0.0
      %2060 = vmatprep.subr.mxu0 0.0
      %2061 = vmatpush1.msra.mxu0 0.0
      %2062 = vmatprep.subr.mxu0 0.0
      %2063 = vmatpush1.msra.mxu0 0.0
      %2064 = vmatprep.subr.mxu0 0.0
      %2065 = vmatpush1.msra.mxu0 0.0
      %2066 = vmatprep.subr.mxu0 0.0
      %2067 = vmatpush1.msra.mxu0 0.0
      %2068 = vmatprep.subr.mxu0 0.0
      %2069 = vmatpush1.msra.mxu0 0.0
      %2070 = vmatprep.subr.mxu0 0.0
      %2071 = vmatpush1.msra.mxu0 0.0
      %2072 = vmatprep.subr.mxu0 0.0
      %2073 = vmatpush1.msra.mxu0 0.0
      %2074 = vmatprep.subr.mxu0 0.0
      %2075 = vmatpush1.msra.mxu0 0.0
      %2076 = vmatprep.subr.mxu0 0.0
      %2077 = vmatpush1.msra.mxu0 0.0
      %2078 = vmatprep.subr.mxu0 0.0
      %2079 = vmatpush1.msra.mxu0 0.0
      %2080 = vmatprep.subr.mxu0 0.0
      %2081 = vmatpush1.msra.mxu0 0.0
      %2082 = vmatprep.subr.mxu0 0.0
      %2083 = vmatpush1.msra.mxu0 0.0
      %2084 = vmatprep.subr.mxu0 0.0
      %2085 = vmatpush1.msra.mxu0 0.0
      %2086 = vmatprep.subr.mxu0 0.0
      %2087 = vmatpush1.msra.mxu0 0.0
      %2088 = vmatprep.subr.mxu0 0.0
      %2089 = vmatpush1.msra.mxu0 0.0
      %2090 = vmatprep.subr.mxu0 0.0
      %2091 = vmatpush1.msra.mxu0 0.0
      %2092 = vmatprep.mubr.f32.mxu0 0.0
      %2093 = vmatmul.mubr.f32.gmra.mrb[0].mxu0 %v2022
      %v2094 = vpop.f32.mrb[0].mxu0
      %v2095 = vadd.f32 0.0, %v2094
      %v2096 = vpop.f32.mrb[0].mxu0
      %v2097 = vadd.f32 0.0, %v2096
      %2098 = vdwg.mxu0
      %v2099 = vadd.f32 %v2003, %v2095
      %v2100 = vadd.f32 %v2004, %v2097
      %s2101 = scalar_lea.vmem %s7, 72
      %v2102 = vld [vmem:[%s2101] sm:$0xff]
      %v2103 = vld [vmem:[#allocation2 + $0xc] sm:$0xff]
      %v2104 = vld [vmem:[#allocation2 + $0x14] sm:$0xf]
      %2105 = vrot.lane.b32.xlu0 %v1514, 102
      %v2106 = vpop.permute.xlu0 %2105
      %v2107 = vrot.slane %v2106, 4
      %v2108 = vsel %vm1321, %v2107, %v2106
      %v2111 = vmul.f32 %v2103, %v2108
      %v2112 = vmul.f32 %v2104, %v2107
      %v2115 = vcombine.high %v2111, %v2111
      %2116 = vrot.lane.b32.xlu0 %v2111, 26
      %v2117 = vpop.permute.xlu0 %2116
      %2118 = vrot.lane.b32.xlu0 %v2115, 26
      %v2119 = vpop.permute.xlu0 %2118
      %2120 = vrot.lane.b32.xlu0 %v2112, 26
      %v2121 = vpop.permute.xlu0 %2120
      %v2122 = vsel %vm1306, %v2117, %v2119
      %v2123 = vsel %vm1306, %v2119, %v2121
      %v2125 = vsel %vm438, %v2102, 0
      %v2127 = vsel %vm423, %v2122, 0
      %v2129 = vsel %vm423, %v2123, 0
      %2131 = vmatprep.subr.mxu0 %v2129
      %2132 = vmatpush1.msra.mxu0 %v2127
      %2133 = vmatprep.subr.mxu0 0.0
      %2134 = vmatpush1.msra.mxu0 0.0
      %2135 = vmatprep.subr.mxu0 0.0
      %2136 = vmatpush1.msra.mxu0 0.0
      %2137 = vmatprep.subr.mxu0 0.0
      %2138 = vmatpush1.msra.mxu0 0.0
      %2139 = vmatprep.subr.mxu0 0.0
      %2140 = vmatpush1.msra.mxu0 0.0
      %2141 = vmatprep.subr.mxu0 0.0
      %2142 = vmatpush1.msra.mxu0 0.0
      %2143 = vmatprep.subr.mxu0 0.0
      %2144 = vmatpush1.msra.mxu0 0.0
      %2145 = vmatprep.subr.mxu0 0.0
      %2146 = vmatpush1.msra.mxu0 0.0
      %2147 = vmatprep.subr.mxu0 0.0
      %2148 = vmatpush1.msra.mxu0 0.0
      %2149 = vmatprep.subr.mxu0 0.0
      %2150 = vmatpush1.msra.mxu0 0.0
      %2151 = vmatprep.subr.mxu0 0.0
      %2152 = vmatpush1.msra.mxu0 0.0
      %2153 = vmatprep.subr.mxu0 0.0
      %2154 = vmatpush1.msra.mxu0 0.0
      %2155 = vmatprep.subr.mxu0 0.0
      %2156 = vmatpush1.msra.mxu0 0.0
      %2157 = vmatprep.subr.mxu0 0.0
      %2158 = vmatpush1.msra.mxu0 0.0
      %2159 = vmatprep.subr.mxu0 0.0
      %2160 = vmatpush1.msra.mxu0 0.0
      %2161 = vmatprep.subr.mxu0 0.0
      %2162 = vmatpush1.msra.mxu0 0.0
      %2163 = vmatprep.subr.mxu0 0.0
      %2164 = vmatpush1.msra.mxu0 0.0
      %2165 = vmatprep.subr.mxu0 0.0
      %2166 = vmatpush1.msra.mxu0 0.0
      %2167 = vmatprep.subr.mxu0 0.0
      %2168 = vmatpush1.msra.mxu0 0.0
      %2169 = vmatprep.subr.mxu0 0.0
      %2170 = vmatpush1.msra.mxu0 0.0
      %2171 = vmatprep.subr.mxu0 0.0
      %2172 = vmatpush1.msra.mxu0 0.0
      %2173 = vmatprep.subr.mxu0 0.0
      %2174 = vmatpush1.msra.mxu0 0.0
      %2175 = vmatprep.subr.mxu0 0.0
      %2176 = vmatpush1.msra.mxu0 0.0
      %2177 = vmatprep.subr.mxu0 0.0
      %2178 = vmatpush1.msra.mxu0 0.0
      %2179 = vmatprep.subr.mxu0 0.0
      %2180 = vmatpush1.msra.mxu0 0.0
      %2181 = vmatprep.subr.mxu0 0.0
      %2182 = vmatpush1.msra.mxu0 0.0
      %2183 = vmatprep.subr.mxu0 0.0
      %2184 = vmatpush1.msra.mxu0 0.0
      %2185 = vmatprep.subr.mxu0 0.0
      %2186 = vmatpush1.msra.mxu0 0.0
      %2187 = vmatprep.subr.mxu0 0.0
      %2188 = vmatpush1.msra.mxu0 0.0
      %2189 = vmatprep.subr.mxu0 0.0
      %2190 = vmatpush1.msra.mxu0 0.0
      %2191 = vmatprep.subr.mxu0 0.0
      %2192 = vmatpush1.msra.mxu0 0.0
      %2193 = vmatprep.subr.mxu0 0.0
      %2194 = vmatpush1.msra.mxu0 0.0
      %2195 = vmatprep.mubr.f32.mxu0 0.0
      %2196 = vmatmul.mubr.f32.gmra.mrb[0].mxu0 %v2125
      %v2197 = vpop.f32.mrb[0].mxu0
      %v2198 = vadd.f32 0.0, %v2197
      %v2199 = vpop.f32.mrb[0].mxu0
      %v2200 = vadd.f32 0.0, %v2199
      %2201 = vdwg.mxu0
      %v2202 = vadd.f32 %v2099, %v2198
      %v2203 = vadd.f32 %v2100, %v2200
      %s2204 = scalar_lea.vmem %s9, 24
      %v2205 = vld [vmem:[%s2204] sm:$0xff]
      %v2206 = vmax.f32 %v2202, 0.0
      %v2207 = vmax.f32 %v2203, 0.0
      %v2209 = vsel %vm962, %v2205, 0
      %2211 = vmatprep.subr.mxu0 %v2207
      %2212 = vmatpush1.msra.mxu0 %v2206
      %2213 = vmatprep.subr.mxu0 0.0
      %2214 = vmatpush1.msra.mxu0 0.0
      %2215 = vmatprep.subr.mxu0 0.0
      %2216 = vmatpush1.msra.mxu0 0.0
      %2217 = vmatprep.subr.mxu0 0.0
      %2218 = vmatpush1.msra.mxu0 0.0
      %2219 = vmatprep.subr.mxu0 0.0
      %2220 = vmatpush1.msra.mxu0 0.0
      %2221 = vmatprep.subr.mxu0 0.0
      %2222 = vmatpush1.msra.mxu0 0.0
      %2223 = vmatprep.subr.mxu0 0.0
      %2224 = vmatpush1.msra.mxu0 0.0
      %2225 = vmatprep.subr.mxu0 0.0
      %2226 = vmatpush1.msra.mxu0 0.0
      %2227 = vmatprep.subr.mxu0 0.0
      %2228 = vmatpush1.msra.mxu0 0.0
      %2229 = vmatprep.subr.mxu0 0.0
      %2230 = vmatpush1.msra.mxu0 0.0
      %2231 = vmatprep.subr.mxu0 0.0
      %2232 = vmatpush1.msra.mxu0 0.0
      %2233 = vmatprep.subr.mxu0 0.0
      %2234 = vmatpush1.msra.mxu0 0.0
      %2235 = vmatprep.subr.mxu0 0.0
      %2236 = vmatpush1.msra.mxu0 0.0
      %2237 = vmatprep.subr.mxu0 0.0
      %2238 = vmatpush1.msra.mxu0 0.0
      %2239 = vmatprep.subr.mxu0 0.0
      %2240 = vmatpush1.msra.mxu0 0.0
      %2241 = vmatprep.subr.mxu0 0.0
      %2242 = vmatpush1.msra.mxu0 0.0
      %2243 = vmatprep.subr.mxu0 0.0
      %2244 = vmatpush1.msra.mxu0 0.0
      %2245 = vmatprep.subr.mxu0 0.0
      %2246 = vmatpush1.msra.mxu0 0.0
      %2247 = vmatprep.subr.mxu0 0.0
      %2248 = vmatpush1.msra.mxu0 0.0
      %2249 = vmatprep.subr.mxu0 0.0
      %2250 = vmatpush1.msra.mxu0 0.0
      %2251 = vmatprep.subr.mxu0 0.0
      %2252 = vmatpush1.msra.mxu0 0.0
      %2253 = vmatprep.subr.mxu0 0.0
      %2254 = vmatpush1.msra.mxu0 0.0
      %2255 = vmatprep.subr.mxu0 0.0
      %2256 = vmatpush1.msra.mxu0 0.0
      %2257 = vmatprep.subr.mxu0 0.0
      %2258 = vmatpush1.msra.mxu0 0.0
      %2259 = vmatprep.subr.mxu0 0.0
      %2260 = vmatpush1.msra.mxu0 0.0
      %2261 = vmatprep.subr.mxu0 0.0
      %2262 = vmatpush1.msra.mxu0 0.0
      %2263 = vmatprep.subr.mxu0 0.0
      %2264 = vmatpush1.msra.mxu0 0.0
      %2265 = vmatprep.subr.mxu0 0.0
      %2266 = vmatpush1.msra.mxu0 0.0
      %2267 = vmatprep.subr.mxu0 0.0
      %2268 = vmatpush1.msra.mxu0 0.0
      %2269 = vmatprep.subr.mxu0 0.0
      %2270 = vmatpush1.msra.mxu0 0.0
      %2271 = vmatprep.subr.mxu0 0.0
      %2272 = vmatpush1.msra.mxu0 0.0
      %2273 = vmatprep.subr.mxu0 0.0
      %2274 = vmatpush1.msra.mxu0 0.0
      %2275 = vmatprep.mubr.f32.mxu0 0.0
      %2276 = vmatmul.mubr.f32.gmra.mrb[0].mxu0 %v2209
      %v2277 = vpop.f32.mrb[0].mxu0
      %v2278 = vadd.f32 0.0, %v2277
      %v2279 = vpop.f32.mrb[0].mxu0
      %v2280 = vadd.f32 0.0, %v2279
      %2281 = vdwg.mxu0
      %v2282 = vadd.f32 %v1277, %v2278
      %v2283 = vadd.f32 %v1278, %v2280
      %s2284 = scalar_lea.vmem %s8, 16
      %v2285 = vld [vmem:[%s2284] sm:$0xff]
      %2287 = vset.pattern.permute.xlu0 0
      %2288 = vperm.xlu0 %2287, %v2285
      %v2289 = vpop.permute.xlu0 %2288
      %v2291 = vadd.f32 %v2289, 0.0
      %s2292 = scalar_lea.vmem %s7, 80
      %v2293 = vld [vmem:[%s2292] sm:$0xff]
      %v2294 = vld [vmem:[#allocation2 + $0x4] sm:$0xff]
      %v2295 = vld [vmem:[#allocation2 + $0xc] sm:$0xf]
      %s2296 = scalar_lea.vmem %s2, 2
      %v2297 = vld [vmem:[%s2296] sm:$0x3]
      %v2299 = vlaneseq
      %v2300 = vshrl.u32 %v2299, 7
      %v2301 = vsub.s32 0, %v2300
      %v2302 = vrot.slane %v2297, %v2301
      %v2303 = vlaneseq
      %v2304 = vshrl.u32 %v2303, 7
      %v2305 = vsub.s32 1, %v2304
      %v2306 = vrot.slane %v2297, %v2305
      %v2307 = vcombine.low %v2302, %v2306
      %2308 = vrot.lane.b32.xlu0 %v2307, 52
      %v2309 = vpop.permute.xlu0 %2308
      %v2310 = vrot.slane %v2309, 4
      %vm2311 = vcmask 424960
      %v2312 = vsel %vm2311, %v2310, %v2309
      %v2315 = vmul.f32 %v2294, %v2312
      %v2316 = vmul.f32 %v2295, %v2310
      %v2319 = vcombine.high %v2315, %v2315
      %2320 = vrot.lane.b32.xlu0 %v2315, 76
      %v2321 = vpop.permute.xlu0 %2320
      %2322 = vrot.lane.b32.xlu0 %v2319, 76
      %v2323 = vpop.permute.xlu0 %2322
      %2324 = vrot.lane.b32.xlu0 %v2316, 76
      %v2325 = vpop.permute.xlu0 %2324
      %vm2326 = vcmask 621568
      %v2327 = vsel %vm2326, %v2321, %v2323
      %v2328 = vsel %vm2326, %v2323, %v2325
      %v2330 = vsel %vm438, %v2293, 0
      %v2332 = vsel %vm423, %v2327, 0
      %v2334 = vsel %vm423, %v2328, 0
      %2336 = vmatprep.subr.mxu0 %v2334
      %2337 = vmatpush1.msra.mxu0 %v2332
      %2338 = vmatprep.subr.mxu0 0.0
      %2339 = vmatpush1.msra.mxu0 0.0
      %2340 = vmatprep.subr.mxu0 0.0
      %2341 = vmatpush1.msra.mxu0 0.0
      %2342 = vmatprep.subr.mxu0 0.0
      %2343 = vmatpush1.msra.mxu0 0.0
      %2344 = vmatprep.subr.mxu0 0.0
      %2345 = vmatpush1.msra.mxu0 0.0
      %2346 = vmatprep.subr.mxu0 0.0
      %2347 = vmatpush1.msra.mxu0 0.0
      %2348 = vmatprep.subr.mxu0 0.0
      %2349 = vmatpush1.msra.mxu0 0.0
      %2350 = vmatprep.subr.mxu0 0.0
      %2351 = vmatpush1.msra.mxu0 0.0
      %2352 = vmatprep.subr.mxu0 0.0
      %2353 = vmatpush1.msra.mxu0 0.0
      %2354 = vmatprep.subr.mxu0 0.0
      %2355 = vmatpush1.msra.mxu0 0.0
      %2356 = vmatprep.subr.mxu0 0.0
      %2357 = vmatpush1.msra.mxu0 0.0
      %2358 = vmatprep.subr.mxu0 0.0
      %2359 = vmatpush1.msra.mxu0 0.0
      %2360 = vmatprep.subr.mxu0 0.0
      %2361 = vmatpush1.msra.mxu0 0.0
      %2362 = vmatprep.subr.mxu0 0.0
      %2363 = vmatpush1.msra.mxu0 0.0
      %2364 = vmatprep.subr.mxu0 0.0
      %2365 = vmatpush1.msra.mxu0 0.0
      %2366 = vmatprep.subr.mxu0 0.0
      %2367 = vmatpush1.msra.mxu0 0.0
      %2368 = vmatprep.subr.mxu0 0.0
      %2369 = vmatpush1.msra.mxu0 0.0
      %2370 = vmatprep.subr.mxu0 0.0
      %2371 = vmatpush1.msra.mxu0 0.0
      %2372 = vmatprep.subr.mxu0 0.0
      %2373 = vmatpush1.msra.mxu0 0.0
      %2374 = vmatprep.subr.mxu0 0.0
      %2375 = vmatpush1.msra.mxu0 0.0
      %2376 = vmatprep.subr.mxu0 0.0
      %2377 = vmatpush1.msra.mxu0 0.0
      %2378 = vmatprep.subr.mxu0 0.0
      %2379 = vmatpush1.msra.mxu0 0.0
      %2380 = vmatprep.subr.mxu0 0.0
      %2381 = vmatpush1.msra.mxu0 0.0
      %2382 = vmatprep.subr.mxu0 0.0
      %2383 = vmatpush1.msra.mxu0 0.0
      %2384 = vmatprep.subr.mxu0 0.0
      %2385 = vmatpush1.msra.mxu0 0.0
      %2386 = vmatprep.subr.mxu0 0.0
      %2387 = vmatpush1.msra.mxu0 0.0
      %2388 = vmatprep.subr.mxu0 0.0
      %2389 = vmatpush1.msra.mxu0 0.0
      %2390 = vmatprep.subr.mxu0 0.0
      %2391 = vmatpush1.msra.mxu0 0.0
      %2392 = vmatprep.subr.mxu0 0.0
      %2393 = vmatpush1.msra.mxu0 0.0
      %2394 = vmatprep.subr.mxu0 0.0
      %2395 = vmatpush1.msra.mxu0 0.0
      %2396 = vmatprep.subr.mxu0 0.0
      %2397 = vmatpush1.msra.mxu0 0.0
      %2398 = vmatprep.subr.mxu0 0.0
      %2399 = vmatpush1.msra.mxu0 0.0
      %2400 = vmatprep.mubr.f32.mxu0 0.0
      %2401 = vmatmul.mubr.f32.gmra.mrb[0].mxu0 %v2330
      %v2402 = vpop.f32.mrb[0].mxu0
      %v2403 = vadd.f32 0.0, %v2402
      %v2404 = vpop.f32.mrb[0].mxu0
      %v2405 = vadd.f32 0.0, %v2404
      %2406 = vdwg.mxu0
      %v2407 = vadd.f32 %v2291, %v2403
      %v2408 = vadd.f32 %v2291, %v2405
      %s2409 = scalar_lea.vmem %s7, 88
      %v2410 = vld [vmem:[%s2409] sm:$0xff]
      %v2411 = vld [vmem:[#allocation2 + $0x4] sm:$0xff]
      %v2412 = vld [vmem:[#allocation2 + $0xc] sm:$0xf]
      %v2415 = vcombine.high %v2411, %v2411
      %2416 = vrot.lane.b32.xlu0 %v2411, 64
      %v2417 = vpop.permute.xlu0 %2416
      %2418 = vrot.lane.b32.xlu0 %v2415, 64
      %v2419 = vpop.permute.xlu0 %2418
      %2420 = vrot.lane.b32.xlu0 %v2412, 64
      %v2421 = vpop.permute.xlu0 %2420
      %vm2422 = vcmask 523264
      %v2423 = vsel %vm2422, %v2417, %v2419
      %v2424 = vsel %vm2422, %v2419, %v2421
      %v2426 = vsel %vm438, %v2410, 0
      %v2428 = vsel %vm423, %v2423, 0
      %v2430 = vsel %vm423, %v2424, 0
      %2432 = vmatprep.subr.mxu0 %v2430
      %2433 = vmatpush1.msra.mxu0 %v2428
      %2434 = vmatprep.subr.mxu0 0.0
      %2435 = vmatpush1.msra.mxu0 0.0
      %2436 = vmatprep.subr.mxu0 0.0
      %2437 = vmatpush1.msra.mxu0 0.0
      %2438 = vmatprep.subr.mxu0 0.0
      %2439 = vmatpush1.msra.mxu0 0.0
      %2440 = vmatprep.subr.mxu0 0.0
      %2441 = vmatpush1.msra.mxu0 0.0
      %2442 = vmatprep.subr.mxu0 0.0
      %2443 = vmatpush1.msra.mxu0 0.0
      %2444 = vmatprep.subr.mxu0 0.0
      %2445 = vmatpush1.msra.mxu0 0.0
      %2446 = vmatprep.subr.mxu0 0.0
      %2447 = vmatpush1.msra.mxu0 0.0
      %2448 = vmatprep.subr.mxu0 0.0
      %2449 = vmatpush1.msra.mxu0 0.0
      %2450 = vmatprep.subr.mxu0 0.0
      %2451 = vmatpush1.msra.mxu0 0.0
      %2452 = vmatprep.subr.mxu0 0.0
      %2453 = vmatpush1.msra.mxu0 0.0
      %2454 = vmatprep.subr.mxu0 0.0
      %2455 = vmatpush1.msra.mxu0 0.0
      %2456 = vmatprep.subr.mxu0 0.0
      %2457 = vmatpush1.msra.mxu0 0.0
      %2458 = vmatprep.subr.mxu0 0.0
      %2459 = vmatpush1.msra.mxu0 0.0
      %2460 = vmatprep.subr.mxu0 0.0
      %2461 = vmatpush1.msra.mxu0 0.0
      %2462 = vmatprep.subr.mxu0 0.0
      %2463 = vmatpush1.msra.mxu0 0.0
      %2464 = vmatprep.subr.mxu0 0.0
      %2465 = vmatpush1.msra.mxu0 0.0
      %2466 = vmatprep.subr.mxu0 0.0
      %2467 = vmatpush1.msra.mxu0 0.0
      %2468 = vmatprep.subr.mxu0 0.0
      %2469 = vmatpush1.msra.mxu0 0.0
      %2470 = vmatprep.subr.mxu0 0.0
      %2471 = vmatpush1.msra.mxu0 0.0
      %2472 = vmatprep.subr.mxu0 0.0
      %2473 = vmatpush1.msra.mxu0 0.0
      %2474 = vmatprep.subr.mxu0 0.0
      %2475 = vmatpush1.msra.mxu0 0.0
      %2476 = vmatprep.subr.mxu0 0.0
      %2477 = vmatpush1.msra.mxu0 0.0
      %2478 = vmatprep.subr.mxu0 0.0
      %2479 = vmatpush1.msra.mxu0 0.0
      %2480 = vmatprep.subr.mxu0 0.0
      %2481 = vmatpush1.msra.mxu0 0.0
      %2482 = vmatprep.subr.mxu0 0.0
      %2483 = vmatpush1.msra.mxu0 0.0
      %2484 = vmatprep.subr.mxu0 0.0
      %2485 = vmatpush1.msra.mxu0 0.0
      %2486 = vmatprep.subr.mxu0 0.0
      %2487 = vmatpush1.msra.mxu0 0.0
      %2488 = vmatprep.subr.mxu0 0.0
      %2489 = vmatpush1.msra.mxu0 0.0
      %2490 = vmatprep.subr.mxu0 0.0
      %2491 = vmatpush1.msra.mxu0 0.0
      %2492 = vmatprep.subr.mxu0 0.0
      %2493 = vmatpush1.msra.mxu0 0.0
      %2494 = vmatprep.subr.mxu0 0.0
      %2495 = vmatpush1.msra.mxu0 0.0
      %2496 = vmatprep.mubr.f32.mxu0 0.0
      %2497 = vmatmul.mubr.f32.gmra.mrb[0].mxu0 %v2426
      %v2498 = vpop.f32.mrb[0].mxu0
      %v2499 = vadd.f32 0.0, %v2498
      %v2500 = vpop.f32.mrb[0].mxu0
      %v2501 = vadd.f32 0.0, %v2500
      %2502 = vdwg.mxu0
      %v2503 = vadd.f32 %v2407, %v2499
      %v2504 = vadd.f32 %v2408, %v2501
      %s2505 = scalar_lea.vmem %s7, 96
      %v2506 = vld [vmem:[%s2505] sm:$0xff]
      %v2507 = vld [vmem:[#allocation2 + $0x4] sm:$0xff]
      %v2508 = vld [vmem:[#allocation2 + $0xc] sm:$0xf]
      %s2509 = scalar_lea.vmem %s2, 12
      %v2510 = vld [vmem:[%s2509] sm:$0x3]
      %v2512 = vlaneseq
      %v2513 = vshrl.u32 %v2512, 7
      %v2514 = vsub.s32 0, %v2513
      %v2515 = vrot.slane %v2510, %v2514
      %v2516 = vlaneseq
      %v2517 = vshrl.u32 %v2516, 7
      %v2518 = vsub.s32 1, %v2517
      %v2519 = vrot.slane %v2510, %v2518
      %v2520 = vcombine.low %v2515, %v2519
      %2521 = vrot.lane.b32.xlu0 %v2520, 76
      %v2522 = vpop.permute.xlu0 %2521
      %v2523 = vrot.slane %v2522, 4
      %v2524 = vsel %vm2326, %v2523, %v2522
      %v2527 = vmul.f32 %v2507, %v2524
      %v2528 = vmul.f32 %v2508, %v2523
      %v2531 = vcombine.high %v2527, %v2527
      %2532 = vrot.lane.b32.xlu0 %v2527, 52
      %v2533 = vpop.permute.xlu0 %2532
      %2534 = vrot.lane.b32.xlu0 %v2531, 52
      %v2535 = vpop.permute.xlu0 %2534
      %2536 = vrot.lane.b32.xlu0 %v2528, 52
      %v2537 = vpop.permute.xlu0 %2536
      %v2538 = vsel %vm2311, %v2533, %v2535
      %v2539 = vsel %vm2311, %v2535, %v2537
      %v2541 = vsel %vm438, %v2506, 0
      %v2543 = vsel %vm423, %v2538, 0
      %v2545 = vsel %vm423, %v2539, 0
      %2547 = vmatprep.subr.mxu0 %v2545
      %2548 = vmatpush1.msra.mxu0 %v2543
      %2549 = vmatprep.subr.mxu0 0.0
      %2550 = vmatpush1.msra.mxu0 0.0
      %2551 = vmatprep.subr.mxu0 0.0
      %2552 = vmatpush1.msra.mxu0 0.0
      %2553 = vmatprep.subr.mxu0 0.0
      %2554 = vmatpush1.msra.mxu0 0.0
      %2555 = vmatprep.subr.mxu0 0.0
      %2556 = vmatpush1.msra.mxu0 0.0
      %2557 = vmatprep.subr.mxu0 0.0
      %2558 = vmatpush1.msra.mxu0 0.0
      %2559 = vmatprep.subr.mxu0 0.0
      %2560 = vmatpush1.msra.mxu0 0.0
      %2561 = vmatprep.subr.mxu0 0.0
      %2562 = vmatpush1.msra.mxu0 0.0
      %2563 = vmatprep.subr.mxu0 0.0
      %2564 = vmatpush1.msra.mxu0 0.0
      %2565 = vmatprep.subr.mxu0 0.0
      %2566 = vmatpush1.msra.mxu0 0.0
      %2567 = vmatprep.subr.mxu0 0.0
      %2568 = vmatpush1.msra.mxu0 0.0
      %2569 = vmatprep.subr.mxu0 0.0
      %2570 = vmatpush1.msra.mxu0 0.0
      %2571 = vmatprep.subr.mxu0 0.0
      %2572 = vmatpush1.msra.mxu0 0.0
      %2573 = vmatprep.subr.mxu0 0.0
      %2574 = vmatpush1.msra.mxu0 0.0
      %2575 = vmatprep.subr.mxu0 0.0
      %2576 = vmatpush1.msra.mxu0 0.0
      %2577 = vmatprep.subr.mxu0 0.0
      %2578 = vmatpush1.msra.mxu0 0.0
      %2579 = vmatprep.subr.mxu0 0.0
      %2580 = vmatpush1.msra.mxu0 0.0
      %2581 = vmatprep.subr.mxu0 0.0
      %2582 = vmatpush1.msra.mxu0 0.0
      %2583 = vmatprep.subr.mxu0 0.0
      %2584 = vmatpush1.msra.mxu0 0.0
      %2585 = vmatprep.subr.mxu0 0.0
      %2586 = vmatpush1.msra.mxu0 0.0
      %2587 = vmatprep.subr.mxu0 0.0
      %2588 = vmatpush1.msra.mxu0 0.0
      %2589 = vmatprep.subr.mxu0 0.0
      %2590 = vmatpush1.msra.mxu0 0.0
      %2591 = vmatprep.subr.mxu0 0.0
      %2592 = vmatpush1.msra.mxu0 0.0
      %2593 = vmatprep.subr.mxu0 0.0
      %2594 = vmatpush1.msra.mxu0 0.0
      %2595 = vmatprep.subr.mxu0 0.0
      %2596 = vmatpush1.msra.mxu0 0.0
      %2597 = vmatprep.subr.mxu0 0.0
      %2598 = vmatpush1.msra.mxu0 0.0
      %2599 = vmatprep.subr.mxu0 0.0
      %2600 = vmatpush1.msra.mxu0 0.0
      %2601 = vmatprep.subr.mxu0 0.0
      %2602 = vmatpush1.msra.mxu0 0.0
      %2603 = vmatprep.subr.mxu0 0.0
      %2604 = vmatpush1.msra.mxu0 0.0
      %2605 = vmatprep.subr.mxu0 0.0
      %2606 = vmatpush1.msra.mxu0 0.0
      %2607 = vmatprep.subr.mxu0 0.0
      %2608 = vmatpush1.msra.mxu0 0.0
      %2609 = vmatprep.subr.mxu0 0.0
      %2610 = vmatpush1.msra.mxu0 0.0
      %2611 = vmatprep.mubr.f32.mxu0 0.0
      %2612 = vmatmul.mubr.f32.gmra.mrb[0].mxu0 %v2541
      %v2613 = vpop.f32.mrb[0].mxu0
      %v2614 = vadd.f32 0.0, %v2613
      %v2615 = vpop.f32.mrb[0].mxu0
      %v2616 = vadd.f32 0.0, %v2615
      %2617 = vdwg.mxu0
      %v2618 = vadd.f32 %v2503, %v2614
      %v2619 = vadd.f32 %v2504, %v2616
      %s2620 = scalar_lea.vmem %s7, 104
      %v2621 = vld [vmem:[%s2620] sm:$0xff]
      %v2622 = vld [vmem:[#allocation2 + $0x8] sm:$0xff]
      %v2623 = vld [vmem:[#allocation2 + $0x10] sm:$0xf]
      %2624 = vrot.lane.b32.xlu0 %v2307, 116
      %v2625 = vpop.permute.xlu0 %2624
      %v2626 = vrot.slane %v2625, 4
      %vm2627 = vcmask 949248
      %v2628 = vsel %vm2627, %v2626, %v2625
      %v2631 = vmul.f32 %v2622, %v2628
      %v2632 = vmul.f32 %v2623, %v2626
      %v2635 = vcombine.high %v2631, %v2631
      %2636 = vrot.lane.b32.xlu0 %v2631, 12
      %v2637 = vpop.permute.xlu0 %2636
      %2638 = vrot.lane.b32.xlu0 %v2635, 12
      %v2639 = vpop.permute.xlu0 %2638
      %2640 = vrot.lane.b32.xlu0 %v2632, 12
      %v2641 = vpop.permute.xlu0 %2640
      %vm2642 = vcmask 97280
      %v2643 = vsel %vm2642, %v2637, %v2639
      %v2644 = vsel %vm2642, %v2639, %v2641
      %v2646 = vsel %vm438, %v2621, 0
      %v2648 = vsel %vm423, %v2643, 0
      %v2650 = vsel %vm423, %v2644, 0
      %2652 = vmatprep.subr.mxu0 %v2650
      %2653 = vmatpush1.msra.mxu0 %v2648
      %2654 = vmatprep.subr.mxu0 0.0
      %2655 = vmatpush1.msra.mxu0 0.0
      %2656 = vmatprep.subr.mxu0 0.0
      %2657 = vmatpush1.msra.mxu0 0.0
      %2658 = vmatprep.subr.mxu0 0.0
      %2659 = vmatpush1.msra.mxu0 0.0
      %2660 = vmatprep.subr.mxu0 0.0
      %2661 = vmatpush1.msra.mxu0 0.0
      %2662 = vmatprep.subr.mxu0 0.0
      %2663 = vmatpush1.msra.mxu0 0.0
      %2664 = vmatprep.subr.mxu0 0.0
      %2665 = vmatpush1.msra.mxu0 0.0
      %2666 = vmatprep.subr.mxu0 0.0
      %2667 = vmatpush1.msra.mxu0 0.0
      %2668 = vmatprep.subr.mxu0 0.0
      %2669 = vmatpush1.msra.mxu0 0.0
      %2670 = vmatprep.subr.mxu0 0.0
      %2671 = vmatpush1.msra.mxu0 0.0
      %2672 = vmatprep.subr.mxu0 0.0
      %2673 = vmatpush1.msra.mxu0 0.0
      %2674 = vmatprep.subr.mxu0 0.0
      %2675 = vmatpush1.msra.mxu0 0.0
      %2676 = vmatprep.subr.mxu0 0.0
      %2677 = vmatpush1.msra.mxu0 0.0
      %2678 = vmatprep.subr.mxu0 0.0
      %2679 = vmatpush1.msra.mxu0 0.0
      %2680 = vmatprep.subr.mxu0 0.0
      %2681 = vmatpush1.msra.mxu0 0.0
      %2682 = vmatprep.subr.mxu0 0.0
      %2683 = vmatpush1.msra.mxu0 0.0
      %2684 = vmatprep.subr.mxu0 0.0
      %2685 = vmatpush1.msra.mxu0 0.0
      %2686 = vmatprep.subr.mxu0 0.0
      %2687 = vmatpush1.msra.mxu0 0.0
      %2688 = vmatprep.subr.mxu0 0.0
      %2689 = vmatpush1.msra.mxu0 0.0
      %2690 = vmatprep.subr.mxu0 0.0
      %2691 = vmatpush1.msra.mxu0 0.0
      %2692 = vmatprep.subr.mxu0 0.0
      %2693 = vmatpush1.msra.mxu0 0.0
      %2694 = vmatprep.subr.mxu0 0.0
      %2695 = vmatpush1.msra.mxu0 0.0
      %2696 = vmatprep.subr.mxu0 0.0
      %2697 = vmatpush1.msra.mxu0 0.0
      %2698 = vmatprep.subr.mxu0 0.0
      %2699 = vmatpush1.msra.mxu0 0.0
      %2700 = vmatprep.subr.mxu0 0.0
      %2701 = vmatpush1.msra.mxu0 0.0
      %2702 = vmatprep.subr.mxu0 0.0
      %2703 = vmatpush1.msra.mxu0 0.0
      %2704 = vmatprep.subr.mxu0 0.0
      %2705 = vmatpush1.msra.mxu0 0.0
      %2706 = vmatprep.subr.mxu0 0.0
      %2707 = vmatpush1.msra.mxu0 0.0
      %2708 = vmatprep.subr.mxu0 0.0
      %2709 = vmatpush1.msra.mxu0 0.0
      %2710 = vmatprep.subr.mxu0 0.0
      %2711 = vmatpush1.msra.mxu0 0.0
      %2712 = vmatprep.subr.mxu0 0.0
      %2713 = vmatpush1.msra.mxu0 0.0
      %2714 = vmatprep.subr.mxu0 0.0
      %2715 = vmatpush1.msra.mxu0 0.0
      %2716 = vmatprep.mubr.f32.mxu0 0.0
      %2717 = vmatmul.mubr.f32.gmra.mrb[0].mxu0 %v2646
      %v2718 = vpop.f32.mrb[0].mxu0
      %v2719 = vadd.f32 0.0, %v2718
      %v2720 = vpop.f32.mrb[0].mxu0
      %v2721 = vadd.f32 0.0, %v2720
      %2722 = vdwg.mxu0
      %v2723 = vadd.f32 %v2618, %v2719
      %v2724 = vadd.f32 %v2619, %v2721
      %s2725 = scalar_lea.vmem %s7, 112
      %v2726 = vld [vmem:[%s2725] sm:$0xff]
      %v2728 = vsel %vm438, %v2726, 0
      %2730 = vmatprep.subr.mxu0 %v1124
      %2731 = vmatpush1.msra.mxu0 %v1122
      %2732 = vmatprep.subr.mxu0 0.0
      %2733 = vmatpush1.msra.mxu0 0.0
      %2734 = vmatprep.subr.mxu0 0.0
      %2735 = vmatpush1.msra.mxu0 0.0
      %2736 = vmatprep.subr.mxu0 0.0
      %2737 = vmatpush1.msra.mxu0 0.0
      %2738 = vmatprep.subr.mxu0 0.0
      %2739 = vmatpush1.msra.mxu0 0.0
      %2740 = vmatprep.subr.mxu0 0.0
      %2741 = vmatpush1.msra.mxu0 0.0
      %2742 = vmatprep.subr.mxu0 0.0
      %2743 = vmatpush1.msra.mxu0 0.0
      %2744 = vmatprep.subr.mxu0 0.0
      %2745 = vmatpush1.msra.mxu0 0.0
      %2746 = vmatprep.subr.mxu0 0.0
      %2747 = vmatpush1.msra.mxu0 0.0
      %2748 = vmatprep.subr.mxu0 0.0
      %2749 = vmatpush1.msra.mxu0 0.0
      %2750 = vmatprep.subr.mxu0 0.0
      %2751 = vmatpush1.msra.mxu0 0.0
      %2752 = vmatprep.subr.mxu0 0.0
      %2753 = vmatpush1.msra.mxu0 0.0
      %2754 = vmatprep.subr.mxu0 0.0
      %2755 = vmatpush1.msra.mxu0 0.0
      %2756 = vmatprep.subr.mxu0 0.0
      %2757 = vmatpush1.msra.mxu0 0.0
      %2758 = vmatprep.subr.mxu0 0.0
      %2759 = vmatpush1.msra.mxu0 0.0
      %2760 = vmatprep.subr.mxu0 0.0
      %2761 = vmatpush1.msra.mxu0 0.0
      %2762 = vmatprep.subr.mxu0 0.0
      %2763 = vmatpush1.msra.mxu0 0.0
      %2764 = vmatprep.subr.mxu0 0.0
      %2765 = vmatpush1.msra.mxu0 0.0
      %2766 = vmatprep.subr.mxu0 0.0
      %2767 = vmatpush1.msra.mxu0 0.0
      %2768 = vmatprep.subr.mxu0 0.0
      %2769 = vmatpush1.msra.mxu0 0.0
      %2770 = vmatprep.subr.mxu0 0.0
      %2771 = vmatpush1.msra.mxu0 0.0
      %2772 = vmatprep.subr.mxu0 0.0
      %2773 = vmatpush1.msra.mxu0 0.0
      %2774 = vmatprep.subr.mxu0 0.0
      %2775 = vmatpush1.msra.mxu0 0.0
      %2776 = vmatprep.subr.mxu0 0.0
      %2777 = vmatpush1.msra.mxu0 0.0
      %2778 = vmatprep.subr.mxu0 0.0
      %2779 = vmatpush1.msra.mxu0 0.0
      %2780 = vmatprep.subr.mxu0 0.0
      %2781 = vmatpush1.msra.mxu0 0.0
      %2782 = vmatprep.subr.mxu0 0.0
      %2783 = vmatpush1.msra.mxu0 0.0
      %2784 = vmatprep.subr.mxu0 0.0
      %2785 = vmatpush1.msra.mxu0 0.0
      %2786 = vmatprep.subr.mxu0 0.0
      %2787 = vmatpush1.msra.mxu0 0.0
      %2788 = vmatprep.subr.mxu0 0.0
      %2789 = vmatpush1.msra.mxu0 0.0
      %2790 = vmatprep.subr.mxu0 0.0
      %2791 = vmatpush1.msra.mxu0 0.0
      %2792 = vmatprep.subr.mxu0 0.0
      %2793 = vmatpush1.msra.mxu0 0.0
      %2794 = vmatprep.mubr.f32.mxu0 0.0
      %2795 = vmatmul.mubr.f32.gmra.mrb[0].mxu0 %v2728
      %v2796 = vpop.f32.mrb[0].mxu0
      %v2797 = vadd.f32 0.0, %v2796
      %v2798 = vpop.f32.mrb[0].mxu0
      %v2799 = vadd.f32 0.0, %v2798
      %2800 = vdwg.mxu0
      %v2801 = vadd.f32 %v2723, %v2797
      %v2802 = vadd.f32 %v2724, %v2799
      %s2803 = scalar_lea.vmem %s7, 120
      %v2804 = vld [vmem:[%s2803] sm:$0xff]
      %v2805 = vld [vmem:[#allocation2 + $0xc] sm:$0xff]
      %v2806 = vld [vmem:[#allocation2 + $0x14] sm:$0xf]
      %2807 = vrot.lane.b32.xlu0 %v2520, 12
      %v2808 = vpop.permute.xlu0 %2807
      %v2809 = vrot.slane %v2808, 4
      %v2810 = vsel %vm2642, %v2809, %v2808
      %v2813 = vmul.f32 %v2805, %v2810
      %v2814 = vmul.f32 %v2806, %v2809
      %v2817 = vcombine.high %v2813, %v2813
      %2818 = vrot.lane.b32.xlu0 %v2813, 116
      %v2819 = vpop.permute.xlu0 %2818
      %2820 = vrot.lane.b32.xlu0 %v2817, 116
      %v2821 = vpop.permute.xlu0 %2820
      %2822 = vrot.lane.b32.xlu0 %v2814, 116
      %v2823 = vpop.permute.xlu0 %2822
      %v2824 = vsel %vm2627, %v2819, %v2821
      %v2825 = vsel %vm2627, %v2821, %v2823
      %v2827 = vsel %vm438, %v2804, 0
      %v2829 = vsel %vm423, %v2824, 0
      %v2831 = vsel %vm423, %v2825, 0
      %2833 = vmatprep.subr.mxu0 %v2831
      %2834 = vmatpush1.msra.mxu0 %v2829
      %2835 = vmatprep.subr.mxu0 0.0
      %2836 = vmatpush1.msra.mxu0 0.0
      %2837 = vmatprep.subr.mxu0 0.0
      %2838 = vmatpush1.msra.mxu0 0.0
      %2839 = vmatprep.subr.mxu0 0.0
      %2840 = vmatpush1.msra.mxu0 0.0
      %2841 = vmatprep.subr.mxu0 0.0
      %2842 = vmatpush1.msra.mxu0 0.0
      %2843 = vmatprep.subr.mxu0 0.0
      %2844 = vmatpush1.msra.mxu0 0.0
      %2845 = vmatprep.subr.mxu0 0.0
      %2846 = vmatpush1.msra.mxu0 0.0
      %2847 = vmatprep.subr.mxu0 0.0
      %2848 = vmatpush1.msra.mxu0 0.0
      %2849 = vmatprep.subr.mxu0 0.0
      %2850 = vmatpush1.msra.mxu0 0.0
      %2851 = vmatprep.subr.mxu0 0.0
      %2852 = vmatpush1.msra.mxu0 0.0
      %2853 = vmatprep.subr.mxu0 0.0
      %2854 = vmatpush1.msra.mxu0 0.0
      %2855 = vmatprep.subr.mxu0 0.0
      %2856 = vmatpush1.msra.mxu0 0.0
      %2857 = vmatprep.subr.mxu0 0.0
      %2858 = vmatpush1.msra.mxu0 0.0
      %2859 = vmatprep.subr.mxu0 0.0
      %2860 = vmatpush1.msra.mxu0 0.0
      %2861 = vmatprep.subr.mxu0 0.0
      %2862 = vmatpush1.msra.mxu0 0.0
      %2863 = vmatprep.subr.mxu0 0.0
      %2864 = vmatpush1.msra.mxu0 0.0
      %2865 = vmatprep.subr.mxu0 0.0
      %2866 = vmatpush1.msra.mxu0 0.0
      %2867 = vmatprep.subr.mxu0 0.0
      %2868 = vmatpush1.msra.mxu0 0.0
      %2869 = vmatprep.subr.mxu0 0.0
      %2870 = vmatpush1.msra.mxu0 0.0
      %2871 = vmatprep.subr.mxu0 0.0
      %2872 = vmatpush1.msra.mxu0 0.0
      %2873 = vmatprep.subr.mxu0 0.0
      %2874 = vmatpush1.msra.mxu0 0.0
      %2875 = vmatprep.subr.mxu0 0.0
      %2876 = vmatpush1.msra.mxu0 0.0
      %2877 = vmatprep.subr.mxu0 0.0
      %2878 = vmatpush1.msra.mxu0 0.0
      %2879 = vmatprep.subr.mxu0 0.0
      %2880 = vmatpush1.msra.mxu0 0.0
      %2881 = vmatprep.subr.mxu0 0.0
      %2882 = vmatpush1.msra.mxu0 0.0
      %2883 = vmatprep.subr.mxu0 0.0
      %2884 = vmatpush1.msra.mxu0 0.0
      %2885 = vmatprep.subr.mxu0 0.0
      %2886 = vmatpush1.msra.mxu0 0.0
      %2887 = vmatprep.subr.mxu0 0.0
      %2888 = vmatpush1.msra.mxu0 0.0
      %2889 = vmatprep.subr.mxu0 0.0
      %2890 = vmatpush1.msra.mxu0 0.0
      %2891 = vmatprep.subr.mxu0 0.0
      %2892 = vmatpush1.msra.mxu0 0.0
      %2893 = vmatprep.subr.mxu0 0.0
      %2894 = vmatpush1.msra.mxu0 0.0
      %2895 = vmatprep.subr.mxu0 0.0
      %2896 = vmatpush1.msra.mxu0 0.0
      %2897 = vmatprep.mubr.f32.mxu0 0.0
      %2898 = vmatmul.mubr.f32.gmra.mrb[0].mxu0 %v2827
      %v2899 = vpop.f32.mrb[0].mxu0
      %v2900 = vadd.f32 0.0, %v2899
      %v2901 = vpop.f32.mrb[0].mxu0
      %v2902 = vadd.f32 0.0, %v2901
      %2903 = vdwg.mxu0
      %v2904 = vadd.f32 %v2801, %v2900
      %v2905 = vadd.f32 %v2802, %v2902
      %s2906 = scalar_lea.vmem %s7, 128
      %v2907 = vld [vmem:[%s2906] sm:$0xff]
      %v2908 = vld [vmem:[#allocation2 + $0x10] sm:$0xff]
      %v2909 = vld [vmem:[#allocation2 + $0x18] sm:$0xf]
      %v2910 = vmul.f32 %v2908, %v2312
      %v2911 = vmul.f32 %v2909, %v2310
      %v2914 = vcombine.high %v2910, %v2910
      %2915 = vrot.lane.b32.xlu0 %v2910, 76
      %v2916 = vpop.permute.xlu0 %2915
      %2917 = vrot.lane.b32.xlu0 %v2914, 76
      %v2918 = vpop.permute.xlu0 %2917
      %2919 = vrot.lane.b32.xlu0 %v2911, 76
      %v2920 = vpop.permute.xlu0 %2919
      %v2921 = vsel %vm2326, %v2916, %v2918
      %v2922 = vsel %vm2326, %v2918, %v2920
      %v2924 = vsel %vm438, %v2907, 0
      %v2926 = vsel %vm423, %v2921, 0
      %v2928 = vsel %vm423, %v2922, 0
      %2930 = vmatprep.subr.mxu0 %v2928
      %2931 = vmatpush1.msra.mxu0 %v2926
      %2932 = vmatprep.subr.mxu0 0.0
      %2933 = vmatpush1.msra.mxu0 0.0
      %2934 = vmatprep.subr.mxu0 0.0
      %2935 = vmatpush1.msra.mxu0 0.0
      %2936 = vmatprep.subr.mxu0 0.0
      %2937 = vmatpush1.msra.mxu0 0.0
      %2938 = vmatprep.subr.mxu0 0.0
      %2939 = vmatpush1.msra.mxu0 0.0
      %2940 = vmatprep.subr.mxu0 0.0
      %2941 = vmatpush1.msra.mxu0 0.0
      %2942 = vmatprep.subr.mxu0 0.0
      %2943 = vmatpush1.msra.mxu0 0.0
      %2944 = vmatprep.subr.mxu0 0.0
      %2945 = vmatpush1.msra.mxu0 0.0
      %2946 = vmatprep.subr.mxu0 0.0
      %2947 = vmatpush1.msra.mxu0 0.0
      %2948 = vmatprep.subr.mxu0 0.0
      %2949 = vmatpush1.msra.mxu0 0.0
      %2950 = vmatprep.subr.mxu0 0.0
      %2951 = vmatpush1.msra.mxu0 0.0
      %2952 = vmatprep.subr.mxu0 0.0
      %2953 = vmatpush1.msra.mxu0 0.0
      %2954 = vmatprep.subr.mxu0 0.0
      %2955 = vmatpush1.msra.mxu0 0.0
      %2956 = vmatprep.subr.mxu0 0.0
      %2957 = vmatpush1.msra.mxu0 0.0
      %2958 = vmatprep.subr.mxu0 0.0
      %2959 = vmatpush1.msra.mxu0 0.0
      %2960 = vmatprep.subr.mxu0 0.0
      %2961 = vmatpush1.msra.mxu0 0.0
      %2962 = vmatprep.subr.mxu0 0.0
      %2963 = vmatpush1.msra.mxu0 0.0
      %2964 = vmatprep.subr.mxu0 0.0
      %2965 = vmatpush1.msra.mxu0 0.0
      %2966 = vmatprep.subr.mxu0 0.0
      %2967 = vmatpush1.msra.mxu0 0.0
      %2968 = vmatprep.subr.mxu0 0.0
      %2969 = vmatpush1.msra.mxu0 0.0
      %2970 = vmatprep.subr.mxu0 0.0
      %2971 = vmatpush1.msra.mxu0 0.0
      %2972 = vmatprep.subr.mxu0 0.0
      %2973 = vmatpush1.msra.mxu0 0.0
      %2974 = vmatprep.subr.mxu0 0.0
      %2975 = vmatpush1.msra.mxu0 0.0
      %2976 = vmatprep.subr.mxu0 0.0
      %2977 = vmatpush1.msra.mxu0 0.0
      %2978 = vmatprep.subr.mxu0 0.0
      %2979 = vmatpush1.msra.mxu0 0.0
      %2980 = vmatprep.subr.mxu0 0.0
      %2981 = vmatpush1.msra.mxu0 0.0
      %2982 = vmatprep.subr.mxu0 0.0
      %2983 = vmatpush1.msra.mxu0 0.0
      %2984 = vmatprep.subr.mxu0 0.0
      %2985 = vmatpush1.msra.mxu0 0.0
      %2986 = vmatprep.subr.mxu0 0.0
      %2987 = vmatpush1.msra.mxu0 0.0
      %2988 = vmatprep.subr.mxu0 0.0
      %2989 = vmatpush1.msra.mxu0 0.0
      %2990 = vmatprep.subr.mxu0 0.0
      %2991 = vmatpush1.msra.mxu0 0.0
      %2992 = vmatprep.subr.mxu0 0.0
      %2993 = vmatpush1.msra.mxu0 0.0
      %2994 = vmatprep.mubr.f32.mxu0 0.0
      %2995 = vmatmul.mubr.f32.gmra.mrb[0].mxu0 %v2924
      %v2996 = vpop.f32.mrb[0].mxu0
      %v2997 = vadd.f32 0.0, %v2996
      %v2998 = vpop.f32.mrb[0].mxu0
      %v2999 = vadd.f32 0.0, %v2998
      %3000 = vdwg.mxu0
      %v3001 = vadd.f32 %v2904, %v2997
      %v3002 = vadd.f32 %v2905, %v2999
      %s3003 = scalar_lea.vmem %s7, 136
      %v3004 = vld [vmem:[%s3003] sm:$0xff]
      %v3005 = vld [vmem:[#allocation2 + $0x10] sm:$0xff]
      %v3006 = vld [vmem:[#allocation2 + $0x18] sm:$0xf]
      %v3009 = vcombine.high %v3005, %v3005
      %3010 = vrot.lane.b32.xlu0 %v3005, 64
      %v3011 = vpop.permute.xlu0 %3010
      %3012 = vrot.lane.b32.xlu0 %v3009, 64
      %v3013 = vpop.permute.xlu0 %3012
      %3014 = vrot.lane.b32.xlu0 %v3006, 64
      %v3015 = vpop.permute.xlu0 %3014
      %v3016 = vsel %vm2422, %v3011, %v3013
      %v3017 = vsel %vm2422, %v3013, %v3015
      %v3019 = vsel %vm438, %v3004, 0
      %v3021 = vsel %vm423, %v3016, 0
      %v3023 = vsel %vm423, %v3017, 0
      %3025 = vmatprep.subr.mxu0 %v3023
      %3026 = vmatpush1.msra.mxu0 %v3021
      %3027 = vmatprep.subr.mxu0 0.0
      %3028 = vmatpush1.msra.mxu0 0.0
      %3029 = vmatprep.subr.mxu0 0.0
      %3030 = vmatpush1.msra.mxu0 0.0
      %3031 = vmatprep.subr.mxu0 0.0
      %3032 = vmatpush1.msra.mxu0 0.0
      %3033 = vmatprep.subr.mxu0 0.0
      %3034 = vmatpush1.msra.mxu0 0.0
      %3035 = vmatprep.subr.mxu0 0.0
      %3036 = vmatpush1.msra.mxu0 0.0
      %3037 = vmatprep.subr.mxu0 0.0
      %3038 = vmatpush1.msra.mxu0 0.0
      %3039 = vmatprep.subr.mxu0 0.0
      %3040 = vmatpush1.msra.mxu0 0.0
      %3041 = vmatprep.subr.mxu0 0.0
      %3042 = vmatpush1.msra.mxu0 0.0
      %3043 = vmatprep.subr.mxu0 0.0
      %3044 = vmatpush1.msra.mxu0 0.0
      %3045 = vmatprep.subr.mxu0 0.0
      %3046 = vmatpush1.msra.mxu0 0.0
      %3047 = vmatprep.subr.mxu0 0.0
      %3048 = vmatpush1.msra.mxu0 0.0
      %3049 = vmatprep.subr.mxu0 0.0
      %3050 = vmatpush1.msra.mxu0 0.0
      %3051 = vmatprep.subr.mxu0 0.0
      %3052 = vmatpush1.msra.mxu0 0.0
      %3053 = vmatprep.subr.mxu0 0.0
      %3054 = vmatpush1.msra.mxu0 0.0
      %3055 = vmatprep.subr.mxu0 0.0
      %3056 = vmatpush1.msra.mxu0 0.0
      %3057 = vmatprep.subr.mxu0 0.0
      %3058 = vmatpush1.msra.mxu0 0.0
      %3059 = vmatprep.subr.mxu0 0.0
      %3060 = vmatpush1.msra.mxu0 0.0
      %3061 = vmatprep.subr.mxu0 0.0
      %3062 = vmatpush1.msra.mxu0 0.0
      %3063 = vmatprep.subr.mxu0 0.0
      %3064 = vmatpush1.msra.mxu0 0.0
      %3065 = vmatprep.subr.mxu0 0.0
      %3066 = vmatpush1.msra.mxu0 0.0
      %3067 = vmatprep.subr.mxu0 0.0
      %3068 = vmatpush1.msra.mxu0 0.0
      %3069 = vmatprep.subr.mxu0 0.0
      %3070 = vmatpush1.msra.mxu0 0.0
      %3071 = vmatprep.subr.mxu0 0.0
      %3072 = vmatpush1.msra.mxu0 0.0
      %3073 = vmatprep.subr.mxu0 0.0
      %3074 = vmatpush1.msra.mxu0 0.0
      %3075 = vmatprep.subr.mxu0 0.0
      %3076 = vmatpush1.msra.mxu0 0.0
      %3077 = vmatprep.subr.mxu0 0.0
      %3078 = vmatpush1.msra.mxu0 0.0
      %3079 = vmatprep.subr.mxu0 0.0
      %3080 = vmatpush1.msra.mxu0 0.0
      %3081 = vmatprep.subr.mxu0 0.0
      %3082 = vmatpush1.msra.mxu0 0.0
      %3083 = vmatprep.subr.mxu0 0.0
      %3084 = vmatpush1.msra.mxu0 0.0
      %3085 = vmatprep.subr.mxu0 0.0
      %3086 = vmatpush1.msra.mxu0 0.0
      %3087 = vmatprep.subr.mxu0 0.0
      %3088 = vmatpush1.msra.mxu0 0.0
      %3089 = vmatprep.mubr.f32.mxu0 0.0
      %3090 = vmatmul.mubr.f32.gmra.mrb[0].mxu0 %v3019
      %v3091 = vpop.f32.mrb[0].mxu0
      %v3092 = vadd.f32 0.0, %v3091
      %v3093 = vpop.f32.mrb[0].mxu0
      %v3094 = vadd.f32 0.0, %v3093
      %3095 = vdwg.mxu0
      %v3096 = vadd.f32 %v3001, %v3092
      %v3097 = vadd.f32 %v3002, %v3094
      %s3098 = scalar_lea.vmem %s7, 144
      %v3099 = vld [vmem:[%s3098] sm:$0xff]
      %v3100 = vld [vmem:[#allocation2 + $0x10] sm:$0xff]
      %v3101 = vld [vmem:[#allocation2 + $0x18] sm:$0xf]
      %v3102 = vmul.f32 %v3100, %v2524
      %v3103 = vmul.f32 %v3101, %v2523
      %v3106 = vcombine.high %v3102, %v3102
      %3107 = vrot.lane.b32.xlu0 %v3102, 52
      %v3108 = vpop.permute.xlu0 %3107
      %3109 = vrot.lane.b32.xlu0 %v3106, 52
      %v3110 = vpop.permute.xlu0 %3109
      %3111 = vrot.lane.b32.xlu0 %v3103, 52
      %v3112 = vpop.permute.xlu0 %3111
      %v3113 = vsel %vm2311, %v3108, %v3110
      %v3114 = vsel %vm2311, %v3110, %v3112
      %v3116 = vsel %vm438, %v3099, 0
      %v3118 = vsel %vm423, %v3113, 0
      %v3120 = vsel %vm423, %v3114, 0
      %3122 = vmatprep.subr.mxu0 %v3120
      %3123 = vmatpush1.msra.mxu0 %v3118
      %3124 = vmatprep.subr.mxu0 0.0
      %3125 = vmatpush1.msra.mxu0 0.0
      %3126 = vmatprep.subr.mxu0 0.0
      %3127 = vmatpush1.msra.mxu0 0.0
      %3128 = vmatprep.subr.mxu0 0.0
      %3129 = vmatpush1.msra.mxu0 0.0
      %3130 = vmatprep.subr.mxu0 0.0
      %3131 = vmatpush1.msra.mxu0 0.0
      %3132 = vmatprep.subr.mxu0 0.0
      %3133 = vmatpush1.msra.mxu0 0.0
      %3134 = vmatprep.subr.mxu0 0.0
      %3135 = vmatpush1.msra.mxu0 0.0
      %3136 = vmatprep.subr.mxu0 0.0
      %3137 = vmatpush1.msra.mxu0 0.0
      %3138 = vmatprep.subr.mxu0 0.0
      %3139 = vmatpush1.msra.mxu0 0.0
      %3140 = vmatprep.subr.mxu0 0.0
      %3141 = vmatpush1.msra.mxu0 0.0
      %3142 = vmatprep.subr.mxu0 0.0
      %3143 = vmatpush1.msra.mxu0 0.0
      %3144 = vmatprep.subr.mxu0 0.0
      %3145 = vmatpush1.msra.mxu0 0.0
      %3146 = vmatprep.subr.mxu0 0.0
      %3147 = vmatpush1.msra.mxu0 0.0
      %3148 = vmatprep.subr.mxu0 0.0
      %3149 = vmatpush1.msra.mxu0 0.0
      %3150 = vmatprep.subr.mxu0 0.0
      %3151 = vmatpush1.msra.mxu0 0.0
      %3152 = vmatprep.subr.mxu0 0.0
      %3153 = vmatpush1.msra.mxu0 0.0
      %3154 = vmatprep.subr.mxu0 0.0
      %3155 = vmatpush1.msra.mxu0 0.0
      %3156 = vmatprep.subr.mxu0 0.0
      %3157 = vmatpush1.msra.mxu0 0.0
      %3158 = vmatprep.subr.mxu0 0.0
      %3159 = vmatpush1.msra.mxu0 0.0
      %3160 = vmatprep.subr.mxu0 0.0
      %3161 = vmatpush1.msra.mxu0 0.0
      %3162 = vmatprep.subr.mxu0 0.0
      %3163 = vmatpush1.msra.mxu0 0.0
      %3164 = vmatprep.subr.mxu0 0.0
      %3165 = vmatpush1.msra.mxu0 0.0
      %3166 = vmatprep.subr.mxu0 0.0
      %3167 = vmatpush1.msra.mxu0 0.0
      %3168 = vmatprep.subr.mxu0 0.0
      %3169 = vmatpush1.msra.mxu0 0.0
      %3170 = vmatprep.subr.mxu0 0.0
      %3171 = vmatpush1.msra.mxu0 0.0
      %3172 = vmatprep.subr.mxu0 0.0
      %3173 = vmatpush1.msra.mxu0 0.0
      %3174 = vmatprep.subr.mxu0 0.0
      %3175 = vmatpush1.msra.mxu0 0.0
      %3176 = vmatprep.subr.mxu0 0.0
      %3177 = vmatpush1.msra.mxu0 0.0
      %3178 = vmatprep.subr.mxu0 0.0
      %3179 = vmatpush1.msra.mxu0 0.0
      %3180 = vmatprep.subr.mxu0 0.0
      %3181 = vmatpush1.msra.mxu0 0.0
      %3182 = vmatprep.subr.mxu0 0.0
      %3183 = vmatpush1.msra.mxu0 0.0
      %3184 = vmatprep.subr.mxu0 0.0
      %3185 = vmatpush1.msra.mxu0 0.0
      %3186 = vmatprep.mubr.f32.mxu0 0.0
      %3187 = vmatmul.mubr.f32.gmra.mrb[0].mxu0 %v3116
      %v3188 = vpop.f32.mrb[0].mxu0
      %v3189 = vadd.f32 0.0, %v3188
      %v3190 = vpop.f32.mrb[0].mxu0
      %v3191 = vadd.f32 0.0, %v3190
      %3192 = vdwg.mxu0
      %v3193 = vadd.f32 %v3096, %v3189
      %v3194 = vadd.f32 %v3097, %v3191
      %s3195 = scalar_lea.vmem %s9, 32
      %v3196 = vld [vmem:[%s3195] sm:$0xff]
      %v3197 = vmax.f32 %v3193, 0.0
      %v3198 = vmax.f32 %v3194, 0.0
      %v3200 = vsel %vm962, %v3196, 0
      %3202 = vmatprep.subr.mxu0 %v3198
      %3203 = vmatpush1.msra.mxu0 %v3197
      %3204 = vmatprep.subr.mxu0 0.0
      %3205 = vmatpush1.msra.mxu0 0.0
      %3206 = vmatprep.subr.mxu0 0.0
      %3207 = vmatpush1.msra.mxu0 0.0
      %3208 = vmatprep.subr.mxu0 0.0
      %3209 = vmatpush1.msra.mxu0 0.0
      %3210 = vmatprep.subr.mxu0 0.0
      %3211 = vmatpush1.msra.mxu0 0.0
      %3212 = vmatprep.subr.mxu0 0.0
      %3213 = vmatpush1.msra.mxu0 0.0
      %3214 = vmatprep.subr.mxu0 0.0
      %3215 = vmatpush1.msra.mxu0 0.0
      %3216 = vmatprep.subr.mxu0 0.0
      %3217 = vmatpush1.msra.mxu0 0.0
      %3218 = vmatprep.subr.mxu0 0.0
      %3219 = vmatpush1.msra.mxu0 0.0
      %3220 = vmatprep.subr.mxu0 0.0
      %3221 = vmatpush1.msra.mxu0 0.0
      %3222 = vmatprep.subr.mxu0 0.0
      %3223 = vmatpush1.msra.mxu0 0.0
      %3224 = vmatprep.subr.mxu0 0.0
      %3225 = vmatpush1.msra.mxu0 0.0
      %3226 = vmatprep.subr.mxu0 0.0
      %3227 = vmatpush1.msra.mxu0 0.0
      %3228 = vmatprep.subr.mxu0 0.0
      %3229 = vmatpush1.msra.mxu0 0.0
      %3230 = vmatprep.subr.mxu0 0.0
      %3231 = vmatpush1.msra.mxu0 0.0
      %3232 = vmatprep.subr.mxu0 0.0
      %3233 = vmatpush1.msra.mxu0 0.0
      %3234 = vmatprep.subr.mxu0 0.0
      %3235 = vmatpush1.msra.mxu0 0.0
      %3236 = vmatprep.subr.mxu0 0.0
      %3237 = vmatpush1.msra.mxu0 0.0
      %3238 = vmatprep.subr.mxu0 0.0
      %3239 = vmatpush1.msra.mxu0 0.0
      %3240 = vmatprep.subr.mxu0 0.0
      %3241 = vmatpush1.msra.mxu0 0.0
      %3242 = vmatprep.subr.mxu0 0.0
      %3243 = vmatpush1.msra.mxu0 0.0
      %3244 = vmatprep.subr.mxu0 0.0
      %3245 = vmatpush1.msra.mxu0 0.0
      %3246 = vmatprep.subr.mxu0 0.0
      %3247 = vmatpush1.msra.mxu0 0.0
      %3248 = vmatprep.subr.mxu0 0.0
      %3249 = vmatpush1.msra.mxu0 0.0
      %3250 = vmatprep.subr.mxu0 0.0
      %3251 = vmatpush1.msra.mxu0 0.0
      %3252 = vmatprep.subr.mxu0 0.0
      %3253 = vmatpush1.msra.mxu0 0.0
      %3254 = vmatprep.subr.mxu0 0.0
      %3255 = vmatpush1.msra.mxu0 0.0
      %3256 = vmatprep.subr.mxu0 0.0
      %3257 = vmatpush1.msra.mxu0 0.0
      %3258 = vmatprep.subr.mxu0 0.0
      %3259 = vmatpush1.msra.mxu0 0.0
      %3260 = vmatprep.subr.mxu0 0.0
      %3261 = vmatpush1.msra.mxu0 0.0
      %3262 = vmatprep.subr.mxu0 0.0
      %3263 = vmatpush1.msra.mxu0 0.0
      %3264 = vmatprep.subr.mxu0 0.0
      %3265 = vmatpush1.msra.mxu0 0.0
      %3266 = vmatprep.mubr.f32.mxu0 0.0
      %3267 = vmatmul.mubr.f32.gmra.mrb[0].mxu0 %v3200
      %v3268 = vpop.f32.mrb[0].mxu0
      %v3269 = vadd.f32 0.0, %v3268
      %v3270 = vpop.f32.mrb[0].mxu0
      %v3271 = vadd.f32 0.0, %v3270
      %3272 = vdwg.mxu0
      %v3273 = vadd.f32 %v2282, %v3269
      %v3274 = vadd.f32 %v2283, %v3271
      %s3275 = scalar_lea.vmem %s8, 24
      %v3276 = vld [vmem:[%s3275] sm:$0xff]
      %3278 = vset.pattern.permute.xlu0 0
      %3279 = vperm.xlu0 %3278, %v3276
      %v3280 = vpop.permute.xlu0 %3279
      %v3282 = vadd.f32 %v3280, 0.0
      %s3283 = scalar_lea.vmem %s7, 152
      %v3284 = vld [vmem:[%s3283] sm:$0xff]
      %v3285 = vld [vmem:[#allocation2] sm:$0xff]
      %v3286 = vld [vmem:[#allocation2 + $0x8] sm:$0xf]
      %v3287 = vld [vmem:[%s2] sm:$0x3]
      %v3289 = vlaneseq
      %v3290 = vshrl.u32 %v3289, 7
      %v3291 = vsub.s32 0, %v3290
      %v3292 = vrot.slane %v3287, %v3291
      %v3293 = vlaneseq
      %v3294 = vshrl.u32 %v3293, 7
      %v3295 = vsub.s32 1, %v3294
      %v3296 = vrot.slane %v3287, %v3295
      %v3297 = vcombine.low %v3292, %v3296
      %3298 = vrot.lane.b32.xlu0 %v3297, 78
      %v3299 = vpop.permute.xlu0 %3298
      %v3300 = vrot.slane %v3299, 4
      %vm3301 = vcmask 637952
      %v3302 = vsel %vm3301, %v3300, %v3299
      %v3305 = vmul.f32 %v3285, %v3302
      %v3306 = vmul.f32 %v3286, %v3300
      %v3309 = vcombine.high %v3305, %v3305
      %3310 = vrot.lane.b32.xlu0 %v3305, 50
      %v3311 = vpop.permute.xlu0 %3310
      %3312 = vrot.lane.b32.xlu0 %v3309, 50
      %v3313 = vpop.permute.xlu0 %3312
      %3314 = vrot.lane.b32.xlu0 %v3306, 50
      %v3315 = vpop.permute.xlu0 %3314
      %vm3316 = vcmask 408576
      %v3317 = vsel %vm3316, %v3311, %v3313
      %v3318 = vsel %vm3316, %v3313, %v3315
      %v3320 = vsel %vm438, %v3284, 0
      %v3322 = vsel %vm423, %v3317, 0
      %v3324 = vsel %vm423, %v3318, 0
      %3326 = vmatprep.subr.mxu0 %v3324
      %3327 = vmatpush1.msra.mxu0 %v3322
      %3328 = vmatprep.subr.mxu0 0.0
      %3329 = vmatpush1.msra.mxu0 0.0
      %3330 = vmatprep.subr.mxu0 0.0
      %3331 = vmatpush1.msra.mxu0 0.0
      %3332 = vmatprep.subr.mxu0 0.0
      %3333 = vmatpush1.msra.mxu0 0.0
      %3334 = vmatprep.subr.mxu0 0.0
      %3335 = vmatpush1.msra.mxu0 0.0
      %3336 = vmatprep.subr.mxu0 0.0
      %3337 = vmatpush1.msra.mxu0 0.0
      %3338 = vmatprep.subr.mxu0 0.0
      %3339 = vmatpush1.msra.mxu0 0.0
      %3340 = vmatprep.subr.mxu0 0.0
      %3341 = vmatpush1.msra.mxu0 0.0
      %3342 = vmatprep.subr.mxu0 0.0
      %3343 = vmatpush1.msra.mxu0 0.0
      %3344 = vmatprep.subr.mxu0 0.0
      %3345 = vmatpush1.msra.mxu0 0.0
      %3346 = vmatprep.subr.mxu0 0.0
      %3347 = vmatpush1.msra.mxu0 0.0
      %3348 = vmatprep.subr.mxu0 0.0
      %3349 = vmatpush1.msra.mxu0 0.0
      %3350 = vmatprep.subr.mxu0 0.0
      %3351 = vmatpush1.msra.mxu0 0.0
      %3352 = vmatprep.subr.mxu0 0.0
      %3353 = vmatpush1.msra.mxu0 0.0
      %3354 = vmatprep.subr.mxu0 0.0
      %3355 = vmatpush1.msra.mxu0 0.0
      %3356 = vmatprep.subr.mxu0 0.0
      %3357 = vmatpush1.msra.mxu0 0.0
      %3358 = vmatprep.subr.mxu0 0.0
      %3359 = vmatpush1.msra.mxu0 0.0
      %3360 = vmatprep.subr.mxu0 0.0
      %3361 = vmatpush1.msra.mxu0 0.0
      %3362 = vmatprep.subr.mxu0 0.0
      %3363 = vmatpush1.msra.mxu0 0.0
      %3364 = vmatprep.subr.mxu0 0.0
      %3365 = vmatpush1.msra.mxu0 0.0
      %3366 = vmatprep.subr.mxu0 0.0
      %3367 = vmatpush1.msra.mxu0 0.0
      %3368 = vmatprep.subr.mxu0 0.0
      %3369 = vmatpush1.msra.mxu0 0.0
      %3370 = vmatprep.subr.mxu0 0.0
      %3371 = vmatpush1.msra.mxu0 0.0
      %3372 = vmatprep.subr.mxu0 0.0
      %3373 = vmatpush1.msra.mxu0 0.0
      %3374 = vmatprep.subr.mxu0 0.0
      %3375 = vmatpush1.msra.mxu0 0.0
      %3376 = vmatprep.subr.mxu0 0.0
      %3377 = vmatpush1.msra.mxu0 0.0
      %3378 = vmatprep.subr.mxu0 0.0
      %3379 = vmatpush1.msra.mxu0 0.0
      %3380 = vmatprep.subr.mxu0 0.0
      %3381 = vmatpush1.msra.mxu0 0.0
      %3382 = vmatprep.subr.mxu0 0.0
      %3383 = vmatpush1.msra.mxu0 0.0
      %3384 = vmatprep.subr.mxu0 0.0
      %3385 = vmatpush1.msra.mxu0 0.0
      %3386 = vmatprep.subr.mxu0 0.0
      %3387 = vmatpush1.msra.mxu0 0.0
      %3388 = vmatprep.subr.mxu0 0.0
      %3389 = vmatpush1.msra.mxu0 0.0
      %3390 = vmatprep.mubr.f32.mxu0 0.0
      %3391 = vmatmul.mubr.f32.gmra.mrb[0].mxu0 %v3320
      %v3392 = vpop.f32.mrb[0].mxu0
      %v3393 = vadd.f32 0.0, %v3392
      %v3394 = vpop.f32.mrb[0].mxu0
      %v3395 = vadd.f32 0.0, %v3394
      %3396 = vdwg.mxu0
      %v3397 = vadd.f32 %v3282, %v3393
      %v3398 = vadd.f32 %v3282, %v3395
      %s3399 = scalar_lea.vmem %s7, 160
      %v3400 = vld [vmem:[%s3399] sm:$0xff]
      %v3401 = vld [vmem:[#allocation2] sm:$0xff]
      %v3402 = vld [vmem:[#allocation2 + $0x8] sm:$0xf]
      %v3405 = vcombine.high %v3401, %v3401
      %3406 = vrot.lane.b32.xlu0 %v3401, 32
      %v3407 = vpop.permute.xlu0 %3406
      %3408 = vrot.lane.b32.xlu0 %v3405, 32
      %v3409 = vpop.permute.xlu0 %3408
      %3410 = vrot.lane.b32.xlu0 %v3402, 32
      %v3411 = vpop.permute.xlu0 %3410
      %v3412 = vsel %vm2018, %v3407, %v3409
      %v3413 = vsel %vm2018, %v3409, %v3411
      %v3415 = vsel %vm438, %v3400, 0
      %v3417 = vsel %vm423, %v3412, 0
      %v3419 = vsel %vm423, %v3413, 0
      %3421 = vmatprep.subr.mxu0 %v3419
      %3422 = vmatpush1.msra.mxu0 %v3417
      %3423 = vmatprep.subr.mxu0 0.0
      %3424 = vmatpush1.msra.mxu0 0.0
      %3425 = vmatprep.subr.mxu0 0.0
      %3426 = vmatpush1.msra.mxu0 0.0
      %3427 = vmatprep.subr.mxu0 0.0
      %3428 = vmatpush1.msra.mxu0 0.0
      %3429 = vmatprep.subr.mxu0 0.0
      %3430 = vmatpush1.msra.mxu0 0.0
      %3431 = vmatprep.subr.mxu0 0.0
      %3432 = vmatpush1.msra.mxu0 0.0
      %3433 = vmatprep.subr.mxu0 0.0
      %3434 = vmatpush1.msra.mxu0 0.0
      %3435 = vmatprep.subr.mxu0 0.0
      %3436 = vmatpush1.msra.mxu0 0.0
      %3437 = vmatprep.subr.mxu0 0.0
      %3438 = vmatpush1.msra.mxu0 0.0
      %3439 = vmatprep.subr.mxu0 0.0
      %3440 = vmatpush1.msra.mxu0 0.0
      %3441 = vmatprep.subr.mxu0 0.0
      %3442 = vmatpush1.msra.mxu0 0.0
      %3443 = vmatprep.subr.mxu0 0.0
      %3444 = vmatpush1.msra.mxu0 0.0
      %3445 = vmatprep.subr.mxu0 0.0
      %3446 = vmatpush1.msra.mxu0 0.0
      %3447 = vmatprep.subr.mxu0 0.0
      %3448 = vmatpush1.msra.mxu0 0.0
      %3449 = vmatprep.subr.mxu0 0.0
      %3450 = vmatpush1.msra.mxu0 0.0
      %3451 = vmatprep.subr.mxu0 0.0
      %3452 = vmatpush1.msra.mxu0 0.0
      %3453 = vmatprep.subr.mxu0 0.0
      %3454 = vmatpush1.msra.mxu0 0.0
      %3455 = vmatprep.subr.mxu0 0.0
      %3456 = vmatpush1.msra.mxu0 0.0
      %3457 = vmatprep.subr.mxu0 0.0
      %3458 = vmatpush1.msra.mxu0 0.0
      %3459 = vmatprep.subr.mxu0 0.0
      %3460 = vmatpush1.msra.mxu0 0.0
      %3461 = vmatprep.subr.mxu0 0.0
      %3462 = vmatpush1.msra.mxu0 0.0
      %3463 = vmatprep.subr.mxu0 0.0
      %3464 = vmatpush1.msra.mxu0 0.0
      %3465 = vmatprep.subr.mxu0 0.0
      %3466 = vmatpush1.msra.mxu0 0.0
      %3467 = vmatprep.subr.mxu0 0.0
      %3468 = vmatpush1.msra.mxu0 0.0
      %3469 = vmatprep.subr.mxu0 0.0
      %3470 = vmatpush1.msra.mxu0 0.0
      %3471 = vmatprep.subr.mxu0 0.0
      %3472 = vmatpush1.msra.mxu0 0.0
      %3473 = vmatprep.subr.mxu0 0.0
      %3474 = vmatpush1.msra.mxu0 0.0
      %3475 = vmatprep.subr.mxu0 0.0
      %3476 = vmatpush1.msra.mxu0 0.0
      %3477 = vmatprep.subr.mxu0 0.0
      %3478 = vmatpush1.msra.mxu0 0.0
      %3479 = vmatprep.subr.mxu0 0.0
      %3480 = vmatpush1.msra.mxu0 0.0
      %3481 = vmatprep.subr.mxu0 0.0
      %3482 = vmatpush1.msra.mxu0 0.0
      %3483 = vmatprep.subr.mxu0 0.0
      %3484 = vmatpush1.msra.mxu0 0.0
      %3485 = vmatprep.mubr.f32.mxu0 0.0
      %3486 = vmatmul.mubr.f32.gmra.mrb[0].mxu0 %v3415
      %v3487 = vpop.f32.mrb[0].mxu0
      %v3488 = vadd.f32 0.0, %v3487
      %v3489 = vpop.f32.mrb[0].mxu0
      %v3490 = vadd.f32 0.0, %v3489
      %3491 = vdwg.mxu0
      %v3492 = vadd.f32 %v3397, %v3488
      %v3493 = vadd.f32 %v3398, %v3490
      %s3494 = scalar_lea.vmem %s7, 168
      %v3495 = vld [vmem:[%s3494] sm:$0xff]
      %v3496 = vld [vmem:[#allocation2] sm:$0xff]
      %v3497 = vld [vmem:[#allocation2 + $0x8] sm:$0xf]
      %s3498 = scalar_lea.vmem %s2, 14
      %v3499 = vld [vmem:[%s3498] sm:$0x3]
      %v3501 = vlaneseq
      %v3502 = vshrl.u32 %v3501, 7
      %v3503 = vsub.s32 0, %v3502
      %v3504 = vrot.slane %v3499, %v3503
      %v3505 = vlaneseq
      %v3506 = vshrl.u32 %v3505, 7
      %v3507 = vsub.s32 1, %v3506
      %v3508 = vrot.slane %v3499, %v3507
      %v3509 = vcombine.low %v3504, %v3508
      %3510 = vrot.lane.b32.xlu0 %v3509, 114
      %v3511 = vpop.permute.xlu0 %3510
      %v3512 = vrot.slane %v3511, 4
      %vm3513 = vcmask 932864
      %v3514 = vsel %vm3513, %v3512, %v3511
      %v3517 = vmul.f32 %v3496, %v3514
      %v3518 = vmul.f32 %v3497, %v3512
      %v3521 = vcombine.high %v3517, %v3517
      %3522 = vrot.lane.b32.xlu0 %v3517, 14
      %v3523 = vpop.permute.xlu0 %3522
      %3524 = vrot.lane.b32.xlu0 %v3521, 14
      %v3525 = vpop.permute.xlu0 %3524
      %3526 = vrot.lane.b32.xlu0 %v3518, 14
      %v3527 = vpop.permute.xlu0 %3526
      %vm3528 = vcmask 113664
      %v3529 = vsel %vm3528, %v3523, %v3525
      %v3530 = vsel %vm3528, %v3525, %v3527
      %v3532 = vsel %vm438, %v3495, 0
      %v3534 = vsel %vm423, %v3529, 0
      %v3536 = vsel %vm423, %v3530, 0
      %3538 = vmatprep.subr.mxu0 %v3536
      %3539 = vmatpush1.msra.mxu0 %v3534
      %3540 = vmatprep.subr.mxu0 0.0
      %3541 = vmatpush1.msra.mxu0 0.0
      %3542 = vmatprep.subr.mxu0 0.0
      %3543 = vmatpush1.msra.mxu0 0.0
      %3544 = vmatprep.subr.mxu0 0.0
      %3545 = vmatpush1.msra.mxu0 0.0
      %3546 = vmatprep.subr.mxu0 0.0
      %3547 = vmatpush1.msra.mxu0 0.0
      %3548 = vmatprep.subr.mxu0 0.0
      %3549 = vmatpush1.msra.mxu0 0.0
      %3550 = vmatprep.subr.mxu0 0.0
      %3551 = vmatpush1.msra.mxu0 0.0
      %3552 = vmatprep.subr.mxu0 0.0
      %3553 = vmatpush1.msra.mxu0 0.0
      %3554 = vmatprep.subr.mxu0 0.0
      %3555 = vmatpush1.msra.mxu0 0.0
      %3556 = vmatprep.subr.mxu0 0.0
      %3557 = vmatpush1.msra.mxu0 0.0
      %3558 = vmatprep.subr.mxu0 0.0
      %3559 = vmatpush1.msra.mxu0 0.0
      %3560 = vmatprep.subr.mxu0 0.0
      %3561 = vmatpush1.msra.mxu0 0.0
      %3562 = vmatprep.subr.mxu0 0.0
      %3563 = vmatpush1.msra.mxu0 0.0
      %3564 = vmatprep.subr.mxu0 0.0
      %3565 = vmatpush1.msra.mxu0 0.0
      %3566 = vmatprep.subr.mxu0 0.0
      %3567 = vmatpush1.msra.mxu0 0.0
      %3568 = vmatprep.subr.mxu0 0.0
      %3569 = vmatpush1.msra.mxu0 0.0
      %3570 = vmatprep.subr.mxu0 0.0
      %3571 = vmatpush1.msra.mxu0 0.0
      %3572 = vmatprep.subr.mxu0 0.0
      %3573 = vmatpush1.msra.mxu0 0.0
      %3574 = vmatprep.subr.mxu0 0.0
      %3575 = vmatpush1.msra.mxu0 0.0
      %3576 = vmatprep.subr.mxu0 0.0
      %3577 = vmatpush1.msra.mxu0 0.0
      %3578 = vmatprep.subr.mxu0 0.0
      %3579 = vmatpush1.msra.mxu0 0.0
      %3580 = vmatprep.subr.mxu0 0.0
      %3581 = vmatpush1.msra.mxu0 0.0
      %3582 = vmatprep.subr.mxu0 0.0
      %3583 = vmatpush1.msra.mxu0 0.0
      %3584 = vmatprep.subr.mxu0 0.0
      %3585 = vmatpush1.msra.mxu0 0.0
      %3586 = vmatprep.subr.mxu0 0.0
      %3587 = vmatpush1.msra.mxu0 0.0
      %3588 = vmatprep.subr.mxu0 0.0
      %3589 = vmatpush1.msra.mxu0 0.0
      %3590 = vmatprep.subr.mxu0 0.0
      %3591 = vmatpush1.msra.mxu0 0.0
      %3592 = vmatprep.subr.mxu0 0.0
      %3593 = vmatpush1.msra.mxu0 0.0
      %3594 = vmatprep.subr.mxu0 0.0
      %3595 = vmatpush1.msra.mxu0 0.0
      %3596 = vmatprep.subr.mxu0 0.0
      %3597 = vmatpush1.msra.mxu0 0.0
      %3598 = vmatprep.subr.mxu0 0.0
      %3599 = vmatpush1.msra.mxu0 0.0
      %3600 = vmatprep.subr.mxu0 0.0
      %3601 = vmatpush1.msra.mxu0 0.0
      %3602 = vmatprep.mubr.f32.mxu0 0.0
      %3603 = vmatmul.mubr.f32.gmra.mrb[0].mxu0 %v3532
      %v3604 = vpop.f32.mrb[0].mxu0
      %v3605 = vadd.f32 0.0, %v3604
      %v3606 = vpop.f32.mrb[0].mxu0
      %v3607 = vadd.f32 0.0, %v3606
      %3608 = vdwg.mxu0
      %v3609 = vadd.f32 %v3492, %v3605
      %v3610 = vadd.f32 %v3493, %v3607
      %s3611 = scalar_lea.vmem %s7, 176
      %v3612 = vld [vmem:[%s3611] sm:$0xff]
      %v3613 = vld [vmem:[#allocation2 + $0x8] sm:$0xff]
      %v3614 = vld [vmem:[#allocation2 + $0x10] sm:$0xf]
      %3615 = vrot.lane.b32.xlu0 %v3297, 110
      %v3616 = vpop.permute.xlu0 %3615
      %v3617 = vrot.slane %v3616, 4
      %v3618 = vsel %vm789, %v3617, %v3616
      %v3621 = vmul.f32 %v3613, %v3618
      %v3622 = vmul.f32 %v3614, %v3617
      %v3625 = vcombine.high %v3621, %v3621
      %3626 = vrot.lane.b32.xlu0 %v3621, 18
      %v3627 = vpop.permute.xlu0 %3626
      %3628 = vrot.lane.b32.xlu0 %v3625, 18
      %v3629 = vpop.permute.xlu0 %3628
      %3630 = vrot.lane.b32.xlu0 %v3622, 18
      %v3631 = vpop.permute.xlu0 %3630
      %vm3632 = vcmask 146432
      %v3633 = vsel %vm3632, %v3627, %v3629
      %v3634 = vsel %vm3632, %v3629, %v3631
      %v3636 = vsel %vm438, %v3612, 0
      %v3638 = vsel %vm423, %v3633, 0
      %v3640 = vsel %vm423, %v3634, 0
      %3642 = vmatprep.subr.mxu0 %v3640
      %3643 = vmatpush1.msra.mxu0 %v3638
      %3644 = vmatprep.subr.mxu0 0.0
      %3645 = vmatpush1.msra.mxu0 0.0
      %3646 = vmatprep.subr.mxu0 0.0
      %3647 = vmatpush1.msra.mxu0 0.0
      %3648 = vmatprep.subr.mxu0 0.0
      %3649 = vmatpush1.msra.mxu0 0.0
      %3650 = vmatprep.subr.mxu0 0.0
      %3651 = vmatpush1.msra.mxu0 0.0
      %3652 = vmatprep.subr.mxu0 0.0
      %3653 = vmatpush1.msra.mxu0 0.0
      %3654 = vmatprep.subr.mxu0 0.0
      %3655 = vmatpush1.msra.mxu0 0.0
      %3656 = vmatprep.subr.mxu0 0.0
      %3657 = vmatpush1.msra.mxu0 0.0
      %3658 = vmatprep.subr.mxu0 0.0
      %3659 = vmatpush1.msra.mxu0 0.0
      %3660 = vmatprep.subr.mxu0 0.0
      %3661 = vmatpush1.msra.mxu0 0.0
      %3662 = vmatprep.subr.mxu0 0.0
      %3663 = vmatpush1.msra.mxu0 0.0
      %3664 = vmatprep.subr.mxu0 0.0
      %3665 = vmatpush1.msra.mxu0 0.0
      %3666 = vmatprep.subr.mxu0 0.0
      %3667 = vmatpush1.msra.mxu0 0.0
      %3668 = vmatprep.subr.mxu0 0.0
      %3669 = vmatpush1.msra.mxu0 0.0
      %3670 = vmatprep.subr.mxu0 0.0
      %3671 = vmatpush1.msra.mxu0 0.0
      %3672 = vmatprep.subr.mxu0 0.0
      %3673 = vmatpush1.msra.mxu0 0.0
      %3674 = vmatprep.subr.mxu0 0.0
      %3675 = vmatpush1.msra.mxu0 0.0
      %3676 = vmatprep.subr.mxu0 0.0
      %3677 = vmatpush1.msra.mxu0 0.0
      %3678 = vmatprep.subr.mxu0 0.0
      %3679 = vmatpush1.msra.mxu0 0.0
      %3680 = vmatprep.subr.mxu0 0.0
      %3681 = vmatpush1.msra.mxu0 0.0
      %3682 = vmatprep.subr.mxu0 0.0
      %3683 = vmatpush1.msra.mxu0 0.0
      %3684 = vmatprep.subr.mxu0 0.0
      %3685 = vmatpush1.msra.mxu0 0.0
      %3686 = vmatprep.subr.mxu0 0.0
      %3687 = vmatpush1.msra.mxu0 0.0
      %3688 = vmatprep.subr.mxu0 0.0
      %3689 = vmatpush1.msra.mxu0 0.0
      %3690 = vmatprep.subr.mxu0 0.0
      %3691 = vmatpush1.msra.mxu0 0.0
      %3692 = vmatprep.subr.mxu0 0.0
      %3693 = vmatpush1.msra.mxu0 0.0
      %3694 = vmatprep.subr.mxu0 0.0
      %3695 = vmatpush1.msra.mxu0 0.0
      %3696 = vmatprep.subr.mxu0 0.0
      %3697 = vmatpush1.msra.mxu0 0.0
      %3698 = vmatprep.subr.mxu0 0.0
      %3699 = vmatpush1.msra.mxu0 0.0
      %3700 = vmatprep.subr.mxu0 0.0
      %3701 = vmatpush1.msra.mxu0 0.0
      %3702 = vmatprep.subr.mxu0 0.0
      %3703 = vmatpush1.msra.mxu0 0.0
      %3704 = vmatprep.subr.mxu0 0.0
      %3705 = vmatpush1.msra.mxu0 0.0
      %3706 = vmatprep.mubr.f32.mxu0 0.0
      %3707 = vmatmul.mubr.f32.gmra.mrb[0].mxu0 %v3636
      %v3708 = vpop.f32.mrb[0].mxu0
      %v3709 = vadd.f32 0.0, %v3708
      %v3710 = vpop.f32.mrb[0].mxu0
      %v3711 = vadd.f32 0.0, %v3710
      %3712 = vdwg.mxu0
      %v3713 = vadd.f32 %v3609, %v3709
      %v3714 = vadd.f32 %v3610, %v3711
      %s3715 = scalar_lea.vmem %s7, 184
      %v3716 = vld [vmem:[%s3715] sm:$0xff]
      %v3718 = vsel %vm438, %v3716, 0
      %3720 = vmatprep.subr.mxu0 %v1124
      %3721 = vmatpush1.msra.mxu0 %v1122
      %3722 = vmatprep.subr.mxu0 0.0
      %3723 = vmatpush1.msra.mxu0 0.0
      %3724 = vmatprep.subr.mxu0 0.0
      %3725 = vmatpush1.msra.mxu0 0.0
      %3726 = vmatprep.subr.mxu0 0.0
      %3727 = vmatpush1.msra.mxu0 0.0
      %3728 = vmatprep.subr.mxu0 0.0
      %3729 = vmatpush1.msra.mxu0 0.0
      %3730 = vmatprep.subr.mxu0 0.0
      %3731 = vmatpush1.msra.mxu0 0.0
      %3732 = vmatprep.subr.mxu0 0.0
      %3733 = vmatpush1.msra.mxu0 0.0
      %3734 = vmatprep.subr.mxu0 0.0
      %3735 = vmatpush1.msra.mxu0 0.0
      %3736 = vmatprep.subr.mxu0 0.0
      %3737 = vmatpush1.msra.mxu0 0.0
      %3738 = vmatprep.subr.mxu0 0.0
      %3739 = vmatpush1.msra.mxu0 0.0
      %3740 = vmatprep.subr.mxu0 0.0
      %3741 = vmatpush1.msra.mxu0 0.0
      %3742 = vmatprep.subr.mxu0 0.0
      %3743 = vmatpush1.msra.mxu0 0.0
      %3744 = vmatprep.subr.mxu0 0.0
      %3745 = vmatpush1.msra.mxu0 0.0
      %3746 = vmatprep.subr.mxu0 0.0
      %3747 = vmatpush1.msra.mxu0 0.0
      %3748 = vmatprep.subr.mxu0 0.0
      %3749 = vmatpush1.msra.mxu0 0.0
      %3750 = vmatprep.subr.mxu0 0.0
      %3751 = vmatpush1.msra.mxu0 0.0
      %3752 = vmatprep.subr.mxu0 0.0
      %3753 = vmatpush1.msra.mxu0 0.0
      %3754 = vmatprep.subr.mxu0 0.0
      %3755 = vmatpush1.msra.mxu0 0.0
      %3756 = vmatprep.subr.mxu0 0.0
      %3757 = vmatpush1.msra.mxu0 0.0
      %3758 = vmatprep.subr.mxu0 0.0
      %3759 = vmatpush1.msra.mxu0 0.0
      %3760 = vmatprep.subr.mxu0 0.0
      %3761 = vmatpush1.msra.mxu0 0.0
      %3762 = vmatprep.subr.mxu0 0.0
      %3763 = vmatpush1.msra.mxu0 0.0
      %3764 = vmatprep.subr.mxu0 0.0
      %3765 = vmatpush1.msra.mxu0 0.0
      %3766 = vmatprep.subr.mxu0 0.0
      %3767 = vmatpush1.msra.mxu0 0.0
      %3768 = vmatprep.subr.mxu0 0.0
      %3769 = vmatpush1.msra.mxu0 0.0
      %3770 = vmatprep.subr.mxu0 0.0
      %3771 = vmatpush1.msra.mxu0 0.0
      %3772 = vmatprep.subr.mxu0 0.0
      %3773 = vmatpush1.msra.mxu0 0.0
      %3774 = vmatprep.subr.mxu0 0.0
      %3775 = vmatpush1.msra.mxu0 0.0
      %3776 = vmatprep.subr.mxu0 0.0
      %3777 = vmatpush1.msra.mxu0 0.0
      %3778 = vmatprep.subr.mxu0 0.0
      %3779 = vmatpush1.msra.mxu0 0.0
      %3780 = vmatprep.subr.mxu0 0.0
      %3781 = vmatpush1.msra.mxu0 0.0
      %3782 = vmatprep.subr.mxu0 0.0
      %3783 = vmatpush1.msra.mxu0 0.0
      %3784 = vmatprep.mubr.f32.mxu0 0.0
      %3785 = vmatmul.mubr.f32.gmra.mrb[0].mxu0 %v3718
      %v3786 = vpop.f32.mrb[0].mxu0
      %v3787 = vadd.f32 0.0, %v3786
      %v3788 = vpop.f32.mrb[0].mxu0
      %v3789 = vadd.f32 0.0, %v3788
      %3790 = vdwg.mxu0
      %v3791 = vadd.f32 %v3713, %v3787
      %v3792 = vadd.f32 %v3714, %v3789
      %s3793 = scalar_lea.vmem %s7, 192
      %v3794 = vld [vmem:[%s3793] sm:$0xff]
      %v3795 = vld [vmem:[#allocation2 + $0xc] sm:$0xff]
      %v3796 = vld [vmem:[#allocation2 + $0x14] sm:$0xf]
      %3797 = vrot.lane.b32.xlu0 %v3509, 18
      %v3798 = vpop.permute.xlu0 %3797
      %v3799 = vrot.slane %v3798, 4
      %v3800 = vsel %vm3632, %v3799, %v3798
      %v3803 = vmul.f32 %v3795, %v3800
      %v3804 = vmul.f32 %v3796, %v3799
      %v3807 = vcombine.high %v3803, %v3803
      %3808 = vrot.lane.b32.xlu0 %v3803, 110
      %v3809 = vpop.permute.xlu0 %3808
      %3810 = vrot.lane.b32.xlu0 %v3807, 110
      %v3811 = vpop.permute.xlu0 %3810
      %3812 = vrot.lane.b32.xlu0 %v3804, 110
      %v3813 = vpop.permute.xlu0 %3812
      %v3814 = vsel %vm789, %v3809, %v3811
      %v3815 = vsel %vm789, %v3811, %v3813
      %v3817 = vsel %vm438, %v3794, 0
      %v3819 = vsel %vm423, %v3814, 0
      %v3821 = vsel %vm423, %v3815, 0
      %3823 = vmatprep.subr.mxu0 %v3821
      %3824 = vmatpush1.msra.mxu0 %v3819
      %3825 = vmatprep.subr.mxu0 0.0
      %3826 = vmatpush1.msra.mxu0 0.0
      %3827 = vmatprep.subr.mxu0 0.0
      %3828 = vmatpush1.msra.mxu0 0.0
      %3829 = vmatprep.subr.mxu0 0.0
      %3830 = vmatpush1.msra.mxu0 0.0
      %3831 = vmatprep.subr.mxu0 0.0
      %3832 = vmatpush1.msra.mxu0 0.0
      %3833 = vmatprep.subr.mxu0 0.0
      %3834 = vmatpush1.msra.mxu0 0.0
      %3835 = vmatprep.subr.mxu0 0.0
      %3836 = vmatpush1.msra.mxu0 0.0
      %3837 = vmatprep.subr.mxu0 0.0
      %3838 = vmatpush1.msra.mxu0 0.0
      %3839 = vmatprep.subr.mxu0 0.0
      %3840 = vmatpush1.msra.mxu0 0.0
      %3841 = vmatprep.subr.mxu0 0.0
      %3842 = vmatpush1.msra.mxu0 0.0
      %3843 = vmatprep.subr.mxu0 0.0
      %3844 = vmatpush1.msra.mxu0 0.0
      %3845 = vmatprep.subr.mxu0 0.0
      %3846 = vmatpush1.msra.mxu0 0.0
      %3847 = vmatprep.subr.mxu0 0.0
      %3848 = vmatpush1.msra.mxu0 0.0
      %3849 = vmatprep.subr.mxu0 0.0
      %3850 = vmatpush1.msra.mxu0 0.0
      %3851 = vmatprep.subr.mxu0 0.0
      %3852 = vmatpush1.msra.mxu0 0.0
      %3853 = vmatprep.subr.mxu0 0.0
      %3854 = vmatpush1.msra.mxu0 0.0
      %3855 = vmatprep.subr.mxu0 0.0
      %3856 = vmatpush1.msra.mxu0 0.0
      %3857 = vmatprep.subr.mxu0 0.0
      %3858 = vmatpush1.msra.mxu0 0.0
      %3859 = vmatprep.subr.mxu0 0.0
      %3860 = vmatpush1.msra.mxu0 0.0
      %3861 = vmatprep.subr.mxu0 0.0
      %3862 = vmatpush1.msra.mxu0 0.0
      %3863 = vmatprep.subr.mxu0 0.0
      %3864 = vmatpush1.msra.mxu0 0.0
      %3865 = vmatprep.subr.mxu0 0.0
      %3866 = vmatpush1.msra.mxu0 0.0
      %3867 = vmatprep.subr.mxu0 0.0
      %3868 = vmatpush1.msra.mxu0 0.0
      %3869 = vmatprep.subr.mxu0 0.0
      %3870 = vmatpush1.msra.mxu0 0.0
      %3871 = vmatprep.subr.mxu0 0.0
      %3872 = vmatpush1.msra.mxu0 0.0
      %3873 = vmatprep.subr.mxu0 0.0
      %3874 = vmatpush1.msra.mxu0 0.0
      %3875 = vmatprep.subr.mxu0 0.0
      %3876 = vmatpush1.msra.mxu0 0.0
      %3877 = vmatprep.subr.mxu0 0.0
      %3878 = vmatpush1.msra.mxu0 0.0
      %3879 = vmatprep.subr.mxu0 0.0
      %3880 = vmatpush1.msra.mxu0 0.0
      %3881 = vmatprep.subr.mxu0 0.0
      %3882 = vmatpush1.msra.mxu0 0.0
      %3883 = vmatprep.subr.mxu0 0.0
      %3884 = vmatpush1.msra.mxu0 0.0
      %3885 = vmatprep.subr.mxu0 0.0
      %3886 = vmatpush1.msra.mxu0 0.0
      %3887 = vmatprep.mubr.f32.mxu0 0.0
      %3888 = vmatmul.mubr.f32.gmra.mrb[0].mxu0 %v3817
      %v3889 = vpop.f32.mrb[0].mxu0
      %v3890 = vadd.f32 0.0, %v3889
      %v3891 = vpop.f32.mrb[0].mxu0
      %v3892 = vadd.f32 0.0, %v3891
      %3893 = vdwg.mxu0
      %v3894 = vadd.f32 %v3791, %v3890
      %v3895 = vadd.f32 %v3792, %v3892
      %s3896 = scalar_lea.vmem %s7, 200
      %v3897 = vld [vmem:[%s3896] sm:$0xff]
      %v3898 = vld [vmem:[#allocation2 + $0x14] sm:$0xff]
      %v3899 = vld [vmem:[#allocation2 + $0x1c] sm:$0xf]
      %3900 = vrot.lane.b32.xlu0 %v3297, 14
      %v3901 = vpop.permute.xlu0 %3900
      %v3902 = vrot.slane %v3901, 4
      %v3903 = vsel %vm3528, %v3902, %v3901
      %v3906 = vmul.f32 %v3898, %v3903
      %v3907 = vmul.f32 %v3899, %v3902
      %v3910 = vcombine.high %v3906, %v3906
      %3911 = vrot.lane.b32.xlu0 %v3906, 114
      %v3912 = vpop.permute.xlu0 %3911
      %3913 = vrot.lane.b32.xlu0 %v3910, 114
      %v3914 = vpop.permute.xlu0 %3913
      %3915 = vrot.lane.b32.xlu0 %v3907, 114
      %v3916 = vpop.permute.xlu0 %3915
      %v3917 = vsel %vm3513, %v3912, %v3914
      %v3918 = vsel %vm3513, %v3914, %v3916
      %v3920 = vsel %vm438, %v3897, 0
      %v3922 = vsel %vm423, %v3917, 0
      %v3924 = vsel %vm423, %v3918, 0
      %3926 = vmatprep.subr.mxu0 %v3924
      %3927 = vmatpush1.msra.mxu0 %v3922
      %3928 = vmatprep.subr.mxu0 0.0
      %3929 = vmatpush1.msra.mxu0 0.0
      %3930 = vmatprep.subr.mxu0 0.0
      %3931 = vmatpush1.msra.mxu0 0.0
      %3932 = vmatprep.subr.mxu0 0.0
      %3933 = vmatpush1.msra.mxu0 0.0
      %3934 = vmatprep.subr.mxu0 0.0
      %3935 = vmatpush1.msra.mxu0 0.0
      %3936 = vmatprep.subr.mxu0 0.0
      %3937 = vmatpush1.msra.mxu0 0.0
      %3938 = vmatprep.subr.mxu0 0.0
      %3939 = vmatpush1.msra.mxu0 0.0
      %3940 = vmatprep.subr.mxu0 0.0
      %3941 = vmatpush1.msra.mxu0 0.0
      %3942 = vmatprep.subr.mxu0 0.0
      %3943 = vmatpush1.msra.mxu0 0.0
      %3944 = vmatprep.subr.mxu0 0.0
      %3945 = vmatpush1.msra.mxu0 0.0
      %3946 = vmatprep.subr.mxu0 0.0
      %3947 = vmatpush1.msra.mxu0 0.0
      %3948 = vmatprep.subr.mxu0 0.0
      %3949 = vmatpush1.msra.mxu0 0.0
      %3950 = vmatprep.subr.mxu0 0.0
      %3951 = vmatpush1.msra.mxu0 0.0
      %3952 = vmatprep.subr.mxu0 0.0
      %3953 = vmatpush1.msra.mxu0 0.0
      %3954 = vmatprep.subr.mxu0 0.0
      %3955 = vmatpush1.msra.mxu0 0.0
      %3956 = vmatprep.subr.mxu0 0.0
      %3957 = vmatpush1.msra.mxu0 0.0
      %3958 = vmatprep.subr.mxu0 0.0
      %3959 = vmatpush1.msra.mxu0 0.0
      %3960 = vmatprep.subr.mxu0 0.0
      %3961 = vmatpush1.msra.mxu0 0.0
      %3962 = vmatprep.subr.mxu0 0.0
      %3963 = vmatpush1.msra.mxu0 0.0
      %3964 = vmatprep.subr.mxu0 0.0
      %3965 = vmatpush1.msra.mxu0 0.0
      %3966 = vmatprep.subr.mxu0 0.0
      %3967 = vmatpush1.msra.mxu0 0.0
      %3968 = vmatprep.subr.mxu0 0.0
      %3969 = vmatpush1.msra.mxu0 0.0
      %3970 = vmatprep.subr.mxu0 0.0
      %3971 = vmatpush1.msra.mxu0 0.0
      %3972 = vmatprep.subr.mxu0 0.0
      %3973 = vmatpush1.msra.mxu0 0.0
      %3974 = vmatprep.subr.mxu0 0.0
      %3975 = vmatpush1.msra.mxu0 0.0
      %3976 = vmatprep.subr.mxu0 0.0
      %3977 = vmatpush1.msra.mxu0 0.0
      %3978 = vmatprep.subr.mxu0 0.0
      %3979 = vmatpush1.msra.mxu0 0.0
      %3980 = vmatprep.subr.mxu0 0.0
      %3981 = vmatpush1.msra.mxu0 0.0
      %3982 = vmatprep.subr.mxu0 0.0
      %3983 = vmatpush1.msra.mxu0 0.0
      %3984 = vmatprep.subr.mxu0 0.0
      %3985 = vmatpush1.msra.mxu0 0.0
      %3986 = vmatprep.subr.mxu0 0.0
      %3987 = vmatpush1.msra.mxu0 0.0
      %3988 = vmatprep.subr.mxu0 0.0
      %3989 = vmatpush1.msra.mxu0 0.0
      %3990 = vmatprep.mubr.f32.mxu0 0.0
      %3991 = vmatmul.mubr.f32.gmra.mrb[0].mxu0 %v3920
      %v3992 = vpop.f32.mrb[0].mxu0
      %v3993 = vadd.f32 0.0, %v3992
      %v3994 = vpop.f32.mrb[0].mxu0
      %v3995 = vadd.f32 0.0, %v3994
      %3996 = vdwg.mxu0
      %v3997 = vadd.f32 %v3894, %v3993
      %v3998 = vadd.f32 %v3895, %v3995
      %s3999 = scalar_lea.vmem %s7, 208
      %v4000 = vld [vmem:[%s3999] sm:$0xff]
      %v4001 = vld [vmem:[#allocation2 + $0x14] sm:$0xff]
      %v4002 = vld [vmem:[#allocation2 + $0x1c] sm:$0xf]
      %v4005 = vcombine.high %v4001, %v4001
      %4006 = vrot.lane.b32.xlu0 %v4001, 96
      %v4007 = vpop.permute.xlu0 %4006
      %4008 = vrot.lane.b32.xlu0 %v4005, 96
      %v4009 = vpop.permute.xlu0 %4008
      %4010 = vrot.lane.b32.xlu0 %v4002, 96
      %v4011 = vpop.permute.xlu0 %4010
      %v4012 = vsel %vm840, %v4007, %v4009
      %v4013 = vsel %vm840, %v4009, %v4011
      %v4015 = vsel %vm438, %v4000, 0
      %v4017 = vsel %vm423, %v4012, 0
      %v4019 = vsel %vm423, %v4013, 0
      %4021 = vmatprep.subr.mxu0 %v4019
      %4022 = vmatpush1.msra.mxu0 %v4017
      %4023 = vmatprep.subr.mxu0 0.0
      %4024 = vmatpush1.msra.mxu0 0.0
      %4025 = vmatprep.subr.mxu0 0.0
      %4026 = vmatpush1.msra.mxu0 0.0
      %4027 = vmatprep.subr.mxu0 0.0
      %4028 = vmatpush1.msra.mxu0 0.0
      %4029 = vmatprep.subr.mxu0 0.0
      %4030 = vmatpush1.msra.mxu0 0.0
      %4031 = vmatprep.subr.mxu0 0.0
      %4032 = vmatpush1.msra.mxu0 0.0
      %4033 = vmatprep.subr.mxu0 0.0
      %4034 = vmatpush1.msra.mxu0 0.0
      %4035 = vmatprep.subr.mxu0 0.0
      %4036 = vmatpush1.msra.mxu0 0.0
      %4037 = vmatprep.subr.mxu0 0.0
      %4038 = vmatpush1.msra.mxu0 0.0
      %4039 = vmatprep.subr.mxu0 0.0
      %4040 = vmatpush1.msra.mxu0 0.0
      %4041 = vmatprep.subr.mxu0 0.0
      %4042 = vmatpush1.msra.mxu0 0.0
      %4043 = vmatprep.subr.mxu0 0.0
      %4044 = vmatpush1.msra.mxu0 0.0
      %4045 = vmatprep.subr.mxu0 0.0
      %4046 = vmatpush1.msra.mxu0 0.0
      %4047 = vmatprep.subr.mxu0 0.0
      %4048 = vmatpush1.msra.mxu0 0.0
      %4049 = vmatprep.subr.mxu0 0.0
      %4050 = vmatpush1.msra.mxu0 0.0
      %4051 = vmatprep.subr.mxu0 0.0
      %4052 = vmatpush1.msra.mxu0 0.0
      %4053 = vmatprep.subr.mxu0 0.0
      %4054 = vmatpush1.msra.mxu0 0.0
      %4055 = vmatprep.subr.mxu0 0.0
      %4056 = vmatpush1.msra.mxu0 0.0
      %4057 = vmatprep.subr.mxu0 0.0
      %4058 = vmatpush1.msra.mxu0 0.0
      %4059 = vmatprep.subr.mxu0 0.0
      %4060 = vmatpush1.msra.mxu0 0.0
      %4061 = vmatprep.subr.mxu0 0.0
      %4062 = vmatpush1.msra.mxu0 0.0
      %4063 = vmatprep.subr.mxu0 0.0
      %4064 = vmatpush1.msra.mxu0 0.0
      %4065 = vmatprep.subr.mxu0 0.0
      %4066 = vmatpush1.msra.mxu0 0.0
      %4067 = vmatprep.subr.mxu0 0.0
      %4068 = vmatpush1.msra.mxu0 0.0
      %4069 = vmatprep.subr.mxu0 0.0
      %4070 = vmatpush1.msra.mxu0 0.0
      %4071 = vmatprep.subr.mxu0 0.0
      %4072 = vmatpush1.msra.mxu0 0.0
      %4073 = vmatprep.subr.mxu0 0.0
      %4074 = vmatpush1.msra.mxu0 0.0
      %4075 = vmatprep.subr.mxu0 0.0
      %4076 = vmatpush1.msra.mxu0 0.0
      %4077 = vmatprep.subr.mxu0 0.0
      %4078 = vmatpush1.msra.mxu0 0.0
      %4079 = vmatprep.subr.mxu0 0.0
      %4080 = vmatpush1.msra.mxu0 0.0
      %4081 = vmatprep.subr.mxu0 0.0
      %4082 = vmatpush1.msra.mxu0 0.0
      %4083 = vmatprep.subr.mxu0 0.0
      %4084 = vmatpush1.msra.mxu0 0.0
      %4085 = vmatprep.mubr.f32.mxu0 0.0
      %4086 = vmatmul.mubr.f32.gmra.mrb[0].mxu0 %v4015
      %v4087 = vpop.f32.mrb[0].mxu0
      %v4088 = vadd.f32 0.0, %v4087
      %v4089 = vpop.f32.mrb[0].mxu0
      %v4090 = vadd.f32 0.0, %v4089
      %4091 = vdwg.mxu0
      %v4092 = vadd.f32 %v3997, %v4088
      %v4093 = vadd.f32 %v3998, %v4090
      %s4094 = scalar_lea.vmem %s7, 216
      %v4095 = vld [vmem:[%s4094] sm:$0xff]
      %v4096 = vld [vmem:[#allocation2 + $0x14] sm:$0xff]
      %v4097 = vld [vmem:[#allocation2 + $0x1c] sm:$0xf]
      %4098 = vrot.lane.b32.xlu0 %v3509, 50
      %v4099 = vpop.permute.xlu0 %4098
      %v4100 = vrot.slane %v4099, 4
      %v4101 = vsel %vm3316, %v4100, %v4099
      %v4104 = vmul.f32 %v4096, %v4101
      %v4105 = vmul.f32 %v4097, %v4100
      %v4108 = vcombine.high %v4104, %v4104
      %4109 = vrot.lane.b32.xlu0 %v4104, 78
      %v4110 = vpop.permute.xlu0 %4109
      %4111 = vrot.lane.b32.xlu0 %v4108, 78
      %v4112 = vpop.permute.xlu0 %4111
      %4113 = vrot.lane.b32.xlu0 %v4105, 78
      %v4114 = vpop.permute.xlu0 %4113
      %v4115 = vsel %vm3301, %v4110, %v4112
      %v4116 = vsel %vm3301, %v4112, %v4114
      %v4118 = vsel %vm438, %v4095, 0
      %v4120 = vsel %vm423, %v4115, 0
      %v4122 = vsel %vm423, %v4116, 0
      %4124 = vmatprep.subr.mxu0 %v4122
      %4125 = vmatpush1.msra.mxu0 %v4120
      %4126 = vmatprep.subr.mxu0 0.0
      %4127 = vmatpush1.msra.mxu0 0.0
      %4128 = vmatprep.subr.mxu0 0.0
      %4129 = vmatpush1.msra.mxu0 0.0
      %4130 = vmatprep.subr.mxu0 0.0
      %4131 = vmatpush1.msra.mxu0 0.0
      %4132 = vmatprep.subr.mxu0 0.0
      %4133 = vmatpush1.msra.mxu0 0.0
      %4134 = vmatprep.subr.mxu0 0.0
      %4135 = vmatpush1.msra.mxu0 0.0
      %4136 = vmatprep.subr.mxu0 0.0
      %4137 = vmatpush1.msra.mxu0 0.0
      %4138 = vmatprep.subr.mxu0 0.0
      %4139 = vmatpush1.msra.mxu0 0.0
      %4140 = vmatprep.subr.mxu0 0.0
      %4141 = vmatpush1.msra.mxu0 0.0
      %4142 = vmatprep.subr.mxu0 0.0
      %4143 = vmatpush1.msra.mxu0 0.0
      %4144 = vmatprep.subr.mxu0 0.0
      %4145 = vmatpush1.msra.mxu0 0.0
      %4146 = vmatprep.subr.mxu0 0.0
      %4147 = vmatpush1.msra.mxu0 0.0
      %4148 = vmatprep.subr.mxu0 0.0
      %4149 = vmatpush1.msra.mxu0 0.0
      %4150 = vmatprep.subr.mxu0 0.0
      %4151 = vmatpush1.msra.mxu0 0.0
      %4152 = vmatprep.subr.mxu0 0.0
      %4153 = vmatpush1.msra.mxu0 0.0
      %4154 = vmatprep.subr.mxu0 0.0
      %4155 = vmatpush1.msra.mxu0 0.0
      %4156 = vmatprep.subr.mxu0 0.0
      %4157 = vmatpush1.msra.mxu0 0.0
      %4158 = vmatprep.subr.mxu0 0.0
      %4159 = vmatpush1.msra.mxu0 0.0
      %4160 = vmatprep.subr.mxu0 0.0
      %4161 = vmatpush1.msra.mxu0 0.0
      %4162 = vmatprep.subr.mxu0 0.0
      %4163 = vmatpush1.msra.mxu0 0.0
      %4164 = vmatprep.subr.mxu0 0.0
      %4165 = vmatpush1.msra.mxu0 0.0
      %4166 = vmatprep.subr.mxu0 0.0
      %4167 = vmatpush1.msra.mxu0 0.0
      %4168 = vmatprep.subr.mxu0 0.0
      %4169 = vmatpush1.msra.mxu0 0.0
      %4170 = vmatprep.subr.mxu0 0.0
      %4171 = vmatpush1.msra.mxu0 0.0
      %4172 = vmatprep.subr.mxu0 0.0
      %4173 = vmatpush1.msra.mxu0 0.0
      %4174 = vmatprep.subr.mxu0 0.0
      %4175 = vmatpush1.msra.mxu0 0.0
      %4176 = vmatprep.subr.mxu0 0.0
      %4177 = vmatpush1.msra.mxu0 0.0
      %4178 = vmatprep.subr.mxu0 0.0
      %4179 = vmatpush1.msra.mxu0 0.0
      %4180 = vmatprep.subr.mxu0 0.0
      %4181 = vmatpush1.msra.mxu0 0.0
      %4182 = vmatprep.subr.mxu0 0.0
      %4183 = vmatpush1.msra.mxu0 0.0
      %4184 = vmatprep.subr.mxu0 0.0
      %4185 = vmatpush1.msra.mxu0 0.0
      %4186 = vmatprep.subr.mxu0 0.0
      %4187 = vmatpush1.msra.mxu0 0.0
      %4188 = vmatprep.mubr.f32.mxu0 0.0
      %4189 = vmatmul.mubr.f32.gmra.mrb[0].mxu0 %v4118
      %v4190 = vpop.f32.mrb[0].mxu0
      %v4191 = vadd.f32 0.0, %v4190
      %v4192 = vpop.f32.mrb[0].mxu0
      %v4193 = vadd.f32 0.0, %v4192
      %4194 = vdwg.mxu0
      %v4195 = vadd.f32 %v4092, %v4191
      %v4196 = vadd.f32 %v4093, %v4193
      %s4197 = scalar_lea.vmem %s9, 40
      %v4198 = vld [vmem:[%s4197] sm:$0xff]
      %v4199 = vmax.f32 %v4195, 0.0
      %v4200 = vmax.f32 %v4196, 0.0
      %v4202 = vsel %vm962, %v4198, 0
      %4204 = vmatprep.subr.mxu0 %v4200
      %4205 = vmatpush1.msra.mxu0 %v4199
      %4206 = vmatprep.subr.mxu0 0.0
      %4207 = vmatpush1.msra.mxu0 0.0
      %4208 = vmatprep.subr.mxu0 0.0
      %4209 = vmatpush1.msra.mxu0 0.0
      %4210 = vmatprep.subr.mxu0 0.0
      %4211 = vmatpush1.msra.mxu0 0.0
      %4212 = vmatprep.subr.mxu0 0.0
      %4213 = vmatpush1.msra.mxu0 0.0
      %4214 = vmatprep.subr.mxu0 0.0
      %4215 = vmatpush1.msra.mxu0 0.0
      %4216 = vmatprep.subr.mxu0 0.0
      %4217 = vmatpush1.msra.mxu0 0.0
      %4218 = vmatprep.subr.mxu0 0.0
      %4219 = vmatpush1.msra.mxu0 0.0
      %4220 = vmatprep.subr.mxu0 0.0
      %4221 = vmatpush1.msra.mxu0 0.0
      %4222 = vmatprep.subr.mxu0 0.0
      %4223 = vmatpush1.msra.mxu0 0.0
      %4224 = vmatprep.subr.mxu0 0.0
      %4225 = vmatpush1.msra.mxu0 0.0
      %4226 = vmatprep.subr.mxu0 0.0
      %4227 = vmatpush1.msra.mxu0 0.0
      %4228 = vmatprep.subr.mxu0 0.0
      %4229 = vmatpush1.msra.mxu0 0.0
      %4230 = vmatprep.subr.mxu0 0.0
      %4231 = vmatpush1.msra.mxu0 0.0
      %4232 = vmatprep.subr.mxu0 0.0
      %4233 = vmatpush1.msra.mxu0 0.0
      %4234 = vmatprep.subr.mxu0 0.0
      %4235 = vmatpush1.msra.mxu0 0.0
      %4236 = vmatprep.subr.mxu0 0.0
      %4237 = vmatpush1.msra.mxu0 0.0
      %4238 = vmatprep.subr.mxu0 0.0
      %4239 = vmatpush1.msra.mxu0 0.0
      %4240 = vmatprep.subr.mxu0 0.0
      %4241 = vmatpush1.msra.mxu0 0.0
      %4242 = vmatprep.subr.mxu0 0.0
      %4243 = vmatpush1.msra.mxu0 0.0
      %4244 = vmatprep.subr.mxu0 0.0
      %4245 = vmatpush1.msra.mxu0 0.0
      %4246 = vmatprep.subr.mxu0 0.0
      %4247 = vmatpush1.msra.mxu0 0.0
      %4248 = vmatprep.subr.mxu0 0.0
      %4249 = vmatpush1.msra.mxu0 0.0
      %4250 = vmatprep.subr.mxu0 0.0
      %4251 = vmatpush1.msra.mxu0 0.0
      %4252 = vmatprep.subr.mxu0 0.0
      %4253 = vmatpush1.msra.mxu0 0.0
      %4254 = vmatprep.subr.mxu0 0.0
      %4255 = vmatpush1.msra.mxu0 0.0
      %4256 = vmatprep.subr.mxu0 0.0
      %4257 = vmatpush1.msra.mxu0 0.0
      %4258 = vmatprep.subr.mxu0 0.0
      %4259 = vmatpush1.msra.mxu0 0.0
      %4260 = vmatprep.subr.mxu0 0.0
      %4261 = vmatpush1.msra.mxu0 0.0
      %4262 = vmatprep.subr.mxu0 0.0
      %4263 = vmatpush1.msra.mxu0 0.0
      %4264 = vmatprep.subr.mxu0 0.0
      %4265 = vmatpush1.msra.mxu0 0.0
      %4266 = vmatprep.subr.mxu0 0.0
      %4267 = vmatpush1.msra.mxu0 0.0
      %4268 = vmatprep.mubr.f32.mxu0 0.0
      %4269 = vmatmul.mubr.f32.gmra.mrb[0].mxu0 %v4202
      %v4270 = vpop.f32.mrb[0].mxu0
      %v4271 = vadd.f32 0.0, %v4270
      %v4272 = vpop.f32.mrb[0].mxu0
      %v4273 = vadd.f32 0.0, %v4272
      %4274 = vdwg.mxu0
      %v4275 = vadd.f32 %v3273, %v4271
      %v4276 = vadd.f32 %v3274, %v4273
      %v4277 = vld [vmem:[%s10] sm:$0xff]
      %4279 = vset.pattern.permute.xlu0 0
      %4280 = vperm.xlu0 %4279, %v4277
      %v4281 = vpop.permute.xlu0 %4280
      %v4283 = vadd.f32 %v4275, %v4281
      %v4284 = vadd.f32 %v4276, %v4281
      %v4285 = vmax.f32 %v4283, 0.0
      %v4286 = vmax.f32 %v4284, 0.0
      %4287 = vst [vmem:[%s403] sm:$0xff] %v4285
      %4288 = vst [vmem:[%s403 + $0x8] sm:$0xff] %v4286
      %p4289 = scmp.lt.s32.totalorder %s22, 1
      %s4290 = scalar_select %p4289, %s22, 1
      %s4291 = smul.addr %s4290, 2
      %s4292 = smul.addr %s4291, 8
      %s4293 = scalar_lea.vmem %s11, %s4292
      // Predicated region
      $region65: #{gscnn_aspp_forward.1} parent=63 // pred_check
        %p4294 = pneg %p281
      $region66: #{gscnn_aspp_forward.1} parent=63 // pred_check_branch
        %4296 = sbr.rel (%p4294) target = $region68
      $region67: #{gscnn_aspp_forward.1} parent=63 // pred_region
        _
      $region68: #{gscnn_aspp_forward.1} parent=63 // pred_fallthru
        _
    $region64: #{gscnn_aspp_forward.1} parent=5 // pred_fallthru
      _
    %p4297 = scmp.le.s32.totalorder 2, %s17
    // Predicated region
    $region69: #{gscnn_aspp_forward.1} parent=5 // pred_check
      %p4298 = pneg %p4297
    $region70: #{gscnn_aspp_forward.1} parent=5 // pred_check_branch
      %4300 = sbr.rel (%p4298) target = $region72
    $region71: #{gscnn_aspp_forward.1} parent=5 // pred_region
      %s4301 = ssub.s32 %s17, 2
      // Predicated region
      $region73: #{gscnn_aspp_forward.1} parent=71 // pred_check
        %p4302 = pneg %p287
      $region74: #{gscnn_aspp_forward.1} parent=71 // pred_check_branch
        %4304 = sbr.rel (%p4302) target = $region76
      $region75: #{gscnn_aspp_forward.1} parent=71 // pred_region
        %p4305 = scmp.lt.s32.totalorder %s23, 1
        %s4306 = scalar_select %p4305, %s23, 1
        %s4307 = smul.addr %s4306, 2
        %s4308 = smul.addr %s4307, 8
        %s4309 = scalar_lea.vmem %s11, %s4308
      $region76: #{gscnn_aspp_forward.1} parent=71 // pred_fallthru
        _
    $region72: #{gscnn_aspp_forward.1} parent=5 // pred_fallthru
      _
  $region6: #{gscnn_aspp_forward.1} parent=0 // loop_footer
    %s21 = sadd.s32 1, %s17
  $region7: #{gscnn_aspp_forward.1} parent=0 // loop_footer_branch
    %16 = sbr.rel target = $region3
  $region8: #{gscnn_aspp_forward.1} parent=0 // loop_exit
    _

</llo_original>
